<compile_context>
chip_gen: v6e
topology: v6e:2x2x1
jax: 0.10.0
libtpu: 0.0.40
codegen_flags: <defaults>
</compile_context>

<pallas_src>
import functools
import math

import jax
import jax.numpy as jnp
from jax import lax
from jax.experimental import pallas as pl
from jax.experimental.pallas import tpu as pltpu

EPS = 1e-5          # norm_epsilon of the module
D_STATE = 16        # Mamba defaults
D_CONV = 4
EXPAND = 2
_CARRY_ROWS = 8     # sublane-aligned cross-chunk history for the causal conv
_SCAN_CHUNK = 8     # timesteps per aligned scan sub-chunk


# ---------------------------------------------------------------------------
# Kernel 1: one fused Mamba layer (Add -> LayerNorm -> Mamba mixer)
# ---------------------------------------------------------------------------
def _mamba_layer_kernel(hid_ref, res_ref, lnw_ref, lnb_ref, win_ref, convw_ref,
                        convb_ref, wdelta_ref, dtb_ref, wbc_ref, at_ref,
                        dvec_ref, wout_ref,
                        hid_out_ref, res_out_ref,
                        hstate_ref, carry_ref, delta_s, du_s, bm_s, cm_s, y_s,
                        *, Lc, d_inner, d_state, d_conv, chunk, unroll_scan):
    c = pl.program_id(1)

    # Carried state (scan state + conv history) resets at the start of every
    # batch element's sequence.  Scratch persists across grid steps otherwise.
    @pl.when(c == 0)
    def _reset():
        hstate_ref[...] = jnp.zeros_like(hstate_ref)
        carry_ref[...] = jnp.zeros_like(carry_ref)

    # ---- fused residual add + LayerNorm prologue -------------------------
    res = hid_ref[0] + res_ref[0]                          # (Lc, d_model)
    res_out_ref[0] = res
    mu = jnp.mean(res, axis=-1, keepdims=True)
    var = jnp.mean(jnp.square(res - mu), axis=-1, keepdims=True)
    hs = (res - mu) * lax.rsqrt(var + EPS) * lnw_ref[...] + lnb_ref[...]

    # ---- in_proj: x | z branches fused into one wide MXU pass ------------
    xz = jnp.dot(hs, win_ref[...], preferred_element_type=jnp.float32)
    x = xz[:, :d_inner]
    z = xz[:, d_inner:]

    # ---- depthwise causal conv1d along the sequence (kept in vregs) ------
    # xext rows [0:8] hold the previous chunk's tail (zeros for chunk 0).
    xext = jnp.concatenate([carry_ref[...], x], axis=0)    # (Lc + 8, d_inner)
    carry_ref[...] = x[Lc - _CARRY_ROWS:, :]               # history for next chunk
    xc = jnp.broadcast_to(convb_ref[...], (Lc, d_inner))
    for k in range(d_conv):
        start = _CARRY_ROWS - (d_conv - 1) + k             # static offsets
        xc = xc + xext[start:start + Lc, :] * convw_ref[k:k + 1, :]
    u = xc * jax.nn.sigmoid(xc)                            # SiLU(conv(x))

    # ---- x_proj / dt_proj: B|C fused, dt_proj folded into W_delta --------
    delta = jax.nn.softplus(
        jnp.dot(u, wdelta_ref[...], preferred_element_type=jnp.float32)
        + dtb_ref[...])                                    # (Lc, d_inner)
    bc = jnp.dot(u, wbc_ref[...], preferred_element_type=jnp.float32)
    delta_s[...] = delta
    du_s[...] = delta * u
    bm_s[...] = bc[:, :d_state]
    cm_s[...] = bc[:, d_state:]

    at = at_ref[...]                                       # (d_state, d_inner), negative

    # ---- chunked selective scan ------------------------------------------
    n_sub = Lc // chunk

    def sub_body(s, h):
        off = pl.multiple_of(s * chunk, chunk)
        d_blk = delta_s[pl.ds(off, chunk), :]              # aligned (chunk, d_inner)
        du_blk = du_s[pl.ds(off, chunk), :]
        b_blk = bm_s[pl.ds(off, chunk), :]                 # (chunk, d_state)
        c_blk = cm_s[pl.ds(off, chunk), :]
        # Hoisted off the serial path: vectorised exp + outer product.
        dA = jnp.exp(d_blk[:, None, :] * at[None, :, :])   # (chunk, d_state, d_inner)
        dBu = du_blk[:, None, :] * b_blk[:, :, None]       # (chunk, d_state, d_inner)
        ys = []
        for t in range(chunk):                             # unrolled recurrence
            h = dA[t] * h + dBu[t]
            # y_t = C_t @ h_t as VPU multiply + sublane reduction (no MXU).
            ys.append(jnp.sum(h * c_blk[t, :, None], axis=0, keepdims=True))
        y_s[pl.ds(off, chunk), :] = jnp.concatenate(ys, axis=0)  # single aligned store
        return h

    hstate_ref[...] = lax.fori_loop(0, n_sub, sub_body, hstate_ref[...],
                                    unroll=unroll_scan)

    # ---- epilogue: D skip, SiLU(z) gate, out_proj -------------------------
    # NOTE: MXU operands kept f32 here to stay within the 1e-3 check vs the
    # f32 reference; bf16 casting is the next lever at production sizes.
    y = y_s[...] + u * dvec_ref[...]
    y = y * (z * jax.nn.sigmoid(z))
    hid_out_ref[0] = jnp.dot(y, wout_ref[...], preferred_element_type=jnp.float32)


def _full_spec(arr):
    zeros = (0,) * arr.ndim
    return pl.BlockSpec(arr.shape, lambda b, c, _z=zeros: _z)


def mamba_layer(hidden, residual, fp, *, seq_chunk):
    B, L, d_model = hidden.shape
    d_state, d_inner = fp["AT"].shape
    d_conv = fp["convw"].shape[0]
    assert L % seq_chunk == 0 and seq_chunk % _SCAN_CHUNK == 0
    assert d_conv - 1 <= _CARRY_ROWS
    nc = L // seq_chunk
    n_sub = seq_chunk // _SCAN_CHUNK

    kernel = functools.partial(
        _mamba_layer_kernel, Lc=seq_chunk, d_inner=d_inner, d_state=d_state,
        d_conv=d_conv, chunk=_SCAN_CHUNK, unroll_scan=bool(n_sub <= 8))

    weights = [fp["ln_w"], fp["ln_b"], fp["W_in"], fp["convw"], fp["convb"],
               fp["W_delta"], fp["dt_bias"], fp["W_bc"], fp["AT"], fp["D"],
               fp["Wout"]]
    seq_spec = pl.BlockSpec((1, seq_chunk, d_model), lambda b, c: (b, c, 0))

    return pl.pallas_call(
        kernel,
        out_shape=(jax.ShapeDtypeStruct((B, L, d_model), jnp.float32),
                   jax.ShapeDtypeStruct((B, L, d_model), jnp.float32)),
        grid=(B, nc),
        in_specs=[seq_spec, seq_spec] + [_full_spec(w) for w in weights],
        out_specs=(seq_spec, seq_spec),
        scratch_shapes=[
            pltpu.VMEM((d_state, d_inner), jnp.float32),       # carried scan state
            pltpu.VMEM((_CARRY_ROWS, d_inner), jnp.float32),   # conv history
            pltpu.VMEM((seq_chunk, d_inner), jnp.float32),     # delta
            pltpu.VMEM((seq_chunk, d_inner), jnp.float32),     # delta * u
            pltpu.VMEM((seq_chunk, d_state), jnp.float32),     # B(t)
            pltpu.VMEM((seq_chunk, d_state), jnp.float32),     # C(t)
            pltpu.VMEM((seq_chunk, d_inner), jnp.float32),     # scan outputs y
        ],
        compiler_params=pltpu.CompilerParams(
            dimension_semantics=("parallel", "arbitrary"),
            vmem_limit_bytes=48 * 1024 * 1024),
    )(hidden, residual, *weights)


# ---------------------------------------------------------------------------
# Kernel 2: final residual-add + LayerNorm (norm_f)
# ---------------------------------------------------------------------------
def _final_norm_kernel(hid_ref, res_ref, w_ref, b_ref, out_ref):
    v = hid_ref[0] + res_ref[0]
    mu = jnp.mean(v, axis=-1, keepdims=True)
    var = jnp.mean(jnp.square(v - mu), axis=-1, keepdims=True)
    out_ref[0] = (v - mu) * lax.rsqrt(var + EPS) * w_ref[...] + b_ref[...]


def final_add_layernorm(hidden, residual, weight, bias, *, seq_chunk):
    B, L, C = hidden.shape
    nc = L // seq_chunk
    seq_spec = pl.BlockSpec((1, seq_chunk, C), lambda b, c: (b, c, 0))
    vec_spec = pl.BlockSpec((1, C), lambda b, c: (0, 0))
    return pl.pallas_call(
        _final_norm_kernel,
        out_shape=jax.ShapeDtypeStruct((B, L, C), jnp.float32),
        grid=(B, nc),
        in_specs=[seq_spec, seq_spec, vec_spec, vec_spec],
        out_specs=seq_spec,
        compiler_params=pltpu.CompilerParams(
            dimension_semantics=("parallel", "parallel")),
    )(hidden, residual, weight.reshape(1, C), bias.reshape(1, C))


# ---------------------------------------------------------------------------
# Mamba_Block forward (Pallas) and parameter construction
# ---------------------------------------------------------------------------
def fuse_layer_params(p):
    """Pre-fuse the skinny projections into wide MXU-friendly matrices."""
    return dict(
        ln_w=p["ln_w"].reshape(1, -1),
        ln_b=p["ln_b"].reshape(1, -1),
        W_in=jnp.concatenate([p["Winx"], p["Winz"]], axis=1),
        convw=p["convw"],
        convb=p["convb"],
        W_delta=jnp.dot(p["Wx_dt"], p["Wdt"]),       # fold dt_proj (dt_rank tiny)
        dt_bias=p["dt_bias"],
        W_bc=jnp.concatenate([p["Wx_B"], p["Wx_C"]], axis=1),
        AT=p["AT"],
        D=p["D"],
        Wout=p["Wout"],
    )


def _pick_seq_chunk(L, requested=None):
    if requested is not None:
        return requested
    best = None
    for cand in range(8, min(L, 512) + 1, 8):
        if L % cand == 0:
            best = cand
    assert best is not None, "sequence length must have a multiple-of-8 divisor"
    return best


def mamba_block_forward(x, params, seq_chunk=None):
    B, C, H, W = x.shape
    L = H * W
    assert L % 8 == 0
    seq_chunk = _pick_seq_chunk(L, seq_chunk)
    hidden = x.reshape(B, C, L).transpose(0, 2, 1)          # (B, L, C)
    residual = jnp.zeros_like(hidden)                       # layer 0: residual = hidden
    for p in params["layers"]:
        fp = fuse_layer_params(p)
        hidden, residual = mamba_layer(hidden, residual, fp, seq_chunk=seq_chunk)
    hidden = final_add_layernorm(hidden, residual, params["norm_f_w"],
                                 params["norm_f_b"], seq_chunk=seq_chunk)
    return hidden.transpose(0, 2, 1).reshape(B, C, H, W)


def init_params(key, depth, d_model):
    d_inner = EXPAND * d_model
    dt_rank = math.ceil(d_model / 16)
    layers = []
    for _ in range(depth):
        key, *ks = jax.random.split(key, 11)
        s = 0.05
        layers.append(dict(
            ln_w=jnp.ones((d_model,), jnp.float32),
            ln_b=jnp.zeros((d_model,), jnp.float32),
            Winx=s * jax.random.normal(ks[0], (d_model, d_inner), jnp.float32),
            Winz=s * jax.random.normal(ks[1], (d_model, d_inner), jnp.float32),
            convw=s * jax.random.normal(ks[2], (D_CONV, d_inner), jnp.float32),
            convb=s * jax.random.normal(ks[3], (1, d_inner), jnp.float32),
            Wx_dt=s * jax.random.normal(ks[4], (d_inner, dt_rank), jnp.float32),
            Wx_B=s * jax.random.normal(ks[5], (d_inner, D_STATE), jnp.float32),
            Wx_C=s * jax.random.normal(ks[6], (d_inner, D_STATE), jnp.float32),
            Wdt=s * jax.random.normal(ks[7], (dt_rank, d_inner), jnp.float32),
            dt_bias=0.1 * jax.random.normal(ks[8], (1, d_inner), jnp.float32),
            # A = -exp(A_log), A_log = log(arange(1..d_state)) per channel
            AT=-jnp.tile(jnp.arange(1, D_STATE + 1, dtype=jnp.float32)[:, None],
                         (1, d_inner)),
            D=jnp.ones((1, d_inner), jnp.float32),
            Wout=s * jax.random.normal(ks[9], (d_inner, d_model), jnp.float32),
        ))
    return dict(layers=layers,
                norm_f_w=jnp.ones((d_model,), jnp.float32),
                norm_f_b=jnp.zeros((d_model,), jnp.float32))


# ---------------------------------------------------------------------------
# Pure-JAX reference (mirrors the PyTorch slow path) for a correctness check
# ---------------------------------------------------------------------------
def _layernorm_ref(v, w, b):
    mu = v.mean(-1, keepdims=True)
    var = jnp.square(v - mu).mean(-1, keepdims=True)
    return (v - mu) / jnp.sqrt(var + EPS) * w + b


def _mixer_reference(hs, p):
    L = hs.shape[0]
    d_state = p["AT"].shape[0]
    x = hs @ p["Winx"]
    z = hs @ p["Winz"]
    xp = jnp.pad(x, ((D_CONV - 1, 0), (0, 0)))
    xc = sum(xp[k:k + L] * p["convw"][k] for k in range(D_CONV)) + p["convb"]
    u = jax.nn.silu(xc)
    dt_low = u @ p["Wx_dt"]
    Bm = u @ p["Wx_B"]
    Cm = u @ p["Wx_C"]
    delta = jax.nn.softplus(dt_low @ p["Wdt"] + p["dt_bias"])
    dA = jnp.exp(delta[:, None, :] * p["AT"][None, :, :])
    dBu = (delta * u)[:, None, :] * Bm[:, :, None]

    def step(h, inp):
        da_t, dbu_t, c_t = inp
        h = da_t * h + dbu_t
        return h, jnp.sum(h * c_t[:, None], axis=0)

    _, ys = lax.scan(step, jnp.zeros((d_state, u.shape[1]), jnp.float32),
                     (dA, dBu, Cm))
    y = ys + u * p["D"]
    y = y * jax.nn.silu(z)
    return y @ p["Wout"]


def mamba_block_reference(x, params):
    B, C, H, W = x.shape
    hidden = x.reshape(B, C, H * W).transpose(0, 2, 1)
    residual = jnp.zeros_like(hidden)
    for p in params["layers"]:
        residual = residual + hidden
        hn = _layernorm_ref(residual, p["ln_w"], p["ln_b"])
        hidden = jax.vmap(lambda h: _mixer_reference(h, p))(hn)
    residual = residual + hidden
    hidden = _layernorm_ref(residual, params["norm_f_w"], params["norm_f_b"])
    return hidden.transpose(0, 2, 1).reshape(B, C, H, W)


if __name__ == "__main__":
    key = jax.random.PRNGKey(0)
    B, C, H, W = 2, 32, 8, 8       # embed_dim = C = 32, L = H*W = 64
    depth = 2
    key_x, key_p = jax.random.split(key)
    x = jax.random.normal(key_x, (B, C, H, W), jnp.float32)
    params = init_params(key_p, depth, C)

    ref = jax.block_until_ready(mamba_block_reference(x, params))

    # multi-chunk path (exercises the carried scan state / conv history)
    out = jax.block_until_ready(mamba_block_forward(x, params, seq_chunk=32))
    assert out.shape == (B, C, H, W) and out.dtype == jnp.float32
    max_err = float(jnp.max(jnp.abs(out - ref)))
    if not max_err < 1e-3:
        raise AssertionError(f"Pallas (chunked) mismatch vs reference: {max_err}")

    # single-chunk path
    out_full = jax.block_until_ready(mamba_block_forward(x, params))
    max_err_full = float(jnp.max(jnp.abs(out_full - ref)))
    if not max_err_full < 1e-3:
        raise AssertionError(f"Pallas (full-seq) mismatch vs reference: {max_err_full}")

    print("KERNEL_OK")
</pallas_src>

<mosaic_0001>
module attributes {stable_mosaic.version = 11 : i64} {
  func.func @_mamba_layer_kernel(%arg0: i32, %arg1: i32, %arg2: memref<1x32x32xf32, #tpu.memory_space<vmem>>, %arg3: memref<1x32x32xf32, #tpu.memory_space<vmem>>, %arg4: memref<1x32xf32, #tpu.memory_space<vmem>>, %arg5: memref<1x32xf32, #tpu.memory_space<vmem>>, %arg6: memref<32x128xf32, #tpu.memory_space<vmem>>, %arg7: memref<4x64xf32, #tpu.memory_space<vmem>>, %arg8: memref<1x64xf32, #tpu.memory_space<vmem>>, %arg9: memref<64x64xf32, #tpu.memory_space<vmem>>, %arg10: memref<1x64xf32, #tpu.memory_space<vmem>>, %arg11: memref<64x32xf32, #tpu.memory_space<vmem>>, %arg12: memref<16x64xf32, #tpu.memory_space<vmem>>, %arg13: memref<1x64xf32, #tpu.memory_space<vmem>>, %arg14: memref<64x32xf32, #tpu.memory_space<vmem>>, %arg15: memref<1x32x32xf32, #tpu.memory_space<vmem>>, %arg16: memref<1x32x32xf32, #tpu.memory_space<vmem>>, %arg17: memref<16x64xf32, #tpu.memory_space<vmem>>, %arg18: memref<8x64xf32, #tpu.memory_space<vmem>>, %arg19: memref<32x64xf32, #tpu.memory_space<vmem>>, %arg20: memref<32x64xf32, #tpu.memory_space<vmem>>, %arg21: memref<32x16xf32, #tpu.memory_space<vmem>>, %arg22: memref<32x16xf32, #tpu.memory_space<vmem>>, %arg23: memref<32x64xf32, #tpu.memory_space<vmem>>) attributes {dimension_semantics = [#tpu.dimension_semantics<parallel>, #tpu.dimension_semantics<arbitrary>], iteration_bounds = array<i64: 2, 2>, scalar_prefetch = 0 : i64, scratch_operands = 7 : i64, tpu.core_type = #tpu.core_type<tc>, window_params = [{transform_indices = @transform_0, window_bounds = array<i64: 1, 32, 32>}, {transform_indices = @transform_1, window_bounds = array<i64: 1, 32, 32>}, {pipeline_mode = #tpu.pipeline_mode<synchronous>, transform_indices = @transform_2, window_bounds = array<i64: 1, 32>}, {pipeline_mode = #tpu.pipeline_mode<synchronous>, transform_indices = @transform_3, window_bounds = array<i64: 1, 32>}, {pipeline_mode = #tpu.pipeline_mode<synchronous>, transform_indices = @transform_4, window_bounds = array<i64: 32, 128>}, {pipeline_mode = #tpu.pipeline_mode<synchronous>, transform_indices = @transform_5, window_bounds = array<i64: 4, 64>}, {pipeline_mode = #tpu.pipeline_mode<synchronous>, transform_indices = @transform_6, window_bounds = array<i64: 1, 64>}, {pipeline_mode = #tpu.pipeline_mode<synchronous>, transform_indices = @transform_7, window_bounds = array<i64: 64, 64>}, {pipeline_mode = #tpu.pipeline_mode<synchronous>, transform_indices = @transform_8, window_bounds = array<i64: 1, 64>}, {pipeline_mode = #tpu.pipeline_mode<synchronous>, transform_indices = @transform_9, window_bounds = array<i64: 64, 32>}, {pipeline_mode = #tpu.pipeline_mode<synchronous>, transform_indices = @transform_10, window_bounds = array<i64: 16, 64>}, {pipeline_mode = #tpu.pipeline_mode<synchronous>, transform_indices = @transform_11, window_bounds = array<i64: 1, 64>}, {pipeline_mode = #tpu.pipeline_mode<synchronous>, transform_indices = @transform_12, window_bounds = array<i64: 64, 32>}, {transform_indices = @transform_13, window_bounds = array<i64: 1, 32, 32>}, {transform_indices = @transform_14, window_bounds = array<i64: 1, 32, 32>}]} {
    %c0_i32 = arith.constant 0 : i32
    %0 = arith.cmpi eq, %arg1, %c0_i32 : i32
    %1 = arith.extui %0 : i1 to i32
    %c0_i32_0 = arith.constant 0 : i32
    %2 = arith.cmpi ne, %1, %c0_i32_0 : i32
    scf.if %2 {
      %cst_123 = arith.constant 0.000000e+00 : f32
      %632 = vector.broadcast %cst_123 : f32 to vector<16x64xf32>
      %c0_124 = arith.constant 0 : index
      %c0_125 = arith.constant 0 : index
      %633 = vector.load %arg17[%c0_124, %c0_125] : memref<16x64xf32, #tpu.memory_space<vmem>>, vector<16x64xf32>
      tpu.vector_store %arg17[%c0_124, %c0_125], %632 {strides = array<i32>} : memref<16x64xf32, #tpu.memory_space<vmem>>, vector<16x64xf32>,
      %cst_126 = arith.constant 0.000000e+00 : f32
      %634 = vector.broadcast %cst_126 : f32 to vector<8x64xf32>
      %c0_127 = arith.constant 0 : index
      %c0_128 = arith.constant 0 : index
      %635 = vector.load %arg18[%c0_127, %c0_128] : memref<8x64xf32, #tpu.memory_space<vmem>>, vector<8x64xf32>
      tpu.vector_store %arg18[%c0_127, %c0_128], %634 {strides = array<i32>} : memref<8x64xf32, #tpu.memory_space<vmem>>, vector<8x64xf32>,
    } else {
    }
    %c0 = arith.constant 0 : index
    %c0_1 = arith.constant 0 : index
    %c0_2 = arith.constant 0 : index
    %3 = vector.load %arg2[%c0, %c0_1, %c0_2] : memref<1x32x32xf32, #tpu.memory_space<vmem>>, vector<1x32x32xf32>
    %4 = vector.shape_cast %3 : vector<1x32x32xf32> to vector<32x32xf32>
    %c0_3 = arith.constant 0 : index
    %c0_4 = arith.constant 0 : index
    %c0_5 = arith.constant 0 : index
    %5 = vector.load %arg3[%c0_3, %c0_4, %c0_5] : memref<1x32x32xf32, #tpu.memory_space<vmem>>, vector<1x32x32xf32>
    %6 = vector.shape_cast %5 : vector<1x32x32xf32> to vector<32x32xf32>
    %7 = arith.addf %4, %6 : vector<32x32xf32>
    %c0_6 = arith.constant 0 : index
    %c0_7 = arith.constant 0 : index
    %c0_8 = arith.constant 0 : index
    %8 = vector.load %arg16[%c0_6, %c0_7, %c0_8] : memref<1x32x32xf32, #tpu.memory_space<vmem>>, vector<1x32x32xf32>
    %9 = vector.shape_cast %8 : vector<1x32x32xf32> to vector<32x32xf32>
    %10 = vector.shape_cast %7 : vector<32x32xf32> to vector<1x32x32xf32>
    tpu.vector_store %arg16[%c0_6, %c0_7, %c0_8], %10 {strides = array<i32>} : memref<1x32x32xf32, #tpu.memory_space<vmem>>, vector<1x32x32xf32>,
    %cst = arith.constant dense<0.000000e+00> : vector<32xf32>
    %11 = vector.multi_reduction <add>, %7, %cst [1] : vector<32x32xf32> to vector<32xf32>
    %12 = vector.shape_cast %11 : vector<32xf32> to vector<32x1xf32>
    %cst_9 = arith.constant 3.200000e+01 : f32
    %13 = vector.broadcast %cst_9 : f32 to vector<32x1xf32>
    %14 = arith.divf %12, %13 : vector<32x1xf32>
    %15 = vector.broadcast %14 : vector<32x1xf32> to vector<32x32xf32>
    %16 = arith.subf %7, %15 : vector<32x32xf32>
    %17 = arith.mulf %16, %16 : vector<32x32xf32>
    %cst_10 = arith.constant dense<0.000000e+00> : vector<32xf32>
    %18 = vector.multi_reduction <add>, %17, %cst_10 [1] : vector<32x32xf32> to vector<32xf32>
    %19 = vector.shape_cast %18 : vector<32xf32> to vector<32x1xf32>
    %cst_11 = arith.constant 3.200000e+01 : f32
    %20 = vector.broadcast %cst_11 : f32 to vector<32x1xf32>
    %21 = arith.divf %19, %20 : vector<32x1xf32>
    %22 = vector.broadcast %14 : vector<32x1xf32> to vector<32x32xf32>
    %23 = arith.subf %7, %22 : vector<32x32xf32>
    %cst_12 = arith.constant 9.99999974E-6 : f32
    %24 = vector.broadcast %cst_12 : f32 to vector<32x1xf32>
    %25 = arith.addf %21, %24 : vector<32x1xf32>
    %26 = math.rsqrt %25 : vector<32x1xf32>
    %27 = vector.broadcast %26 : vector<32x1xf32> to vector<32x32xf32>
    %28 = arith.mulf %23, %27 : vector<32x32xf32>
    %c0_13 = arith.constant 0 : index
    %c0_14 = arith.constant 0 : index
    %29 = vector.load %arg4[%c0_13, %c0_14] : memref<1x32xf32, #tpu.memory_space<vmem>>, vector<1x32xf32>
    %30 = vector.broadcast %29 : vector<1x32xf32> to vector<32x32xf32>
    %31 = arith.mulf %28, %30 : vector<32x32xf32>
    %c0_15 = arith.constant 0 : index
    %c0_16 = arith.constant 0 : index
    %32 = vector.load %arg5[%c0_15, %c0_16] : memref<1x32xf32, #tpu.memory_space<vmem>>, vector<1x32xf32>
    %33 = vector.broadcast %32 : vector<1x32xf32> to vector<32x32xf32>
    %34 = arith.addf %31, %33 : vector<32x32xf32>
    %c0_17 = arith.constant 0 : index
    %c0_18 = arith.constant 0 : index
    %35 = vector.load %arg6[%c0_17, %c0_18] : memref<32x128xf32, #tpu.memory_space<vmem>>, vector<32x128xf32>
    %cst_19 = arith.constant dense<0.000000e+00> : vector<32x128xf32>
    %36 = tpu.matmul %34, %35, %cst_19 {dimension_numbers = #tpu.dot_dimension_numbers<[1], [0], [0], [1], [0, 0, 1, 1], [], []>} : vector<32x32xf32>, vector<32x128xf32>, vector<32x128xf32> -> vector<32x128xf32>
    %37 = vector.extract_strided_slice %36 {offsets = [0, 0], sizes = [32, 64], strides = [1, 1]} : vector<32x128xf32> to vector<32x64xf32>
    %38 = vector.extract_strided_slice %36 {offsets = [0, 64], sizes = [32, 64], strides = [1, 1]} : vector<32x128xf32> to vector<32x64xf32>
    %c0_20 = arith.constant 0 : index
    %c0_21 = arith.constant 0 : index
    %39 = vector.load %arg18[%c0_20, %c0_21] : memref<8x64xf32, #tpu.memory_space<vmem>>, vector<8x64xf32>
    %40 = tpu.concatenate %39, %37 in 0 : vector<8x64xf32>, vector<32x64xf32> -> vector<40x64xf32>
    %41 = vector.extract_strided_slice %37 {offsets = [24, 0], sizes = [8, 64], strides = [1, 1]} : vector<32x64xf32> to vector<8x64xf32>
    %c0_22 = arith.constant 0 : index
    %c0_23 = arith.constant 0 : index
    %42 = vector.load %arg18[%c0_22, %c0_23] : memref<8x64xf32, #tpu.memory_space<vmem>>, vector<8x64xf32>
    tpu.vector_store %arg18[%c0_22, %c0_23], %41 {strides = array<i32>} : memref<8x64xf32, #tpu.memory_space<vmem>>, vector<8x64xf32>,
    %c0_24 = arith.constant 0 : index
    %c0_25 = arith.constant 0 : index
    %43 = vector.load %arg8[%c0_24, %c0_25] : memref<1x64xf32, #tpu.memory_space<vmem>>, vector<1x64xf32>
    %44 = vector.shape_cast %43 : vector<1x64xf32> to vector<1x64xf32>
    %45 = vector.broadcast %44 : vector<1x64xf32> to vector<32x64xf32>
    %46 = vector.extract_strided_slice %40 {offsets = [5, 0], sizes = [32, 64], strides = [1, 1]} : vector<40x64xf32> to vector<32x64xf32>
    %c0_26 = arith.constant 0 : index
    %c0_27 = arith.constant 0 : index
    %47 = vector.load %arg7[%c0_26, %c0_27] : memref<4x64xf32, #tpu.memory_space<vmem>>, vector<1x64xf32>
    %48 = vector.broadcast %47 : vector<1x64xf32> to vector<32x64xf32>
    %49 = arith.mulf %46, %48 : vector<32x64xf32>
    %50 = arith.addf %45, %49 : vector<32x64xf32>
    %51 = vector.extract_strided_slice %40 {offsets = [6, 0], sizes = [32, 64], strides = [1, 1]} : vector<40x64xf32> to vector<32x64xf32>
    %c1 = arith.constant 1 : index
    %c0_28 = arith.constant 0 : index
    %52 = vector.load %arg7[%c1, %c0_28] : memref<4x64xf32, #tpu.memory_space<vmem>>, vector<1x64xf32>
    %53 = vector.broadcast %52 : vector<1x64xf32> to vector<32x64xf32>
    %54 = arith.mulf %51, %53 : vector<32x64xf32>
    %55 = arith.addf %50, %54 : vector<32x64xf32>
    %56 = vector.extract_strided_slice %40 {offsets = [7, 0], sizes = [32, 64], strides = [1, 1]} : vector<40x64xf32> to vector<32x64xf32>
    %c2 = arith.constant 2 : index
    %c0_29 = arith.constant 0 : index
    %57 = vector.load %arg7[%c2, %c0_29] : memref<4x64xf32, #tpu.memory_space<vmem>>, vector<1x64xf32>
    %58 = vector.broadcast %57 : vector<1x64xf32> to vector<32x64xf32>
    %59 = arith.mulf %56, %58 : vector<32x64xf32>
    %60 = arith.addf %55, %59 : vector<32x64xf32>
    %61 = vector.extract_strided_slice %40 {offsets = [8, 0], sizes = [32, 64], strides = [1, 1]} : vector<40x64xf32> to vector<32x64xf32>
    %c3 = arith.constant 3 : index
    %c0_30 = arith.constant 0 : index
    %62 = vector.load %arg7[%c3, %c0_30] : memref<4x64xf32, #tpu.memory_space<vmem>>, vector<1x64xf32>
    %63 = vector.broadcast %62 : vector<1x64xf32> to vector<32x64xf32>
    %64 = arith.mulf %61, %63 : vector<32x64xf32>
    %65 = arith.addf %60, %64 : vector<32x64xf32>
    %66 = arith.negf %65 : vector<32x64xf32>
    %67 = math.exp %66 : vector<32x64xf32>
    %cst_31 = arith.constant 1.000000e+00 : f32
    %68 = vector.broadcast %cst_31 : f32 to vector<32x64xf32>
    %69 = arith.addf %68, %67 : vector<32x64xf32>
    %70 = arith.divf %68, %69 : vector<32x64xf32>
    %71 = arith.mulf %65, %70 : vector<32x64xf32>
    %c0_32 = arith.constant 0 : index
    %c0_33 = arith.constant 0 : index
    %72 = vector.load %arg9[%c0_32, %c0_33] : memref<64x64xf32, #tpu.memory_space<vmem>>, vector<64x64xf32>
    %cst_34 = arith.constant dense<0.000000e+00> : vector<32x64xf32>
    %73 = tpu.matmul %71, %72, %cst_34 {dimension_numbers = #tpu.dot_dimension_numbers<[1], [0], [0], [1], [0, 0, 1, 1], [], []>} : vector<32x64xf32>, vector<64x64xf32>, vector<32x64xf32> -> vector<32x64xf32>
    %c0_35 = arith.constant 0 : index
    %c0_36 = arith.constant 0 : index
    %74 = vector.load %arg10[%c0_35, %c0_36] : memref<1x64xf32, #tpu.memory_space<vmem>>, vector<1x64xf32>
    %75 = vector.broadcast %74 : vector<1x64xf32> to vector<32x64xf32>
    %76 = arith.addf %73, %75 : vector<32x64xf32>
    %cst_37 = arith.constant 0.000000e+00 : f32
    %77 = vector.broadcast %cst_37 : f32 to vector<32x64xf32>
    %78 = arith.maximumf %76, %77 : vector<32x64xf32>
    %79 = vector.broadcast %cst_37 : f32 to vector<32x64xf32>
    %80 = arith.subf %76, %79 : vector<32x64xf32>
    %81 = arith.cmpf one, %80, %80 : vector<32x64xf32>
    %82 = vector.broadcast %cst_37 : f32 to vector<32x64xf32>
    %83 = arith.addf %76, %82 : vector<32x64xf32>
    %84 = math.absf %80 : vector<32x64xf32>
    %cst_38 = arith.constant 0.000000e+00 : f32
    %85 = vector.broadcast %cst_38 : f32 to vector<32x64xf32>
    %86 = arith.subf %85, %84 : vector<32x64xf32>
    %87 = math.exp %86 : vector<32x64xf32>
    %88 = math.log1p %87 : vector<32x64xf32>
    %89 = arith.addf %78, %88 : vector<32x64xf32>
    %90 = arith.select %81, %83, %89 : vector<32x64xi1>, vector<32x64xf32>
    %c0_39 = arith.constant 0 : index
    %c0_40 = arith.constant 0 : index
    %91 = vector.load %arg11[%c0_39, %c0_40] : memref<64x32xf32, #tpu.memory_space<vmem>>, vector<64x32xf32>
    %cst_41 = arith.constant dense<0.000000e+00> : vector<32x32xf32>
    %92 = tpu.matmul %71, %91, %cst_41 {dimension_numbers = #tpu.dot_dimension_numbers<[1], [0], [0], [1], [0, 0, 1, 1], [], []>} : vector<32x64xf32>, vector<64x32xf32>, vector<32x32xf32> -> vector<32x32xf32>
    %c0_42 = arith.constant 0 : index
    %c0_43 = arith.constant 0 : index
    %93 = vector.load %arg19[%c0_42, %c0_43] : memref<32x64xf32, #tpu.memory_space<vmem>>, vector<32x64xf32>
    tpu.vector_store %arg19[%c0_42, %c0_43], %90 {strides = array<i32>} : memref<32x64xf32, #tpu.memory_space<vmem>>, vector<32x64xf32>,
    %94 = arith.mulf %90, %71 : vector<32x64xf32>
    %c0_44 = arith.constant 0 : index
    %c0_45 = arith.constant 0 : index
    %95 = vector.load %arg20[%c0_44, %c0_45] : memref<32x64xf32, #tpu.memory_space<vmem>>, vector<32x64xf32>
    tpu.vector_store %arg20[%c0_44, %c0_45], %94 {strides = array<i32>} : memref<32x64xf32, #tpu.memory_space<vmem>>, vector<32x64xf32>,
    %96 = vector.extract_strided_slice %92 {offsets = [0, 0], sizes = [32, 16], strides = [1, 1]} : vector<32x32xf32> to vector<32x16xf32>
    %c0_46 = arith.constant 0 : index
    %c0_47 = arith.constant 0 : index
    %97 = vector.load %arg21[%c0_46, %c0_47] : memref<32x16xf32, #tpu.memory_space<vmem>>, vector<32x16xf32>
    tpu.vector_store %arg21[%c0_46, %c0_47], %96 {strides = array<i32>} : memref<32x16xf32, #tpu.memory_space<vmem>>, vector<32x16xf32>,
    %98 = vector.extract_strided_slice %92 {offsets = [0, 16], sizes = [32, 16], strides = [1, 1]} : vector<32x32xf32> to vector<32x16xf32>
    %c0_48 = arith.constant 0 : index
    %c0_49 = arith.constant 0 : index
    %99 = vector.load %arg22[%c0_48, %c0_49] : memref<32x16xf32, #tpu.memory_space<vmem>>, vector<32x16xf32>
    tpu.vector_store %arg22[%c0_48, %c0_49], %98 {strides = array<i32>} : memref<32x16xf32, #tpu.memory_space<vmem>>, vector<32x16xf32>,
    %c0_50 = arith.constant 0 : index
    %c0_51 = arith.constant 0 : index
    %100 = vector.load %arg12[%c0_50, %c0_51] : memref<16x64xf32, #tpu.memory_space<vmem>>, vector<16x64xf32>
    %c0_52 = arith.constant 0 : index
    %c0_53 = arith.constant 0 : index
    %101 = vector.load %arg17[%c0_52, %c0_53] : memref<16x64xf32, #tpu.memory_space<vmem>>, vector<16x64xf32>
    %c0_i32_54 = arith.constant 0 : i32
    %c8_i32 = arith.constant 8 : i32
    %102 = arith.muli %c0_i32_54, %c8_i32 : i32
    %103 = tpu.assume_multiple %102, 8 : i32
    %104 = arith.index_cast %103 : i32 to index
    %c0_55 = arith.constant 0 : index
    %105 = vector.load %arg19[%104, %c0_55] : memref<32x64xf32, #tpu.memory_space<vmem>>, vector<8x64xf32>
    %106 = arith.index_cast %103 : i32 to index
    %c0_56 = arith.constant 0 : index
    %107 = vector.load %arg20[%106, %c0_56] : memref<32x64xf32, #tpu.memory_space<vmem>>, vector<8x64xf32>
    %108 = arith.index_cast %103 : i32 to index
    %c0_57 = arith.constant 0 : index
    %109 = vector.load %arg21[%108, %c0_57] : memref<32x16xf32, #tpu.memory_space<vmem>>, vector<8x16xf32>
    %110 = arith.index_cast %103 : i32 to index
    %c0_58 = arith.constant 0 : index
    %111 = vector.load %arg22[%110, %c0_58] : memref<32x16xf32, #tpu.memory_space<vmem>>, vector<8x16xf32>
    %112 = vector.shape_cast %105 : vector<8x64xf32> to vector<8x1x64xf32>
    %113 = vector.shape_cast %100 : vector<16x64xf32> to vector<1x16x64xf32>
    %114 = vector.broadcast %112 : vector<8x1x64xf32> to vector<8x16x64xf32>
    %115 = vector.broadcast %113 : vector<1x16x64xf32> to vector<8x16x64xf32>
    %116 = arith.mulf %114, %115 : vector<8x16x64xf32>
    %117 = math.exp %116 : vector<8x16x64xf32>
    %118 = vector.shape_cast %107 : vector<8x64xf32> to vector<8x1x64xf32>
    %119 = vector.shape_cast %109 : vector<8x16xf32> to vector<8x16x1xf32>
    %120 = vector.broadcast %118 : vector<8x1x64xf32> to vector<8x16x64xf32>
    %121 = vector.broadcast %119 : vector<8x16x1xf32> to vector<8x16x64xf32>
    %122 = arith.mulf %120, %121 : vector<8x16x64xf32>
    %123 = vector.extract_strided_slice %117 {offsets = [0, 0, 0], sizes = [1, 16, 64], strides = [1, 1, 1]} : vector<8x16x64xf32> to vector<1x16x64xf32>
    %124 = vector.shape_cast %123 : vector<1x16x64xf32> to vector<16x64xf32>
    %125 = arith.mulf %124, %101 : vector<16x64xf32>
    %126 = vector.extract_strided_slice %122 {offsets = [0, 0, 0], sizes = [1, 16, 64], strides = [1, 1, 1]} : vector<8x16x64xf32> to vector<1x16x64xf32>
    %127 = vector.shape_cast %126 : vector<1x16x64xf32> to vector<16x64xf32>
    %128 = arith.addf %125, %127 : vector<16x64xf32>
    %129 = vector.extract_strided_slice %111 {offsets = [0, 0], sizes = [1, 16], strides = [1, 1]} : vector<8x16xf32> to vector<1x16xf32>
    %130 = vector.shape_cast %129 : vector<1x16xf32> to vector<16xf32>
    %131 = vector.shape_cast %130 : vector<16xf32> to vector<16x1xf32>
    %132 = vector.broadcast %131 : vector<16x1xf32> to vector<16x64xf32>
    %133 = arith.mulf %128, %132 : vector<16x64xf32>
    %cst_59 = arith.constant dense<0.000000e+00> : vector<64xf32>
    %134 = vector.multi_reduction <add>, %133, %cst_59 [0] : vector<16x64xf32> to vector<64xf32>
    %135 = vector.shape_cast %134 : vector<64xf32> to vector<1x64xf32>
    %136 = vector.extract_strided_slice %117 {offsets = [1, 0, 0], sizes = [1, 16, 64], strides = [1, 1, 1]} : vector<8x16x64xf32> to vector<1x16x64xf32>
    %137 = vector.shape_cast %136 : vector<1x16x64xf32> to vector<16x64xf32>
    %138 = arith.mulf %137, %128 : vector<16x64xf32>
    %139 = vector.extract_strided_slice %122 {offsets = [1, 0, 0], sizes = [1, 16, 64], strides = [1, 1, 1]} : vector<8x16x64xf32> to vector<1x16x64xf32>
    %140 = vector.shape_cast %139 : vector<1x16x64xf32> to vector<16x64xf32>
    %141 = arith.addf %138, %140 : vector<16x64xf32>
    %142 = vector.extract_strided_slice %111 {offsets = [1, 0], sizes = [1, 16], strides = [1, 1]} : vector<8x16xf32> to vector<1x16xf32>
    %143 = vector.shape_cast %142 : vector<1x16xf32> to vector<16xf32>
    %144 = vector.shape_cast %143 : vector<16xf32> to vector<16x1xf32>
    %145 = vector.broadcast %144 : vector<16x1xf32> to vector<16x64xf32>
    %146 = arith.mulf %141, %145 : vector<16x64xf32>
    %cst_60 = arith.constant dense<0.000000e+00> : vector<64xf32>
    %147 = vector.multi_reduction <add>, %146, %cst_60 [0] : vector<16x64xf32> to vector<64xf32>
    %148 = vector.shape_cast %147 : vector<64xf32> to vector<1x64xf32>
    %149 = vector.extract_strided_slice %117 {offsets = [2, 0, 0], sizes = [1, 16, 64], strides = [1, 1, 1]} : vector<8x16x64xf32> to vector<1x16x64xf32>
    %150 = vector.shape_cast %149 : vector<1x16x64xf32> to vector<16x64xf32>
    %151 = arith.mulf %150, %141 : vector<16x64xf32>
    %152 = vector.extract_strided_slice %122 {offsets = [2, 0, 0], sizes = [1, 16, 64], strides = [1, 1, 1]} : vector<8x16x64xf32> to vector<1x16x64xf32>
    %153 = vector.shape_cast %152 : vector<1x16x64xf32> to vector<16x64xf32>
    %154 = arith.addf %151, %153 : vector<16x64xf32>
    %155 = vector.extract_strided_slice %111 {offsets = [2, 0], sizes = [1, 16], strides = [1, 1]} : vector<8x16xf32> to vector<1x16xf32>
    %156 = vector.shape_cast %155 : vector<1x16xf32> to vector<16xf32>
    %157 = vector.shape_cast %156 : vector<16xf32> to vector<16x1xf32>
    %158 = vector.broadcast %157 : vector<16x1xf32> to vector<16x64xf32>
    %159 = arith.mulf %154, %158 : vector<16x64xf32>
    %cst_61 = arith.constant dense<0.000000e+00> : vector<64xf32>
    %160 = vector.multi_reduction <add>, %159, %cst_61 [0] : vector<16x64xf32> to vector<64xf32>
    %161 = vector.shape_cast %160 : vector<64xf32> to vector<1x64xf32>
    %162 = vector.extract_strided_slice %117 {offsets = [3, 0, 0], sizes = [1, 16, 64], strides = [1, 1, 1]} : vector<8x16x64xf32> to vector<1x16x64xf32>
    %163 = vector.shape_cast %162 : vector<1x16x64xf32> to vector<16x64xf32>
    %164 = arith.mulf %163, %154 : vector<16x64xf32>
    %165 = vector.extract_strided_slice %122 {offsets = [3, 0, 0], sizes = [1, 16, 64], strides = [1, 1, 1]} : vector<8x16x64xf32> to vector<1x16x64xf32>
    %166 = vector.shape_cast %165 : vector<1x16x64xf32> to vector<16x64xf32>
    %167 = arith.addf %164, %166 : vector<16x64xf32>
    %168 = vector.extract_strided_slice %111 {offsets = [3, 0], sizes = [1, 16], strides = [1, 1]} : vector<8x16xf32> to vector<1x16xf32>
    %169 = vector.shape_cast %168 : vector<1x16xf32> to vector<16xf32>
    %170 = vector.shape_cast %169 : vector<16xf32> to vector<16x1xf32>
    %171 = vector.broadcast %170 : vector<16x1xf32> to vector<16x64xf32>
    %172 = arith.mulf %167, %171 : vector<16x64xf32>
    %cst_62 = arith.constant dense<0.000000e+00> : vector<64xf32>
    %173 = vector.multi_reduction <add>, %172, %cst_62 [0] : vector<16x64xf32> to vector<64xf32>
    %174 = vector.shape_cast %173 : vector<64xf32> to vector<1x64xf32>
    %175 = vector.extract_strided_slice %117 {offsets = [4, 0, 0], sizes = [1, 16, 64], strides = [1, 1, 1]} : vector<8x16x64xf32> to vector<1x16x64xf32>
    %176 = vector.shape_cast %175 : vector<1x16x64xf32> to vector<16x64xf32>
    %177 = arith.mulf %176, %167 : vector<16x64xf32>
    %178 = vector.extract_strided_slice %122 {offsets = [4, 0, 0], sizes = [1, 16, 64], strides = [1, 1, 1]} : vector<8x16x64xf32> to vector<1x16x64xf32>
    %179 = vector.shape_cast %178 : vector<1x16x64xf32> to vector<16x64xf32>
    %180 = arith.addf %177, %179 : vector<16x64xf32>
    %181 = vector.extract_strided_slice %111 {offsets = [4, 0], sizes = [1, 16], strides = [1, 1]} : vector<8x16xf32> to vector<1x16xf32>
    %182 = vector.shape_cast %181 : vector<1x16xf32> to vector<16xf32>
    %183 = vector.shape_cast %182 : vector<16xf32> to vector<16x1xf32>
    %184 = vector.broadcast %183 : vector<16x1xf32> to vector<16x64xf32>
    %185 = arith.mulf %180, %184 : vector<16x64xf32>
    %cst_63 = arith.constant dense<0.000000e+00> : vector<64xf32>
    %186 = vector.multi_reduction <add>, %185, %cst_63 [0] : vector<16x64xf32> to vector<64xf32>
    %187 = vector.shape_cast %186 : vector<64xf32> to vector<1x64xf32>
    %188 = vector.extract_strided_slice %117 {offsets = [5, 0, 0], sizes = [1, 16, 64], strides = [1, 1, 1]} : vector<8x16x64xf32> to vector<1x16x64xf32>
    %189 = vector.shape_cast %188 : vector<1x16x64xf32> to vector<16x64xf32>
    %190 = arith.mulf %189, %180 : vector<16x64xf32>
    %191 = vector.extract_strided_slice %122 {offsets = [5, 0, 0], sizes = [1, 16, 64], strides = [1, 1, 1]} : vector<8x16x64xf32> to vector<1x16x64xf32>
    %192 = vector.shape_cast %191 : vector<1x16x64xf32> to vector<16x64xf32>
    %193 = arith.addf %190, %192 : vector<16x64xf32>
    %194 = vector.extract_strided_slice %111 {offsets = [5, 0], sizes = [1, 16], strides = [1, 1]} : vector<8x16xf32> to vector<1x16xf32>
    %195 = vector.shape_cast %194 : vector<1x16xf32> to vector<16xf32>
    %196 = vector.shape_cast %195 : vector<16xf32> to vector<16x1xf32>
    %197 = vector.broadcast %196 : vector<16x1xf32> to vector<16x64xf32>
    %198 = arith.mulf %193, %197 : vector<16x64xf32>
    %cst_64 = arith.constant dense<0.000000e+00> : vector<64xf32>
    %199 = vector.multi_reduction <add>, %198, %cst_64 [0] : vector<16x64xf32> to vector<64xf32>
    %200 = vector.shape_cast %199 : vector<64xf32> to vector<1x64xf32>
    %201 = vector.extract_strided_slice %117 {offsets = [6, 0, 0], sizes = [1, 16, 64], strides = [1, 1, 1]} : vector<8x16x64xf32> to vector<1x16x64xf32>
    %202 = vector.shape_cast %201 : vector<1x16x64xf32> to vector<16x64xf32>
    %203 = arith.mulf %202, %193 : vector<16x64xf32>
    %204 = vector.extract_strided_slice %122 {offsets = [6, 0, 0], sizes = [1, 16, 64], strides = [1, 1, 1]} : vector<8x16x64xf32> to vector<1x16x64xf32>
    %205 = vector.shape_cast %204 : vector<1x16x64xf32> to vector<16x64xf32>
    %206 = arith.addf %203, %205 : vector<16x64xf32>
    %207 = vector.extract_strided_slice %111 {offsets = [6, 0], sizes = [1, 16], strides = [1, 1]} : vector<8x16xf32> to vector<1x16xf32>
    %208 = vector.shape_cast %207 : vector<1x16xf32> to vector<16xf32>
    %209 = vector.shape_cast %208 : vector<16xf32> to vector<16x1xf32>
    %210 = vector.broadcast %209 : vector<16x1xf32> to vector<16x64xf32>
    %211 = arith.mulf %206, %210 : vector<16x64xf32>
    %cst_65 = arith.constant dense<0.000000e+00> : vector<64xf32>
    %212 = vector.multi_reduction <add>, %211, %cst_65 [0] : vector<16x64xf32> to vector<64xf32>
    %213 = vector.shape_cast %212 : vector<64xf32> to vector<1x64xf32>
    %214 = vector.extract_strided_slice %117 {offsets = [7, 0, 0], sizes = [1, 16, 64], strides = [1, 1, 1]} : vector<8x16x64xf32> to vector<1x16x64xf32>
    %215 = vector.shape_cast %214 : vector<1x16x64xf32> to vector<16x64xf32>
    %216 = arith.mulf %215, %206 : vector<16x64xf32>
    %217 = vector.extract_strided_slice %122 {offsets = [7, 0, 0], sizes = [1, 16, 64], strides = [1, 1, 1]} : vector<8x16x64xf32> to vector<1x16x64xf32>
    %218 = vector.shape_cast %217 : vector<1x16x64xf32> to vector<16x64xf32>
    %219 = arith.addf %216, %218 : vector<16x64xf32>
    %220 = vector.extract_strided_slice %111 {offsets = [7, 0], sizes = [1, 16], strides = [1, 1]} : vector<8x16xf32> to vector<1x16xf32>
    %221 = vector.shape_cast %220 : vector<1x16xf32> to vector<16xf32>
    %222 = vector.shape_cast %221 : vector<16xf32> to vector<16x1xf32>
    %223 = vector.broadcast %222 : vector<16x1xf32> to vector<16x64xf32>
    %224 = arith.mulf %219, %223 : vector<16x64xf32>
    %cst_66 = arith.constant dense<0.000000e+00> : vector<64xf32>
    %225 = vector.multi_reduction <add>, %224, %cst_66 [0] : vector<16x64xf32> to vector<64xf32>
    %226 = vector.shape_cast %225 : vector<64xf32> to vector<1x64xf32>
    %227 = tpu.concatenate %135, %148, %161, %174, %187, %200, %213, %226 in 0 : vector<1x64xf32>, vector<1x64xf32>, vector<1x64xf32>, vector<1x64xf32>, vector<1x64xf32>, vector<1x64xf32>, vector<1x64xf32>, vector<1x64xf32> -> vector<8x64xf32>
    %228 = arith.index_cast %103 : i32 to index
    %c0_67 = arith.constant 0 : index
    %229 = vector.load %arg23[%228, %c0_67] : memref<32x64xf32, #tpu.memory_space<vmem>>, vector<8x64xf32>
    tpu.vector_store %arg23[%228, %c0_67], %227 {strides = array<i32>} : memref<32x64xf32, #tpu.memory_space<vmem>>, vector<8x64xf32>,
    %c1_i32 = arith.constant 1 : i32
    %c8_i32_68 = arith.constant 8 : i32
    %230 = arith.muli %c1_i32, %c8_i32_68 : i32
    %231 = tpu.assume_multiple %230, 8 : i32
    %232 = arith.index_cast %231 : i32 to index
    %c0_69 = arith.constant 0 : index
    %233 = vector.load %arg19[%232, %c0_69] : memref<32x64xf32, #tpu.memory_space<vmem>>, vector<8x64xf32>
    %234 = arith.index_cast %231 : i32 to index
    %c0_70 = arith.constant 0 : index
    %235 = vector.load %arg20[%234, %c0_70] : memref<32x64xf32, #tpu.memory_space<vmem>>, vector<8x64xf32>
    %236 = arith.index_cast %231 : i32 to index
    %c0_71 = arith.constant 0 : index
    %237 = vector.load %arg21[%236, %c0_71] : memref<32x16xf32, #tpu.memory_space<vmem>>, vector<8x16xf32>
    %238 = arith.index_cast %231 : i32 to index
    %c0_72 = arith.constant 0 : index
    %239 = vector.load %arg22[%238, %c0_72] : memref<32x16xf32, #tpu.memory_space<vmem>>, vector<8x16xf32>
    %240 = vector.shape_cast %233 : vector<8x64xf32> to vector<8x1x64xf32>
    %241 = vector.shape_cast %100 : vector<16x64xf32> to vector<1x16x64xf32>
    %242 = vector.broadcast %240 : vector<8x1x64xf32> to vector<8x16x64xf32>
    %243 = vector.broadcast %241 : vector<1x16x64xf32> to vector<8x16x64xf32>
    %244 = arith.mulf %242, %243 : vector<8x16x64xf32>
    %245 = math.exp %244 : vector<8x16x64xf32>
    %246 = vector.shape_cast %235 : vector<8x64xf32> to vector<8x1x64xf32>
    %247 = vector.shape_cast %237 : vector<8x16xf32> to vector<8x16x1xf32>
    %248 = vector.broadcast %246 : vector<8x1x64xf32> to vector<8x16x64xf32>
    %249 = vector.broadcast %247 : vector<8x16x1xf32> to vector<8x16x64xf32>
    %250 = arith.mulf %248, %249 : vector<8x16x64xf32>
    %251 = vector.extract_strided_slice %245 {offsets = [0, 0, 0], sizes = [1, 16, 64], strides = [1, 1, 1]} : vector<8x16x64xf32> to vector<1x16x64xf32>
    %252 = vector.shape_cast %251 : vector<1x16x64xf32> to vector<16x64xf32>
    %253 = arith.mulf %252, %219 : vector<16x64xf32>
    %254 = vector.extract_strided_slice %250 {offsets = [0, 0, 0], sizes = [1, 16, 64], strides = [1, 1, 1]} : vector<8x16x64xf32> to vector<1x16x64xf32>
    %255 = vector.shape_cast %254 : vector<1x16x64xf32> to vector<16x64xf32>
    %256 = arith.addf %253, %255 : vector<16x64xf32>
    %257 = vector.extract_strided_slice %239 {offsets = [0, 0], sizes = [1, 16], strides = [1, 1]} : vector<8x16xf32> to vector<1x16xf32>
    %258 = vector.shape_cast %257 : vector<1x16xf32> to vector<16xf32>
    %259 = vector.shape_cast %258 : vector<16xf32> to vector<16x1xf32>
    %260 = vector.broadcast %259 : vector<16x1xf32> to vector<16x64xf32>
    %261 = arith.mulf %256, %260 : vector<16x64xf32>
    %cst_73 = arith.constant dense<0.000000e+00> : vector<64xf32>
    %262 = vector.multi_reduction <add>, %261, %cst_73 [0] : vector<16x64xf32> to vector<64xf32>
    %263 = vector.shape_cast %262 : vector<64xf32> to vector<1x64xf32>
    %264 = vector.extract_strided_slice %245 {offsets = [1, 0, 0], sizes = [1, 16, 64], strides = [1, 1, 1]} : vector<8x16x64xf32> to vector<1x16x64xf32>
    %265 = vector.shape_cast %264 : vector<1x16x64xf32> to vector<16x64xf32>
    %266 = arith.mulf %265, %256 : vector<16x64xf32>
    %267 = vector.extract_strided_slice %250 {offsets = [1, 0, 0], sizes = [1, 16, 64], strides = [1, 1, 1]} : vector<8x16x64xf32> to vector<1x16x64xf32>
    %268 = vector.shape_cast %267 : vector<1x16x64xf32> to vector<16x64xf32>
    %269 = arith.addf %266, %268 : vector<16x64xf32>
    %270 = vector.extract_strided_slice %239 {offsets = [1, 0], sizes = [1, 16], strides = [1, 1]} : vector<8x16xf32> to vector<1x16xf32>
    %271 = vector.shape_cast %270 : vector<1x16xf32> to vector<16xf32>
    %272 = vector.shape_cast %271 : vector<16xf32> to vector<16x1xf32>
    %273 = vector.broadcast %272 : vector<16x1xf32> to vector<16x64xf32>
    %274 = arith.mulf %269, %273 : vector<16x64xf32>
    %cst_74 = arith.constant dense<0.000000e+00> : vector<64xf32>
    %275 = vector.multi_reduction <add>, %274, %cst_74 [0] : vector<16x64xf32> to vector<64xf32>
    %276 = vector.shape_cast %275 : vector<64xf32> to vector<1x64xf32>
    %277 = vector.extract_strided_slice %245 {offsets = [2, 0, 0], sizes = [1, 16, 64], strides = [1, 1, 1]} : vector<8x16x64xf32> to vector<1x16x64xf32>
    %278 = vector.shape_cast %277 : vector<1x16x64xf32> to vector<16x64xf32>
    %279 = arith.mulf %278, %269 : vector<16x64xf32>
    %280 = vector.extract_strided_slice %250 {offsets = [2, 0, 0], sizes = [1, 16, 64], strides = [1, 1, 1]} : vector<8x16x64xf32> to vector<1x16x64xf32>
    %281 = vector.shape_cast %280 : vector<1x16x64xf32> to vector<16x64xf32>
    %282 = arith.addf %279, %281 : vector<16x64xf32>
    %283 = vector.extract_strided_slice %239 {offsets = [2, 0], sizes = [1, 16], strides = [1, 1]} : vector<8x16xf32> to vector<1x16xf32>
    %284 = vector.shape_cast %283 : vector<1x16xf32> to vector<16xf32>
    %285 = vector.shape_cast %284 : vector<16xf32> to vector<16x1xf32>
    %286 = vector.broadcast %285 : vector<16x1xf32> to vector<16x64xf32>
    %287 = arith.mulf %282, %286 : vector<16x64xf32>
    %cst_75 = arith.constant dense<0.000000e+00> : vector<64xf32>
    %288 = vector.multi_reduction <add>, %287, %cst_75 [0] : vector<16x64xf32> to vector<64xf32>
    %289 = vector.shape_cast %288 : vector<64xf32> to vector<1x64xf32>
    %290 = vector.extract_strided_slice %245 {offsets = [3, 0, 0], sizes = [1, 16, 64], strides = [1, 1, 1]} : vector<8x16x64xf32> to vector<1x16x64xf32>
    %291 = vector.shape_cast %290 : vector<1x16x64xf32> to vector<16x64xf32>
    %292 = arith.mulf %291, %282 : vector<16x64xf32>
    %293 = vector.extract_strided_slice %250 {offsets = [3, 0, 0], sizes = [1, 16, 64], strides = [1, 1, 1]} : vector<8x16x64xf32> to vector<1x16x64xf32>
    %294 = vector.shape_cast %293 : vector<1x16x64xf32> to vector<16x64xf32>
    %295 = arith.addf %292, %294 : vector<16x64xf32>
    %296 = vector.extract_strided_slice %239 {offsets = [3, 0], sizes = [1, 16], strides = [1, 1]} : vector<8x16xf32> to vector<1x16xf32>
    %297 = vector.shape_cast %296 : vector<1x16xf32> to vector<16xf32>
    %298 = vector.shape_cast %297 : vector<16xf32> to vector<16x1xf32>
    %299 = vector.broadcast %298 : vector<16x1xf32> to vector<16x64xf32>
    %300 = arith.mulf %295, %299 : vector<16x64xf32>
    %cst_76 = arith.constant dense<0.000000e+00> : vector<64xf32>
    %301 = vector.multi_reduction <add>, %300, %cst_76 [0] : vector<16x64xf32> to vector<64xf32>
    %302 = vector.shape_cast %301 : vector<64xf32> to vector<1x64xf32>
    %303 = vector.extract_strided_slice %245 {offsets = [4, 0, 0], sizes = [1, 16, 64], strides = [1, 1, 1]} : vector<8x16x64xf32> to vector<1x16x64xf32>
    %304 = vector.shape_cast %303 : vector<1x16x64xf32> to vector<16x64xf32>
    %305 = arith.mulf %304, %295 : vector<16x64xf32>
    %306 = vector.extract_strided_slice %250 {offsets = [4, 0, 0], sizes = [1, 16, 64], strides = [1, 1, 1]} : vector<8x16x64xf32> to vector<1x16x64xf32>
    %307 = vector.shape_cast %306 : vector<1x16x64xf32> to vector<16x64xf32>
    %308 = arith.addf %305, %307 : vector<16x64xf32>
    %309 = vector.extract_strided_slice %239 {offsets = [4, 0], sizes = [1, 16], strides = [1, 1]} : vector<8x16xf32> to vector<1x16xf32>
    %310 = vector.shape_cast %309 : vector<1x16xf32> to vector<16xf32>
    %311 = vector.shape_cast %310 : vector<16xf32> to vector<16x1xf32>
    %312 = vector.broadcast %311 : vector<16x1xf32> to vector<16x64xf32>
    %313 = arith.mulf %308, %312 : vector<16x64xf32>
    %cst_77 = arith.constant dense<0.000000e+00> : vector<64xf32>
    %314 = vector.multi_reduction <add>, %313, %cst_77 [0] : vector<16x64xf32> to vector<64xf32>
    %315 = vector.shape_cast %314 : vector<64xf32> to vector<1x64xf32>
    %316 = vector.extract_strided_slice %245 {offsets = [5, 0, 0], sizes = [1, 16, 64], strides = [1, 1, 1]} : vector<8x16x64xf32> to vector<1x16x64xf32>
    %317 = vector.shape_cast %316 : vector<1x16x64xf32> to vector<16x64xf32>
    %318 = arith.mulf %317, %308 : vector<16x64xf32>
    %319 = vector.extract_strided_slice %250 {offsets = [5, 0, 0], sizes = [1, 16, 64], strides = [1, 1, 1]} : vector<8x16x64xf32> to vector<1x16x64xf32>
    %320 = vector.shape_cast %319 : vector<1x16x64xf32> to vector<16x64xf32>
    %321 = arith.addf %318, %320 : vector<16x64xf32>
    %322 = vector.extract_strided_slice %239 {offsets = [5, 0], sizes = [1, 16], strides = [1, 1]} : vector<8x16xf32> to vector<1x16xf32>
    %323 = vector.shape_cast %322 : vector<1x16xf32> to vector<16xf32>
    %324 = vector.shape_cast %323 : vector<16xf32> to vector<16x1xf32>
    %325 = vector.broadcast %324 : vector<16x1xf32> to vector<16x64xf32>
    %326 = arith.mulf %321, %325 : vector<16x64xf32>
    %cst_78 = arith.constant dense<0.000000e+00> : vector<64xf32>
    %327 = vector.multi_reduction <add>, %326, %cst_78 [0] : vector<16x64xf32> to vector<64xf32>
    %328 = vector.shape_cast %327 : vector<64xf32> to vector<1x64xf32>
    %329 = vector.extract_strided_slice %245 {offsets = [6, 0, 0], sizes = [1, 16, 64], strides = [1, 1, 1]} : vector<8x16x64xf32> to vector<1x16x64xf32>
    %330 = vector.shape_cast %329 : vector<1x16x64xf32> to vector<16x64xf32>
    %331 = arith.mulf %330, %321 : vector<16x64xf32>
    %332 = vector.extract_strided_slice %250 {offsets = [6, 0, 0], sizes = [1, 16, 64], strides = [1, 1, 1]} : vector<8x16x64xf32> to vector<1x16x64xf32>
    %333 = vector.shape_cast %332 : vector<1x16x64xf32> to vector<16x64xf32>
    %334 = arith.addf %331, %333 : vector<16x64xf32>
    %335 = vector.extract_strided_slice %239 {offsets = [6, 0], sizes = [1, 16], strides = [1, 1]} : vector<8x16xf32> to vector<1x16xf32>
    %336 = vector.shape_cast %335 : vector<1x16xf32> to vector<16xf32>
    %337 = vector.shape_cast %336 : vector<16xf32> to vector<16x1xf32>
    %338 = vector.broadcast %337 : vector<16x1xf32> to vector<16x64xf32>
    %339 = arith.mulf %334, %338 : vector<16x64xf32>
    %cst_79 = arith.constant dense<0.000000e+00> : vector<64xf32>
    %340 = vector.multi_reduction <add>, %339, %cst_79 [0] : vector<16x64xf32> to vector<64xf32>
    %341 = vector.shape_cast %340 : vector<64xf32> to vector<1x64xf32>
    %342 = vector.extract_strided_slice %245 {offsets = [7, 0, 0], sizes = [1, 16, 64], strides = [1, 1, 1]} : vector<8x16x64xf32> to vector<1x16x64xf32>
    %343 = vector.shape_cast %342 : vector<1x16x64xf32> to vector<16x64xf32>
    %344 = arith.mulf %343, %334 : vector<16x64xf32>
    %345 = vector.extract_strided_slice %250 {offsets = [7, 0, 0], sizes = [1, 16, 64], strides = [1, 1, 1]} : vector<8x16x64xf32> to vector<1x16x64xf32>
    %346 = vector.shape_cast %345 : vector<1x16x64xf32> to vector<16x64xf32>
    %347 = arith.addf %344, %346 : vector<16x64xf32>
    %348 = vector.extract_strided_slice %239 {offsets = [7, 0], sizes = [1, 16], strides = [1, 1]} : vector<8x16xf32> to vector<1x16xf32>
    %349 = vector.shape_cast %348 : vector<1x16xf32> to vector<16xf32>
    %350 = vector.shape_cast %349 : vector<16xf32> to vector<16x1xf32>
    %351 = vector.broadcast %350 : vector<16x1xf32> to vector<16x64xf32>
    %352 = arith.mulf %347, %351 : vector<16x64xf32>
    %cst_80 = arith.constant dense<0.000000e+00> : vector<64xf32>
    %353 = vector.multi_reduction <add>, %352, %cst_80 [0] : vector<16x64xf32> to vector<64xf32>
    %354 = vector.shape_cast %353 : vector<64xf32> to vector<1x64xf32>
    %355 = tpu.concatenate %263, %276, %289, %302, %315, %328, %341, %354 in 0 : vector<1x64xf32>, vector<1x64xf32>, vector<1x64xf32>, vector<1x64xf32>, vector<1x64xf32>, vector<1x64xf32>, vector<1x64xf32>, vector<1x64xf32> -> vector<8x64xf32>
    %356 = arith.index_cast %231 : i32 to index
    %c0_81 = arith.constant 0 : index
    %357 = vector.load %arg23[%356, %c0_81] : memref<32x64xf32, #tpu.memory_space<vmem>>, vector<8x64xf32>
    tpu.vector_store %arg23[%356, %c0_81], %355 {strides = array<i32>} : memref<32x64xf32, #tpu.memory_space<vmem>>, vector<8x64xf32>,
    %c2_i32 = arith.constant 2 : i32
    %c8_i32_82 = arith.constant 8 : i32
    %358 = arith.muli %c2_i32, %c8_i32_82 : i32
    %359 = tpu.assume_multiple %358, 8 : i32
    %360 = arith.index_cast %359 : i32 to index
    %c0_83 = arith.constant 0 : index
    %361 = vector.load %arg19[%360, %c0_83] : memref<32x64xf32, #tpu.memory_space<vmem>>, vector<8x64xf32>
    %362 = arith.index_cast %359 : i32 to index
    %c0_84 = arith.constant 0 : index
    %363 = vector.load %arg20[%362, %c0_84] : memref<32x64xf32, #tpu.memory_space<vmem>>, vector<8x64xf32>
    %364 = arith.index_cast %359 : i32 to index
    %c0_85 = arith.constant 0 : index
    %365 = vector.load %arg21[%364, %c0_85] : memref<32x16xf32, #tpu.memory_space<vmem>>, vector<8x16xf32>
    %366 = arith.index_cast %359 : i32 to index
    %c0_86 = arith.constant 0 : index
    %367 = vector.load %arg22[%366, %c0_86] : memref<32x16xf32, #tpu.memory_space<vmem>>, vector<8x16xf32>
    %368 = vector.shape_cast %361 : vector<8x64xf32> to vector<8x1x64xf32>
    %369 = vector.shape_cast %100 : vector<16x64xf32> to vector<1x16x64xf32>
    %370 = vector.broadcast %368 : vector<8x1x64xf32> to vector<8x16x64xf32>
    %371 = vector.broadcast %369 : vector<1x16x64xf32> to vector<8x16x64xf32>
    %372 = arith.mulf %370, %371 : vector<8x16x64xf32>
    %373 = math.exp %372 : vector<8x16x64xf32>
    %374 = vector.shape_cast %363 : vector<8x64xf32> to vector<8x1x64xf32>
    %375 = vector.shape_cast %365 : vector<8x16xf32> to vector<8x16x1xf32>
    %376 = vector.broadcast %374 : vector<8x1x64xf32> to vector<8x16x64xf32>
    %377 = vector.broadcast %375 : vector<8x16x1xf32> to vector<8x16x64xf32>
    %378 = arith.mulf %376, %377 : vector<8x16x64xf32>
    %379 = vector.extract_strided_slice %373 {offsets = [0, 0, 0], sizes = [1, 16, 64], strides = [1, 1, 1]} : vector<8x16x64xf32> to vector<1x16x64xf32>
    %380 = vector.shape_cast %379 : vector<1x16x64xf32> to vector<16x64xf32>
    %381 = arith.mulf %380, %347 : vector<16x64xf32>
    %382 = vector.extract_strided_slice %378 {offsets = [0, 0, 0], sizes = [1, 16, 64], strides = [1, 1, 1]} : vector<8x16x64xf32> to vector<1x16x64xf32>
    %383 = vector.shape_cast %382 : vector<1x16x64xf32> to vector<16x64xf32>
    %384 = arith.addf %381, %383 : vector<16x64xf32>
    %385 = vector.extract_strided_slice %367 {offsets = [0, 0], sizes = [1, 16], strides = [1, 1]} : vector<8x16xf32> to vector<1x16xf32>
    %386 = vector.shape_cast %385 : vector<1x16xf32> to vector<16xf32>
    %387 = vector.shape_cast %386 : vector<16xf32> to vector<16x1xf32>
    %388 = vector.broadcast %387 : vector<16x1xf32> to vector<16x64xf32>
    %389 = arith.mulf %384, %388 : vector<16x64xf32>
    %cst_87 = arith.constant dense<0.000000e+00> : vector<64xf32>
    %390 = vector.multi_reduction <add>, %389, %cst_87 [0] : vector<16x64xf32> to vector<64xf32>
    %391 = vector.shape_cast %390 : vector<64xf32> to vector<1x64xf32>
    %392 = vector.extract_strided_slice %373 {offsets = [1, 0, 0], sizes = [1, 16, 64], strides = [1, 1, 1]} : vector<8x16x64xf32> to vector<1x16x64xf32>
    %393 = vector.shape_cast %392 : vector<1x16x64xf32> to vector<16x64xf32>
    %394 = arith.mulf %393, %384 : vector<16x64xf32>
    %395 = vector.extract_strided_slice %378 {offsets = [1, 0, 0], sizes = [1, 16, 64], strides = [1, 1, 1]} : vector<8x16x64xf32> to vector<1x16x64xf32>
    %396 = vector.shape_cast %395 : vector<1x16x64xf32> to vector<16x64xf32>
    %397 = arith.addf %394, %396 : vector<16x64xf32>
    %398 = vector.extract_strided_slice %367 {offsets = [1, 0], sizes = [1, 16], strides = [1, 1]} : vector<8x16xf32> to vector<1x16xf32>
    %399 = vector.shape_cast %398 : vector<1x16xf32> to vector<16xf32>
    %400 = vector.shape_cast %399 : vector<16xf32> to vector<16x1xf32>
    %401 = vector.broadcast %400 : vector<16x1xf32> to vector<16x64xf32>
    %402 = arith.mulf %397, %401 : vector<16x64xf32>
    %cst_88 = arith.constant dense<0.000000e+00> : vector<64xf32>
    %403 = vector.multi_reduction <add>, %402, %cst_88 [0] : vector<16x64xf32> to vector<64xf32>
    %404 = vector.shape_cast %403 : vector<64xf32> to vector<1x64xf32>
    %405 = vector.extract_strided_slice %373 {offsets = [2, 0, 0], sizes = [1, 16, 64], strides = [1, 1, 1]} : vector<8x16x64xf32> to vector<1x16x64xf32>
    %406 = vector.shape_cast %405 : vector<1x16x64xf32> to vector<16x64xf32>
    %407 = arith.mulf %406, %397 : vector<16x64xf32>
    %408 = vector.extract_strided_slice %378 {offsets = [2, 0, 0], sizes = [1, 16, 64], strides = [1, 1, 1]} : vector<8x16x64xf32> to vector<1x16x64xf32>
    %409 = vector.shape_cast %408 : vector<1x16x64xf32> to vector<16x64xf32>
    %410 = arith.addf %407, %409 : vector<16x64xf32>
    %411 = vector.extract_strided_slice %367 {offsets = [2, 0], sizes = [1, 16], strides = [1, 1]} : vector<8x16xf32> to vector<1x16xf32>
    %412 = vector.shape_cast %411 : vector<1x16xf32> to vector<16xf32>
    %413 = vector.shape_cast %412 : vector<16xf32> to vector<16x1xf32>
    %414 = vector.broadcast %413 : vector<16x1xf32> to vector<16x64xf32>
    %415 = arith.mulf %410, %414 : vector<16x64xf32>
    %cst_89 = arith.constant dense<0.000000e+00> : vector<64xf32>
    %416 = vector.multi_reduction <add>, %415, %cst_89 [0] : vector<16x64xf32> to vector<64xf32>
    %417 = vector.shape_cast %416 : vector<64xf32> to vector<1x64xf32>
    %418 = vector.extract_strided_slice %373 {offsets = [3, 0, 0], sizes = [1, 16, 64], strides = [1, 1, 1]} : vector<8x16x64xf32> to vector<1x16x64xf32>
    %419 = vector.shape_cast %418 : vector<1x16x64xf32> to vector<16x64xf32>
    %420 = arith.mulf %419, %410 : vector<16x64xf32>
    %421 = vector.extract_strided_slice %378 {offsets = [3, 0, 0], sizes = [1, 16, 64], strides = [1, 1, 1]} : vector<8x16x64xf32> to vector<1x16x64xf32>
    %422 = vector.shape_cast %421 : vector<1x16x64xf32> to vector<16x64xf32>
    %423 = arith.addf %420, %422 : vector<16x64xf32>
    %424 = vector.extract_strided_slice %367 {offsets = [3, 0], sizes = [1, 16], strides = [1, 1]} : vector<8x16xf32> to vector<1x16xf32>
    %425 = vector.shape_cast %424 : vector<1x16xf32> to vector<16xf32>
    %426 = vector.shape_cast %425 : vector<16xf32> to vector<16x1xf32>
    %427 = vector.broadcast %426 : vector<16x1xf32> to vector<16x64xf32>
    %428 = arith.mulf %423, %427 : vector<16x64xf32>
    %cst_90 = arith.constant dense<0.000000e+00> : vector<64xf32>
    %429 = vector.multi_reduction <add>, %428, %cst_90 [0] : vector<16x64xf32> to vector<64xf32>
    %430 = vector.shape_cast %429 : vector<64xf32> to vector<1x64xf32>
    %431 = vector.extract_strided_slice %373 {offsets = [4, 0, 0], sizes = [1, 16, 64], strides = [1, 1, 1]} : vector<8x16x64xf32> to vector<1x16x64xf32>
    %432 = vector.shape_cast %431 : vector<1x16x64xf32> to vector<16x64xf32>
    %433 = arith.mulf %432, %423 : vector<16x64xf32>
    %434 = vector.extract_strided_slice %378 {offsets = [4, 0, 0], sizes = [1, 16, 64], strides = [1, 1, 1]} : vector<8x16x64xf32> to vector<1x16x64xf32>
    %435 = vector.shape_cast %434 : vector<1x16x64xf32> to vector<16x64xf32>
    %436 = arith.addf %433, %435 : vector<16x64xf32>
    %437 = vector.extract_strided_slice %367 {offsets = [4, 0], sizes = [1, 16], strides = [1, 1]} : vector<8x16xf32> to vector<1x16xf32>
    %438 = vector.shape_cast %437 : vector<1x16xf32> to vector<16xf32>
    %439 = vector.shape_cast %438 : vector<16xf32> to vector<16x1xf32>
    %440 = vector.broadcast %439 : vector<16x1xf32> to vector<16x64xf32>
    %441 = arith.mulf %436, %440 : vector<16x64xf32>
    %cst_91 = arith.constant dense<0.000000e+00> : vector<64xf32>
    %442 = vector.multi_reduction <add>, %441, %cst_91 [0] : vector<16x64xf32> to vector<64xf32>
    %443 = vector.shape_cast %442 : vector<64xf32> to vector<1x64xf32>
    %444 = vector.extract_strided_slice %373 {offsets = [5, 0, 0], sizes = [1, 16, 64], strides = [1, 1, 1]} : vector<8x16x64xf32> to vector<1x16x64xf32>
    %445 = vector.shape_cast %444 : vector<1x16x64xf32> to vector<16x64xf32>
    %446 = arith.mulf %445, %436 : vector<16x64xf32>
    %447 = vector.extract_strided_slice %378 {offsets = [5, 0, 0], sizes = [1, 16, 64], strides = [1, 1, 1]} : vector<8x16x64xf32> to vector<1x16x64xf32>
    %448 = vector.shape_cast %447 : vector<1x16x64xf32> to vector<16x64xf32>
    %449 = arith.addf %446, %448 : vector<16x64xf32>
    %450 = vector.extract_strided_slice %367 {offsets = [5, 0], sizes = [1, 16], strides = [1, 1]} : vector<8x16xf32> to vector<1x16xf32>
    %451 = vector.shape_cast %450 : vector<1x16xf32> to vector<16xf32>
    %452 = vector.shape_cast %451 : vector<16xf32> to vector<16x1xf32>
    %453 = vector.broadcast %452 : vector<16x1xf32> to vector<16x64xf32>
    %454 = arith.mulf %449, %453 : vector<16x64xf32>
    %cst_92 = arith.constant dense<0.000000e+00> : vector<64xf32>
    %455 = vector.multi_reduction <add>, %454, %cst_92 [0] : vector<16x64xf32> to vector<64xf32>
    %456 = vector.shape_cast %455 : vector<64xf32> to vector<1x64xf32>
    %457 = vector.extract_strided_slice %373 {offsets = [6, 0, 0], sizes = [1, 16, 64], strides = [1, 1, 1]} : vector<8x16x64xf32> to vector<1x16x64xf32>
    %458 = vector.shape_cast %457 : vector<1x16x64xf32> to vector<16x64xf32>
    %459 = arith.mulf %458, %449 : vector<16x64xf32>
    %460 = vector.extract_strided_slice %378 {offsets = [6, 0, 0], sizes = [1, 16, 64], strides = [1, 1, 1]} : vector<8x16x64xf32> to vector<1x16x64xf32>
    %461 = vector.shape_cast %460 : vector<1x16x64xf32> to vector<16x64xf32>
    %462 = arith.addf %459, %461 : vector<16x64xf32>
    %463 = vector.extract_strided_slice %367 {offsets = [6, 0], sizes = [1, 16], strides = [1, 1]} : vector<8x16xf32> to vector<1x16xf32>
    %464 = vector.shape_cast %463 : vector<1x16xf32> to vector<16xf32>
    %465 = vector.shape_cast %464 : vector<16xf32> to vector<16x1xf32>
    %466 = vector.broadcast %465 : vector<16x1xf32> to vector<16x64xf32>
    %467 = arith.mulf %462, %466 : vector<16x64xf32>
    %cst_93 = arith.constant dense<0.000000e+00> : vector<64xf32>
    %468 = vector.multi_reduction <add>, %467, %cst_93 [0] : vector<16x64xf32> to vector<64xf32>
    %469 = vector.shape_cast %468 : vector<64xf32> to vector<1x64xf32>
    %470 = vector.extract_strided_slice %373 {offsets = [7, 0, 0], sizes = [1, 16, 64], strides = [1, 1, 1]} : vector<8x16x64xf32> to vector<1x16x64xf32>
    %471 = vector.shape_cast %470 : vector<1x16x64xf32> to vector<16x64xf32>
    %472 = arith.mulf %471, %462 : vector<16x64xf32>
    %473 = vector.extract_strided_slice %378 {offsets = [7, 0, 0], sizes = [1, 16, 64], strides = [1, 1, 1]} : vector<8x16x64xf32> to vector<1x16x64xf32>
    %474 = vector.shape_cast %473 : vector<1x16x64xf32> to vector<16x64xf32>
    %475 = arith.addf %472, %474 : vector<16x64xf32>
    %476 = vector.extract_strided_slice %367 {offsets = [7, 0], sizes = [1, 16], strides = [1, 1]} : vector<8x16xf32> to vector<1x16xf32>
    %477 = vector.shape_cast %476 : vector<1x16xf32> to vector<16xf32>
    %478 = vector.shape_cast %477 : vector<16xf32> to vector<16x1xf32>
    %479 = vector.broadcast %478 : vector<16x1xf32> to vector<16x64xf32>
    %480 = arith.mulf %475, %479 : vector<16x64xf32>
    %cst_94 = arith.constant dense<0.000000e+00> : vector<64xf32>
    %481 = vector.multi_reduction <add>, %480, %cst_94 [0] : vector<16x64xf32> to vector<64xf32>
    %482 = vector.shape_cast %481 : vector<64xf32> to vector<1x64xf32>
    %483 = tpu.concatenate %391, %404, %417, %430, %443, %456, %469, %482 in 0 : vector<1x64xf32>, vector<1x64xf32>, vector<1x64xf32>, vector<1x64xf32>, vector<1x64xf32>, vector<1x64xf32>, vector<1x64xf32>, vector<1x64xf32> -> vector<8x64xf32>
    %484 = arith.index_cast %359 : i32 to index
    %c0_95 = arith.constant 0 : index
    %485 = vector.load %arg23[%484, %c0_95] : memref<32x64xf32, #tpu.memory_space<vmem>>, vector<8x64xf32>
    tpu.vector_store %arg23[%484, %c0_95], %483 {strides = array<i32>} : memref<32x64xf32, #tpu.memory_space<vmem>>, vector<8x64xf32>,
    %c3_i32 = arith.constant 3 : i32
    %c8_i32_96 = arith.constant 8 : i32
    %486 = arith.muli %c3_i32, %c8_i32_96 : i32
    %487 = tpu.assume_multiple %486, 8 : i32
    %488 = arith.index_cast %487 : i32 to index
    %c0_97 = arith.constant 0 : index
    %489 = vector.load %arg19[%488, %c0_97] : memref<32x64xf32, #tpu.memory_space<vmem>>, vector<8x64xf32>
    %490 = arith.index_cast %487 : i32 to index
    %c0_98 = arith.constant 0 : index
    %491 = vector.load %arg20[%490, %c0_98] : memref<32x64xf32, #tpu.memory_space<vmem>>, vector<8x64xf32>
    %492 = arith.index_cast %487 : i32 to index
    %c0_99 = arith.constant 0 : index
    %493 = vector.load %arg21[%492, %c0_99] : memref<32x16xf32, #tpu.memory_space<vmem>>, vector<8x16xf32>
    %494 = arith.index_cast %487 : i32 to index
    %c0_100 = arith.constant 0 : index
    %495 = vector.load %arg22[%494, %c0_100] : memref<32x16xf32, #tpu.memory_space<vmem>>, vector<8x16xf32>
    %496 = vector.shape_cast %489 : vector<8x64xf32> to vector<8x1x64xf32>
    %497 = vector.shape_cast %100 : vector<16x64xf32> to vector<1x16x64xf32>
    %498 = vector.broadcast %496 : vector<8x1x64xf32> to vector<8x16x64xf32>
    %499 = vector.broadcast %497 : vector<1x16x64xf32> to vector<8x16x64xf32>
    %500 = arith.mulf %498, %499 : vector<8x16x64xf32>
    %501 = math.exp %500 : vector<8x16x64xf32>
    %502 = vector.shape_cast %491 : vector<8x64xf32> to vector<8x1x64xf32>
    %503 = vector.shape_cast %493 : vector<8x16xf32> to vector<8x16x1xf32>
    %504 = vector.broadcast %502 : vector<8x1x64xf32> to vector<8x16x64xf32>
    %505 = vector.broadcast %503 : vector<8x16x1xf32> to vector<8x16x64xf32>
    %506 = arith.mulf %504, %505 : vector<8x16x64xf32>
    %507 = vector.extract_strided_slice %501 {offsets = [0, 0, 0], sizes = [1, 16, 64], strides = [1, 1, 1]} : vector<8x16x64xf32> to vector<1x16x64xf32>
    %508 = vector.shape_cast %507 : vector<1x16x64xf32> to vector<16x64xf32>
    %509 = arith.mulf %508, %475 : vector<16x64xf32>
    %510 = vector.extract_strided_slice %506 {offsets = [0, 0, 0], sizes = [1, 16, 64], strides = [1, 1, 1]} : vector<8x16x64xf32> to vector<1x16x64xf32>
    %511 = vector.shape_cast %510 : vector<1x16x64xf32> to vector<16x64xf32>
    %512 = arith.addf %509, %511 : vector<16x64xf32>
    %513 = vector.extract_strided_slice %495 {offsets = [0, 0], sizes = [1, 16], strides = [1, 1]} : vector<8x16xf32> to vector<1x16xf32>
    %514 = vector.shape_cast %513 : vector<1x16xf32> to vector<16xf32>
    %515 = vector.shape_cast %514 : vector<16xf32> to vector<16x1xf32>
    %516 = vector.broadcast %515 : vector<16x1xf32> to vector<16x64xf32>
    %517 = arith.mulf %512, %516 : vector<16x64xf32>
    %cst_101 = arith.constant dense<0.000000e+00> : vector<64xf32>
    %518 = vector.multi_reduction <add>, %517, %cst_101 [0] : vector<16x64xf32> to vector<64xf32>
    %519 = vector.shape_cast %518 : vector<64xf32> to vector<1x64xf32>
    %520 = vector.extract_strided_slice %501 {offsets = [1, 0, 0], sizes = [1, 16, 64], strides = [1, 1, 1]} : vector<8x16x64xf32> to vector<1x16x64xf32>
    %521 = vector.shape_cast %520 : vector<1x16x64xf32> to vector<16x64xf32>
    %522 = arith.mulf %521, %512 : vector<16x64xf32>
    %523 = vector.extract_strided_slice %506 {offsets = [1, 0, 0], sizes = [1, 16, 64], strides = [1, 1, 1]} : vector<8x16x64xf32> to vector<1x16x64xf32>
    %524 = vector.shape_cast %523 : vector<1x16x64xf32> to vector<16x64xf32>
    %525 = arith.addf %522, %524 : vector<16x64xf32>
    %526 = vector.extract_strided_slice %495 {offsets = [1, 0], sizes = [1, 16], strides = [1, 1]} : vector<8x16xf32> to vector<1x16xf32>
    %527 = vector.shape_cast %526 : vector<1x16xf32> to vector<16xf32>
    %528 = vector.shape_cast %527 : vector<16xf32> to vector<16x1xf32>
    %529 = vector.broadcast %528 : vector<16x1xf32> to vector<16x64xf32>
    %530 = arith.mulf %525, %529 : vector<16x64xf32>
    %cst_102 = arith.constant dense<0.000000e+00> : vector<64xf32>
    %531 = vector.multi_reduction <add>, %530, %cst_102 [0] : vector<16x64xf32> to vector<64xf32>
    %532 = vector.shape_cast %531 : vector<64xf32> to vector<1x64xf32>
    %533 = vector.extract_strided_slice %501 {offsets = [2, 0, 0], sizes = [1, 16, 64], strides = [1, 1, 1]} : vector<8x16x64xf32> to vector<1x16x64xf32>
    %534 = vector.shape_cast %533 : vector<1x16x64xf32> to vector<16x64xf32>
    %535 = arith.mulf %534, %525 : vector<16x64xf32>
    %536 = vector.extract_strided_slice %506 {offsets = [2, 0, 0], sizes = [1, 16, 64], strides = [1, 1, 1]} : vector<8x16x64xf32> to vector<1x16x64xf32>
    %537 = vector.shape_cast %536 : vector<1x16x64xf32> to vector<16x64xf32>
    %538 = arith.addf %535, %537 : vector<16x64xf32>
    %539 = vector.extract_strided_slice %495 {offsets = [2, 0], sizes = [1, 16], strides = [1, 1]} : vector<8x16xf32> to vector<1x16xf32>
    %540 = vector.shape_cast %539 : vector<1x16xf32> to vector<16xf32>
    %541 = vector.shape_cast %540 : vector<16xf32> to vector<16x1xf32>
    %542 = vector.broadcast %541 : vector<16x1xf32> to vector<16x64xf32>
    %543 = arith.mulf %538, %542 : vector<16x64xf32>
    %cst_103 = arith.constant dense<0.000000e+00> : vector<64xf32>
    %544 = vector.multi_reduction <add>, %543, %cst_103 [0] : vector<16x64xf32> to vector<64xf32>
    %545 = vector.shape_cast %544 : vector<64xf32> to vector<1x64xf32>
    %546 = vector.extract_strided_slice %501 {offsets = [3, 0, 0], sizes = [1, 16, 64], strides = [1, 1, 1]} : vector<8x16x64xf32> to vector<1x16x64xf32>
    %547 = vector.shape_cast %546 : vector<1x16x64xf32> to vector<16x64xf32>
    %548 = arith.mulf %547, %538 : vector<16x64xf32>
    %549 = vector.extract_strided_slice %506 {offsets = [3, 0, 0], sizes = [1, 16, 64], strides = [1, 1, 1]} : vector<8x16x64xf32> to vector<1x16x64xf32>
    %550 = vector.shape_cast %549 : vector<1x16x64xf32> to vector<16x64xf32>
    %551 = arith.addf %548, %550 : vector<16x64xf32>
    %552 = vector.extract_strided_slice %495 {offsets = [3, 0], sizes = [1, 16], strides = [1, 1]} : vector<8x16xf32> to vector<1x16xf32>
    %553 = vector.shape_cast %552 : vector<1x16xf32> to vector<16xf32>
    %554 = vector.shape_cast %553 : vector<16xf32> to vector<16x1xf32>
    %555 = vector.broadcast %554 : vector<16x1xf32> to vector<16x64xf32>
    %556 = arith.mulf %551, %555 : vector<16x64xf32>
    %cst_104 = arith.constant dense<0.000000e+00> : vector<64xf32>
    %557 = vector.multi_reduction <add>, %556, %cst_104 [0] : vector<16x64xf32> to vector<64xf32>
    %558 = vector.shape_cast %557 : vector<64xf32> to vector<1x64xf32>
    %559 = vector.extract_strided_slice %501 {offsets = [4, 0, 0], sizes = [1, 16, 64], strides = [1, 1, 1]} : vector<8x16x64xf32> to vector<1x16x64xf32>
    %560 = vector.shape_cast %559 : vector<1x16x64xf32> to vector<16x64xf32>
    %561 = arith.mulf %560, %551 : vector<16x64xf32>
    %562 = vector.extract_strided_slice %506 {offsets = [4, 0, 0], sizes = [1, 16, 64], strides = [1, 1, 1]} : vector<8x16x64xf32> to vector<1x16x64xf32>
    %563 = vector.shape_cast %562 : vector<1x16x64xf32> to vector<16x64xf32>
    %564 = arith.addf %561, %563 : vector<16x64xf32>
    %565 = vector.extract_strided_slice %495 {offsets = [4, 0], sizes = [1, 16], strides = [1, 1]} : vector<8x16xf32> to vector<1x16xf32>
    %566 = vector.shape_cast %565 : vector<1x16xf32> to vector<16xf32>
    %567 = vector.shape_cast %566 : vector<16xf32> to vector<16x1xf32>
    %568 = vector.broadcast %567 : vector<16x1xf32> to vector<16x64xf32>
    %569 = arith.mulf %564, %568 : vector<16x64xf32>
    %cst_105 = arith.constant dense<0.000000e+00> : vector<64xf32>
    %570 = vector.multi_reduction <add>, %569, %cst_105 [0] : vector<16x64xf32> to vector<64xf32>
    %571 = vector.shape_cast %570 : vector<64xf32> to vector<1x64xf32>
    %572 = vector.extract_strided_slice %501 {offsets = [5, 0, 0], sizes = [1, 16, 64], strides = [1, 1, 1]} : vector<8x16x64xf32> to vector<1x16x64xf32>
    %573 = vector.shape_cast %572 : vector<1x16x64xf32> to vector<16x64xf32>
    %574 = arith.mulf %573, %564 : vector<16x64xf32>
    %575 = vector.extract_strided_slice %506 {offsets = [5, 0, 0], sizes = [1, 16, 64], strides = [1, 1, 1]} : vector<8x16x64xf32> to vector<1x16x64xf32>
    %576 = vector.shape_cast %575 : vector<1x16x64xf32> to vector<16x64xf32>
    %577 = arith.addf %574, %576 : vector<16x64xf32>
    %578 = vector.extract_strided_slice %495 {offsets = [5, 0], sizes = [1, 16], strides = [1, 1]} : vector<8x16xf32> to vector<1x16xf32>
    %579 = vector.shape_cast %578 : vector<1x16xf32> to vector<16xf32>
    %580 = vector.shape_cast %579 : vector<16xf32> to vector<16x1xf32>
    %581 = vector.broadcast %580 : vector<16x1xf32> to vector<16x64xf32>
    %582 = arith.mulf %577, %581 : vector<16x64xf32>
    %cst_106 = arith.constant dense<0.000000e+00> : vector<64xf32>
    %583 = vector.multi_reduction <add>, %582, %cst_106 [0] : vector<16x64xf32> to vector<64xf32>
    %584 = vector.shape_cast %583 : vector<64xf32> to vector<1x64xf32>
    %585 = vector.extract_strided_slice %501 {offsets = [6, 0, 0], sizes = [1, 16, 64], strides = [1, 1, 1]} : vector<8x16x64xf32> to vector<1x16x64xf32>
    %586 = vector.shape_cast %585 : vector<1x16x64xf32> to vector<16x64xf32>
    %587 = arith.mulf %586, %577 : vector<16x64xf32>
    %588 = vector.extract_strided_slice %506 {offsets = [6, 0, 0], sizes = [1, 16, 64], strides = [1, 1, 1]} : vector<8x16x64xf32> to vector<1x16x64xf32>
    %589 = vector.shape_cast %588 : vector<1x16x64xf32> to vector<16x64xf32>
    %590 = arith.addf %587, %589 : vector<16x64xf32>
    %591 = vector.extract_strided_slice %495 {offsets = [6, 0], sizes = [1, 16], strides = [1, 1]} : vector<8x16xf32> to vector<1x16xf32>
    %592 = vector.shape_cast %591 : vector<1x16xf32> to vector<16xf32>
    %593 = vector.shape_cast %592 : vector<16xf32> to vector<16x1xf32>
    %594 = vector.broadcast %593 : vector<16x1xf32> to vector<16x64xf32>
    %595 = arith.mulf %590, %594 : vector<16x64xf32>
    %cst_107 = arith.constant dense<0.000000e+00> : vector<64xf32>
    %596 = vector.multi_reduction <add>, %595, %cst_107 [0] : vector<16x64xf32> to vector<64xf32>
    %597 = vector.shape_cast %596 : vector<64xf32> to vector<1x64xf32>
    %598 = vector.extract_strided_slice %501 {offsets = [7, 0, 0], sizes = [1, 16, 64], strides = [1, 1, 1]} : vector<8x16x64xf32> to vector<1x16x64xf32>
    %599 = vector.shape_cast %598 : vector<1x16x64xf32> to vector<16x64xf32>
    %600 = arith.mulf %599, %590 : vector<16x64xf32>
    %601 = vector.extract_strided_slice %506 {offsets = [7, 0, 0], sizes = [1, 16, 64], strides = [1, 1, 1]} : vector<8x16x64xf32> to vector<1x16x64xf32>
    %602 = vector.shape_cast %601 : vector<1x16x64xf32> to vector<16x64xf32>
    %603 = arith.addf %600, %602 : vector<16x64xf32>
    %604 = vector.extract_strided_slice %495 {offsets = [7, 0], sizes = [1, 16], strides = [1, 1]} : vector<8x16xf32> to vector<1x16xf32>
    %605 = vector.shape_cast %604 : vector<1x16xf32> to vector<16xf32>
    %606 = vector.shape_cast %605 : vector<16xf32> to vector<16x1xf32>
    %607 = vector.broadcast %606 : vector<16x1xf32> to vector<16x64xf32>
    %608 = arith.mulf %603, %607 : vector<16x64xf32>
    %cst_108 = arith.constant dense<0.000000e+00> : vector<64xf32>
    %609 = vector.multi_reduction <add>, %608, %cst_108 [0] : vector<16x64xf32> to vector<64xf32>
    %610 = vector.shape_cast %609 : vector<64xf32> to vector<1x64xf32>
    %611 = tpu.concatenate %519, %532, %545, %558, %571, %584, %597, %610 in 0 : vector<1x64xf32>, vector<1x64xf32>, vector<1x64xf32>, vector<1x64xf32>, vector<1x64xf32>, vector<1x64xf32>, vector<1x64xf32>, vector<1x64xf32> -> vector<8x64xf32>
    %612 = arith.index_cast %487 : i32 to index
    %c0_109 = arith.constant 0 : index
    %613 = vector.load %arg23[%612, %c0_109] : memref<32x64xf32, #tpu.memory_space<vmem>>, vector<8x64xf32>
    tpu.vector_store %arg23[%612, %c0_109], %611 {strides = array<i32>} : memref<32x64xf32, #tpu.memory_space<vmem>>, vector<8x64xf32>,
    %c4_i32 = arith.constant 4 : i32
    %c0_110 = arith.constant 0 : index
    %c0_111 = arith.constant 0 : index
    %614 = vector.load %arg17[%c0_110, %c0_111] : memref<16x64xf32, #tpu.memory_space<vmem>>, vector<16x64xf32>
    tpu.vector_store %arg17[%c0_110, %c0_111], %603 {strides = array<i32>} : memref<16x64xf32, #tpu.memory_space<vmem>>, vector<16x64xf32>,
    %c0_112 = arith.constant 0 : index
    %c0_113 = arith.constant 0 : index
    %615 = vector.load %arg23[%c0_112, %c0_113] : memref<32x64xf32, #tpu.memory_space<vmem>>, vector<32x64xf32>
    %c0_114 = arith.constant 0 : index
    %c0_115 = arith.constant 0 : index
    %616 = vector.load %arg13[%c0_114, %c0_115] : memref<1x64xf32, #tpu.memory_space<vmem>>, vector<1x64xf32>
    %617 = vector.broadcast %616 : vector<1x64xf32> to vector<32x64xf32>
    %618 = arith.mulf %71, %617 : vector<32x64xf32>
    %619 = arith.addf %615, %618 : vector<32x64xf32>
    %620 = arith.negf %38 : vector<32x64xf32>
    %621 = math.exp %620 : vector<32x64xf32>
    %cst_116 = arith.constant 1.000000e+00 : f32
    %622 = vector.broadcast %cst_116 : f32 to vector<32x64xf32>
    %623 = arith.addf %622, %621 : vector<32x64xf32>
    %624 = arith.divf %622, %623 : vector<32x64xf32>
    %625 = arith.mulf %38, %624 : vector<32x64xf32>
    %626 = arith.mulf %619, %625 : vector<32x64xf32>
    %c0_117 = arith.constant 0 : index
    %c0_118 = arith.constant 0 : index
    %627 = vector.load %arg14[%c0_117, %c0_118] : memref<64x32xf32, #tpu.memory_space<vmem>>, vector<64x32xf32>
    %cst_119 = arith.constant dense<0.000000e+00> : vector<32x32xf32>
    %628 = tpu.matmul %626, %627, %cst_119 {dimension_numbers = #tpu.dot_dimension_numbers<[1], [0], [0], [1], [0, 0, 1, 1], [], []>} : vector<32x64xf32>, vector<64x32xf32>, vector<32x32xf32> -> vector<32x32xf32>
    %c0_120 = arith.constant 0 : index
    %c0_121 = arith.constant 0 : index
    %c0_122 = arith.constant 0 : index
    %629 = vector.load %arg15[%c0_120, %c0_121, %c0_122] : memref<1x32x32xf32, #tpu.memory_space<vmem>>, vector<1x32x32xf32>
    %630 = vector.shape_cast %629 : vector<1x32x32xf32> to vector<32x32xf32>
    %631 = vector.shape_cast %628 : vector<32x32xf32> to vector<1x32x32xf32>
    tpu.vector_store %arg15[%c0_120, %c0_121, %c0_122], %631 {strides = array<i32>} : memref<1x32x32xf32, #tpu.memory_space<vmem>>, vector<1x32x32xf32>,
    return
  }
  func.func @transform_0(%arg0: i32, %arg1: i32) -> (i32, i32, i32) {
    %c0_i32 = arith.constant 0 : i32
    %c0_i32_0 = arith.constant 0 : i32
    return %arg0, %arg1, %c0_i32 : i32, i32, i32
  }
  func.func @transform_1(%arg0: i32, %arg1: i32) -> (i32, i32, i32) {
    %c0_i32 = arith.constant 0 : i32
    %c0_i32_0 = arith.constant 0 : i32
    return %arg0, %arg1, %c0_i32 : i32, i32, i32
  }
  func.func @transform_2(%arg0: i32, %arg1: i32) -> (i32, i32) {
    %c0_i32 = arith.constant 0 : i32
    %c0_i32_0 = arith.constant 0 : i32
    %c0_i32_1 = arith.constant 0 : i32
    return %c0_i32, %c0_i32_0 : i32, i32
  }
  func.func @transform_3(%arg0: i32, %arg1: i32) -> (i32, i32) {
    %c0_i32 = arith.constant 0 : i32
    %c0_i32_0 = arith.constant 0 : i32
    %c0_i32_1 = arith.constant 0 : i32
    return %c0_i32, %c0_i32_0 : i32, i32
  }
  func.func @transform_4(%arg0: i32, %arg1: i32) -> (i32, i32) {
    %c0_i32 = arith.constant 0 : i32
    %c0_i32_0 = arith.constant 0 : i32
    %c0_i32_1 = arith.constant 0 : i32
    return %c0_i32, %c0_i32_0 : i32, i32
  }
  func.func @transform_5(%arg0: i32, %arg1: i32) -> (i32, i32) {
    %c0_i32 = arith.constant 0 : i32
    %c0_i32_0 = arith.constant 0 : i32
    %c0_i32_1 = arith.constant 0 : i32
    return %c0_i32, %c0_i32_0 : i32, i32
  }
  func.func @transform_6(%arg0: i32, %arg1: i32) -> (i32, i32) {
    %c0_i32 = arith.constant 0 : i32
    %c0_i32_0 = arith.constant 0 : i32
    %c0_i32_1 = arith.constant 0 : i32
    return %c0_i32, %c0_i32_0 : i32, i32
  }
  func.func @transform_7(%arg0: i32, %arg1: i32) -> (i32, i32) {
    %c0_i32 = arith.constant 0 : i32
    %c0_i32_0 = arith.constant 0 : i32
    %c0_i32_1 = arith.constant 0 : i32
    return %c0_i32, %c0_i32_0 : i32, i32
  }
  func.func @transform_8(%arg0: i32, %arg1: i32) -> (i32, i32) {
    %c0_i32 = arith.constant 0 : i32
    %c0_i32_0 = arith.constant 0 : i32
    %c0_i32_1 = arith.constant 0 : i32
    return %c0_i32, %c0_i32_0 : i32, i32
  }
  func.func @transform_9(%arg0: i32, %arg1: i32) -> (i32, i32) {
    %c0_i32 = arith.constant 0 : i32
    %c0_i32_0 = arith.constant 0 : i32
    %c0_i32_1 = arith.constant 0 : i32
    return %c0_i32, %c0_i32_0 : i32, i32
  }
  func.func @transform_10(%arg0: i32, %arg1: i32) -> (i32, i32) {
    %c0_i32 = arith.constant 0 : i32
    %c0_i32_0 = arith.constant 0 : i32
    %c0_i32_1 = arith.constant 0 : i32
    return %c0_i32, %c0_i32_0 : i32, i32
  }
  func.func @transform_11(%arg0: i32, %arg1: i32) -> (i32, i32) {
    %c0_i32 = arith.constant 0 : i32
    %c0_i32_0 = arith.constant 0 : i32
    %c0_i32_1 = arith.constant 0 : i32
    return %c0_i32, %c0_i32_0 : i32, i32
  }
  func.func @transform_12(%arg0: i32, %arg1: i32) -> (i32, i32) {
    %c0_i32 = arith.constant 0 : i32
    %c0_i32_0 = arith.constant 0 : i32
    %c0_i32_1 = arith.constant 0 : i32
    return %c0_i32, %c0_i32_0 : i32, i32
  }
  func.func @transform_13(%arg0: i32, %arg1: i32) -> (i32, i32, i32) {
    %c0_i32 = arith.constant 0 : i32
    %c0_i32_0 = arith.constant 0 : i32
    return %arg0, %arg1, %c0_i32 : i32, i32, i32
  }
  func.func @transform_14(%arg0: i32, %arg1: i32) -> (i32, i32, i32) {
    %c0_i32 = arith.constant 0 : i32
    %c0_i32_0 = arith.constant 0 : i32
    return %arg0, %arg1, %c0_i32 : i32, i32, i32
  }
}

</mosaic_0001>

<llo_original>
// kernel: tpu_custom_call.1
$region0: #{tpu_custom_call.1}
  #allocation0 [shape = 'u32[]', space=smem, size = 0x4, offset = 0x4, fixed_abs, tag = 'smem constant byte address 0x4 - core index']
  #allocation1 [shape = 'u32[144,128]{1,0:T(1,128)}', space=vmem, size = 0x12000, scoped, tag = 'internal scratch']
  #allocation2 [shape = 'f32[16,64]{1,0:T(8,128)}', space=vmem, size = 0x2000, scoped, tag = 'scratch operand']
  #allocation3 [shape = 'f32[8,64]{1,0:T(8,128)}', space=vmem, size = 0x1000, scoped, tag = 'scratch operand']
  #allocation4 [shape = 'f32[32,64]{1,0:T(8,128)}', space=vmem, size = 0x4000, scoped, tag = 'scratch operand']
  #allocation5 [shape = 'f32[32,64]{1,0:T(8,128)}', space=vmem, size = 0x4000, scoped, tag = 'scratch operand']
  #allocation6 [shape = 'f32[32,16]{1,0:T(8,128)}', space=vmem, size = 0x4000, scoped, tag = 'scratch operand']
  #allocation7 [shape = 'f32[32,16]{1,0:T(8,128)}', space=vmem, size = 0x4000, scoped, tag = 'scratch operand']
  #allocation8 [shape = 'f32[32,64]{1,0:T(8,128)}', space=vmem, size = 0x4000, scoped, tag = 'scratch operand']
  %s0 = inlined_call_operand.vmem [shape: f32[2,64,32], index: 0, kind: input, shape index: {}]
  %s1 = inlined_call_operand.vmem [shape: f32[2,64,32], index: 1, kind: input, shape index: {}]
  %s2 = inlined_call_operand.vmem [shape: f32[1,32], index: 2, kind: input, shape index: {}]
  %s3 = inlined_call_operand.vmem [shape: f32[1,32], index: 3, kind: input, shape index: {}]
  %s4 = inlined_call_operand.vmem [shape: f32[32,128], index: 4, kind: input, shape index: {}]
  %s5 = inlined_call_operand.vmem [shape: f32[4,64], index: 5, kind: input, shape index: {}]
  %s6 = inlined_call_operand.vmem [shape: f32[1,64], index: 6, kind: input, shape index: {}]
  %s7 = inlined_call_operand.vmem [shape: f32[64,64], index: 7, kind: input, shape index: {}]
  %s8 = inlined_call_operand.vmem [shape: f32[1,64], index: 8, kind: input, shape index: {}]
  %s9 = inlined_call_operand.vmem [shape: f32[64,32], index: 9, kind: input, shape index: {}]
  %s10 = inlined_call_operand.vmem [shape: f32[16,64], index: 10, kind: input, shape index: {}]
  %s11 = inlined_call_operand.vmem [shape: f32[1,64], index: 11, kind: input, shape index: {}]
  %s12 = inlined_call_operand.vmem [shape: f32[64,32], index: 12, kind: input, shape index: {}]
  %s13 = inlined_call_operand.vmem [shape: f32[2,64,32], index: 13, kind: output, shape index: {0}]
  %s14 = inlined_call_operand.vmem [shape: f32[2,64,32], index: 14, kind: output, shape index: {1}]
  %15 = xla_tuple %s13, %s14
  %s16 = sld [smem:[#allocation0]]
  $region97: #{tpu_custom_call.1} parent=0
    _
  %s18 = ssub.s32 1, %s16
  %s19 = scalar_select 0, %s18, %s16
  loop: start=0, step=1, limit=6
  $region2: #{tpu_custom_call.1} parent=0 // loop_pre_header
    _
  $region3: #{tpu_custom_call.1} parent=0 // loop_header
    %s21 = sphi 0, %s25
    %p22 = scmp.ge.s32.totalorder %s21, 6
    %s28 = sphi 0, %s40
    %s29 = sphi 0, %s36
    %s30 = sphi 0, %s28
    %s31 = sphi 0, %s29
    %s32 = sphi 0, %s30
    %s33 = sphi 0, %s31
    %s45 = sphi 0, %s47
    %s48 = sphi 0, %s45
    %s49 = sphi 0, %s48
    %s65 = sphi 0, %s49
    %s73 = sphi 0, %s75
    %s76 = sphi 0, %s73
    %s77 = sphi 0, %s76
    %s93 = sphi 0, %s77
    %s97 = sphi 0, %s97
    %s99 = sphi 0, %s97
    %s100 = sphi 0, %s99
    %s114 = sphi 0, %s100
    %s118 = sphi 0, %s118
    %s120 = sphi 0, %s118
    %s121 = sphi 0, %s120
    %s135 = sphi 0, %s121
    %s139 = sphi 0, %s139
    %s141 = sphi 0, %s139
    %s142 = sphi 0, %s141
    %s156 = sphi 0, %s142
    %s160 = sphi 0, %s160
    %s162 = sphi 0, %s160
    %s163 = sphi 0, %s162
    %s177 = sphi 0, %s163
    %s181 = sphi 0, %s181
    %s183 = sphi 0, %s181
    %s184 = sphi 0, %s183
    %s198 = sphi 0, %s184
    %s202 = sphi 0, %s202
    %s204 = sphi 0, %s202
    %s205 = sphi 0, %s204
    %s219 = sphi 0, %s205
    %s223 = sphi 0, %s223
    %s225 = sphi 0, %s223
    %s226 = sphi 0, %s225
    %s240 = sphi 0, %s226
    %s244 = sphi 0, %s244
    %s246 = sphi 0, %s244
    %s247 = sphi 0, %s246
    %s261 = sphi 0, %s247
    %s265 = sphi 0, %s265
    %s267 = sphi 0, %s265
    %s268 = sphi 0, %s267
    %s282 = sphi 0, %s268
    %s286 = sphi 0, %s286
    %s288 = sphi 0, %s286
    %s289 = sphi 0, %s288
    %s303 = sphi 0, %s289
    %s307 = sphi 0, %s307
    %s309 = sphi 0, %s307
    %s310 = sphi 0, %s309
    %s324 = sphi 0, %s310
    %s332 = sphi 0, %s334
    %s335 = sphi 0, %s332
    %s336 = sphi 0, %s335
    %s352 = sphi 0, %s336
    %s360 = sphi 0, %s362
    %s363 = sphi 0, %s360
    %s364 = sphi 0, %s363
    %s380 = sphi 0, %s364
  $region4: #{tpu_custom_call.1} parent=0 // loop_header_branch
    %24 = sbr.rel (%p22) target = $region8
  $region5: #{tpu_custom_call.1} parent=0 // loop_body
    %s26 = ssub.s32 %s21, 1
    %s27 = ssub.s32 %s21, 2
    %s34 = sadd.s32 1, %s29
    %p35 = scmp.ge.s32.totalorder %s34, 2
    %s36 = scalar_select %p35, 0, %s34
    %s37 = sadd.s32 1, %s28
    %s38 = scalar_select %p35, %s37, %s28
    %p39 = scmp.ge.s32.totalorder %s38, 2
    %s40 = scalar_select %p39, 0, %s38
    %s41 = ssub.s32 %s28, %s40
    %s42 = ssub.s32 %s29, %s36
    %s43 = sor.u32 %s41, %s42
    %p44 = scmp.eq.s32.totalorder %s43, 0
    %s46 = sadd.s32 %s45, 1
    %s47 = scalar_select %p44, %s45, %s46
    %p50 = pneg %p44
    %p51 = scmp.eq.s32.totalorder %s21, 3
    %p52 = por %p50, %p51
    %p53 = scmp.ne.s32.totalorder %s45, %s48
    %p54 = scmp.eq.s32.totalorder %s21, 0
    %p55 = por %p53, %p54
    %p56 = scmp.ne.s32.totalorder %s45, %s48
    %p57 = scmp.eq.s32.totalorder %s26, 3
    %p58 = por %p56, %p57
    %p59 = scmp.ne.s32.totalorder %s48, %s49
    %p60 = scmp.eq.s32.totalorder %s26, 0
    %p61 = por %p59, %p60
    %p62 = scmp.ne.s32.totalorder %s48, %s49
    %p63 = scmp.eq.s32.totalorder %s27, 3
    %p64 = por %p62, %p63
    %p66 = scmp.ne.s32.totalorder %s49, %s65
    %p67 = scmp.eq.s32.totalorder %s27, 0
    %p68 = por %p66, %p67
    %s69 = ssub.s32 %s28, %s40
    %s70 = ssub.s32 %s29, %s36
    %s71 = sor.u32 %s69, %s70
    %p72 = scmp.eq.s32.totalorder %s71, 0
    %s74 = sadd.s32 %s73, 1
    %s75 = scalar_select %p72, %s73, %s74
    %p78 = pneg %p72
    %p79 = scmp.eq.s32.totalorder %s21, 3
    %p80 = por %p78, %p79
    %p81 = scmp.ne.s32.totalorder %s73, %s76
    %p82 = scmp.eq.s32.totalorder %s21, 0
    %p83 = por %p81, %p82
    %p84 = scmp.ne.s32.totalorder %s73, %s76
    %p85 = scmp.eq.s32.totalorder %s26, 3
    %p86 = por %p84, %p85
    %p87 = scmp.ne.s32.totalorder %s76, %s77
    %p88 = scmp.eq.s32.totalorder %s26, 0
    %p89 = por %p87, %p88
    %p90 = scmp.ne.s32.totalorder %s76, %s77
    %p91 = scmp.eq.s32.totalorder %s27, 3
    %p92 = por %p90, %p91
    %p94 = scmp.ne.s32.totalorder %s77, %s93
    %p95 = scmp.eq.s32.totalorder %s27, 0
    %p96 = por %p94, %p95
    %s98 = sadd.s32 %s97, 1
    %p101 = scmp.eq.s32.totalorder %s21, 3
    %p102 = scmp.ne.s32.totalorder %s97, %s99
    %p103 = scmp.eq.s32.totalorder %s21, 0
    %p104 = por %p102, %p103
    %p105 = scmp.ne.s32.totalorder %s97, %s99
    %p106 = scmp.eq.s32.totalorder %s26, 3
    %p107 = por %p105, %p106
    %p108 = scmp.ne.s32.totalorder %s99, %s100
    %p109 = scmp.eq.s32.totalorder %s26, 0
    %p110 = por %p108, %p109
    %p111 = scmp.ne.s32.totalorder %s99, %s100
    %p112 = scmp.eq.s32.totalorder %s27, 3
    %p113 = por %p111, %p112
    %p115 = scmp.ne.s32.totalorder %s100, %s114
    %p116 = scmp.eq.s32.totalorder %s27, 0
    %p117 = por %p115, %p116
    %s119 = sadd.s32 %s118, 1
    %p122 = scmp.eq.s32.totalorder %s21, 3
    %p123 = scmp.ne.s32.totalorder %s118, %s120
    %p124 = scmp.eq.s32.totalorder %s21, 0
    %p125 = por %p123, %p124
    %p126 = scmp.ne.s32.totalorder %s118, %s120
    %p127 = scmp.eq.s32.totalorder %s26, 3
    %p128 = por %p126, %p127
    %p129 = scmp.ne.s32.totalorder %s120, %s121
    %p130 = scmp.eq.s32.totalorder %s26, 0
    %p131 = por %p129, %p130
    %p132 = scmp.ne.s32.totalorder %s120, %s121
    %p133 = scmp.eq.s32.totalorder %s27, 3
    %p134 = por %p132, %p133
    %p136 = scmp.ne.s32.totalorder %s121, %s135
    %p137 = scmp.eq.s32.totalorder %s27, 0
    %p138 = por %p136, %p137
    %s140 = sadd.s32 %s139, 1
    %p143 = scmp.eq.s32.totalorder %s21, 3
    %p144 = scmp.ne.s32.totalorder %s139, %s141
    %p145 = scmp.eq.s32.totalorder %s21, 0
    %p146 = por %p144, %p145
    %p147 = scmp.ne.s32.totalorder %s139, %s141
    %p148 = scmp.eq.s32.totalorder %s26, 3
    %p149 = por %p147, %p148
    %p150 = scmp.ne.s32.totalorder %s141, %s142
    %p151 = scmp.eq.s32.totalorder %s26, 0
    %p152 = por %p150, %p151
    %p153 = scmp.ne.s32.totalorder %s141, %s142
    %p154 = scmp.eq.s32.totalorder %s27, 3
    %p155 = por %p153, %p154
    %p157 = scmp.ne.s32.totalorder %s142, %s156
    %p158 = scmp.eq.s32.totalorder %s27, 0
    %p159 = por %p157, %p158
    %s161 = sadd.s32 %s160, 1
    %p164 = scmp.eq.s32.totalorder %s21, 3
    %p165 = scmp.ne.s32.totalorder %s160, %s162
    %p166 = scmp.eq.s32.totalorder %s21, 0
    %p167 = por %p165, %p166
    %p168 = scmp.ne.s32.totalorder %s160, %s162
    %p169 = scmp.eq.s32.totalorder %s26, 3
    %p170 = por %p168, %p169
    %p171 = scmp.ne.s32.totalorder %s162, %s163
    %p172 = scmp.eq.s32.totalorder %s26, 0
    %p173 = por %p171, %p172
    %p174 = scmp.ne.s32.totalorder %s162, %s163
    %p175 = scmp.eq.s32.totalorder %s27, 3
    %p176 = por %p174, %p175
    %p178 = scmp.ne.s32.totalorder %s163, %s177
    %p179 = scmp.eq.s32.totalorder %s27, 0
    %p180 = por %p178, %p179
    %s182 = sadd.s32 %s181, 1
    %p185 = scmp.eq.s32.totalorder %s21, 3
    %p186 = scmp.ne.s32.totalorder %s181, %s183
    %p187 = scmp.eq.s32.totalorder %s21, 0
    %p188 = por %p186, %p187
    %p189 = scmp.ne.s32.totalorder %s181, %s183
    %p190 = scmp.eq.s32.totalorder %s26, 3
    %p191 = por %p189, %p190
    %p192 = scmp.ne.s32.totalorder %s183, %s184
    %p193 = scmp.eq.s32.totalorder %s26, 0
    %p194 = por %p192, %p193
    %p195 = scmp.ne.s32.totalorder %s183, %s184
    %p196 = scmp.eq.s32.totalorder %s27, 3
    %p197 = por %p195, %p196
    %p199 = scmp.ne.s32.totalorder %s184, %s198
    %p200 = scmp.eq.s32.totalorder %s27, 0
    %p201 = por %p199, %p200
    %s203 = sadd.s32 %s202, 1
    %p206 = scmp.eq.s32.totalorder %s21, 3
    %p207 = scmp.ne.s32.totalorder %s202, %s204
    %p208 = scmp.eq.s32.totalorder %s21, 0
    %p209 = por %p207, %p208
    %p210 = scmp.ne.s32.totalorder %s202, %s204
    %p211 = scmp.eq.s32.totalorder %s26, 3
    %p212 = por %p210, %p211
    %p213 = scmp.ne.s32.totalorder %s204, %s205
    %p214 = scmp.eq.s32.totalorder %s26, 0
    %p215 = por %p213, %p214
    %p216 = scmp.ne.s32.totalorder %s204, %s205
    %p217 = scmp.eq.s32.totalorder %s27, 3
    %p218 = por %p216, %p217
    %p220 = scmp.ne.s32.totalorder %s205, %s219
    %p221 = scmp.eq.s32.totalorder %s27, 0
    %p222 = por %p220, %p221
    %s224 = sadd.s32 %s223, 1
    %p227 = scmp.eq.s32.totalorder %s21, 3
    %p228 = scmp.ne.s32.totalorder %s223, %s225
    %p229 = scmp.eq.s32.totalorder %s21, 0
    %p230 = por %p228, %p229
    %p231 = scmp.ne.s32.totalorder %s223, %s225
    %p232 = scmp.eq.s32.totalorder %s26, 3
    %p233 = por %p231, %p232
    %p234 = scmp.ne.s32.totalorder %s225, %s226
    %p235 = scmp.eq.s32.totalorder %s26, 0
    %p236 = por %p234, %p235
    %p237 = scmp.ne.s32.totalorder %s225, %s226
    %p238 = scmp.eq.s32.totalorder %s27, 3
    %p239 = por %p237, %p238
    %p241 = scmp.ne.s32.totalorder %s226, %s240
    %p242 = scmp.eq.s32.totalorder %s27, 0
    %p243 = por %p241, %p242
    %s245 = sadd.s32 %s244, 1
    %p248 = scmp.eq.s32.totalorder %s21, 3
    %p249 = scmp.ne.s32.totalorder %s244, %s246
    %p250 = scmp.eq.s32.totalorder %s21, 0
    %p251 = por %p249, %p250
    %p252 = scmp.ne.s32.totalorder %s244, %s246
    %p253 = scmp.eq.s32.totalorder %s26, 3
    %p254 = por %p252, %p253
    %p255 = scmp.ne.s32.totalorder %s246, %s247
    %p256 = scmp.eq.s32.totalorder %s26, 0
    %p257 = por %p255, %p256
    %p258 = scmp.ne.s32.totalorder %s246, %s247
    %p259 = scmp.eq.s32.totalorder %s27, 3
    %p260 = por %p258, %p259
    %p262 = scmp.ne.s32.totalorder %s247, %s261
    %p263 = scmp.eq.s32.totalorder %s27, 0
    %p264 = por %p262, %p263
    %s266 = sadd.s32 %s265, 1
    %p269 = scmp.eq.s32.totalorder %s21, 3
    %p270 = scmp.ne.s32.totalorder %s265, %s267
    %p271 = scmp.eq.s32.totalorder %s21, 0
    %p272 = por %p270, %p271
    %p273 = scmp.ne.s32.totalorder %s265, %s267
    %p274 = scmp.eq.s32.totalorder %s26, 3
    %p275 = por %p273, %p274
    %p276 = scmp.ne.s32.totalorder %s267, %s268
    %p277 = scmp.eq.s32.totalorder %s26, 0
    %p278 = por %p276, %p277
    %p279 = scmp.ne.s32.totalorder %s267, %s268
    %p280 = scmp.eq.s32.totalorder %s27, 3
    %p281 = por %p279, %p280
    %p283 = scmp.ne.s32.totalorder %s268, %s282
    %p284 = scmp.eq.s32.totalorder %s27, 0
    %p285 = por %p283, %p284
    %s287 = sadd.s32 %s286, 1
    %p290 = scmp.eq.s32.totalorder %s21, 3
    %p291 = scmp.ne.s32.totalorder %s286, %s288
    %p292 = scmp.eq.s32.totalorder %s21, 0
    %p293 = por %p291, %p292
    %p294 = scmp.ne.s32.totalorder %s286, %s288
    %p295 = scmp.eq.s32.totalorder %s26, 3
    %p296 = por %p294, %p295
    %p297 = scmp.ne.s32.totalorder %s288, %s289
    %p298 = scmp.eq.s32.totalorder %s26, 0
    %p299 = por %p297, %p298
    %p300 = scmp.ne.s32.totalorder %s288, %s289
    %p301 = scmp.eq.s32.totalorder %s27, 3
    %p302 = por %p300, %p301
    %p304 = scmp.ne.s32.totalorder %s289, %s303
    %p305 = scmp.eq.s32.totalorder %s27, 0
    %p306 = por %p304, %p305
    %s308 = sadd.s32 %s307, 1
    %p311 = scmp.eq.s32.totalorder %s21, 3
    %p312 = scmp.ne.s32.totalorder %s307, %s309
    %p313 = scmp.eq.s32.totalorder %s21, 0
    %p314 = por %p312, %p313
    %p315 = scmp.ne.s32.totalorder %s307, %s309
    %p316 = scmp.eq.s32.totalorder %s26, 3
    %p317 = por %p315, %p316
    %p318 = scmp.ne.s32.totalorder %s309, %s310
    %p319 = scmp.eq.s32.totalorder %s26, 0
    %p320 = por %p318, %p319
    %p321 = scmp.ne.s32.totalorder %s309, %s310
    %p322 = scmp.eq.s32.totalorder %s27, 3
    %p323 = por %p321, %p322
    %p325 = scmp.ne.s32.totalorder %s310, %s324
    %p326 = scmp.eq.s32.totalorder %s27, 0
    %p327 = por %p325, %p326
    %s328 = ssub.s32 %s28, %s40
    %s329 = ssub.s32 %s29, %s36
    %s330 = sor.u32 %s328, %s329
    %p331 = scmp.eq.s32.totalorder %s330, 0
    %s333 = sadd.s32 %s332, 1
    %s334 = scalar_select %p331, %s332, %s333
    %p337 = pneg %p331
    %p338 = scmp.eq.s32.totalorder %s21, 3
    %p339 = por %p337, %p338
    %p340 = scmp.ne.s32.totalorder %s332, %s335
    %p341 = scmp.eq.s32.totalorder %s21, 0
    %p342 = por %p340, %p341
    %p343 = scmp.ne.s32.totalorder %s332, %s335
    %p344 = scmp.eq.s32.totalorder %s26, 3
    %p345 = por %p343, %p344
    %p346 = scmp.ne.s32.totalorder %s335, %s336
    %p347 = scmp.eq.s32.totalorder %s26, 0
    %p348 = por %p346, %p347
    %p349 = scmp.ne.s32.totalorder %s335, %s336
    %p350 = scmp.eq.s32.totalorder %s27, 3
    %p351 = por %p349, %p350
    %p353 = scmp.ne.s32.totalorder %s336, %s352
    %p354 = scmp.eq.s32.totalorder %s27, 0
    %p355 = por %p353, %p354
    %s356 = ssub.s32 %s28, %s40
    %s357 = ssub.s32 %s29, %s36
    %s358 = sor.u32 %s356, %s357
    %p359 = scmp.eq.s32.totalorder %s358, 0
    %s361 = sadd.s32 %s360, 1
    %s362 = scalar_select %p359, %s360, %s361
    %p365 = pneg %p359
    %p366 = scmp.eq.s32.totalorder %s21, 3
    %p367 = por %p365, %p366
    %p368 = scmp.ne.s32.totalorder %s360, %s363
    %p369 = scmp.eq.s32.totalorder %s21, 0
    %p370 = por %p368, %p369
    %p371 = scmp.ne.s32.totalorder %s360, %s363
    %p372 = scmp.eq.s32.totalorder %s26, 3
    %p373 = por %p371, %p372
    %p374 = scmp.ne.s32.totalorder %s363, %s364
    %p375 = scmp.eq.s32.totalorder %s26, 0
    %p376 = por %p374, %p375
    %p377 = scmp.ne.s32.totalorder %s363, %s364
    %p378 = scmp.eq.s32.totalorder %s27, 3
    %p379 = por %p377, %p378
    %p381 = scmp.ne.s32.totalorder %s364, %s380
    %p382 = scmp.eq.s32.totalorder %s27, 0
    %p383 = por %p381, %p382
    %p384 = scmp.le.s32.totalorder 1, %s21
    %p385 = scmp.lt.s32.totalorder %s21, 5
    %p386 = pnand %p384, %p385
    %p387 = pneg %p386
    // Predicated region
    $region9: #{tpu_custom_call.1} parent=5 // pred_check
      _
    $region10: #{tpu_custom_call.1} parent=5 // pred_check_branch
      %389 = sbr.rel (%p386) target = $region12
    $region11: #{tpu_custom_call.1} parent=5 // pred_region
      %s390 = ssub.s32 %s21, 1
      // Predicated region
      $region13: #{tpu_custom_call.1} parent=11 // pred_check
        %p391 = pneg %p110
      $region14: #{tpu_custom_call.1} parent=11 // pred_check_branch
        %393 = sbr.rel (%p391) target = $region16
      $region15: #{tpu_custom_call.1} parent=11 // pred_region
        _
      $region16: #{tpu_custom_call.1} parent=11 // pred_fallthru
        _
      // Predicated region
      $region17: #{tpu_custom_call.1} parent=11 // pred_check
        %p394 = pneg %p131
      $region18: #{tpu_custom_call.1} parent=11 // pred_check_branch
        %396 = sbr.rel (%p394) target = $region20
      $region19: #{tpu_custom_call.1} parent=11 // pred_region
        _
      $region20: #{tpu_custom_call.1} parent=11 // pred_fallthru
        _
      // Predicated region
      $region21: #{tpu_custom_call.1} parent=11 // pred_check
        %p397 = pneg %p152
      $region22: #{tpu_custom_call.1} parent=11 // pred_check_branch
        %399 = sbr.rel (%p397) target = $region24
      $region23: #{tpu_custom_call.1} parent=11 // pred_region
        _
      $region24: #{tpu_custom_call.1} parent=11 // pred_fallthru
        _
      // Predicated region
      $region25: #{tpu_custom_call.1} parent=11 // pred_check
        %p400 = pneg %p173
      $region26: #{tpu_custom_call.1} parent=11 // pred_check_branch
        %402 = sbr.rel (%p400) target = $region28
      $region27: #{tpu_custom_call.1} parent=11 // pred_region
        _
      $region28: #{tpu_custom_call.1} parent=11 // pred_fallthru
        _
      // Predicated region
      $region29: #{tpu_custom_call.1} parent=11 // pred_check
        %p403 = pneg %p194
      $region30: #{tpu_custom_call.1} parent=11 // pred_check_branch
        %405 = sbr.rel (%p403) target = $region32
      $region31: #{tpu_custom_call.1} parent=11 // pred_region
        _
      $region32: #{tpu_custom_call.1} parent=11 // pred_fallthru
        _
      // Predicated region
      $region33: #{tpu_custom_call.1} parent=11 // pred_check
        %p406 = pneg %p215
      $region34: #{tpu_custom_call.1} parent=11 // pred_check_branch
        %408 = sbr.rel (%p406) target = $region36
      $region35: #{tpu_custom_call.1} parent=11 // pred_region
        _
      $region36: #{tpu_custom_call.1} parent=11 // pred_fallthru
        _
      // Predicated region
      $region37: #{tpu_custom_call.1} parent=11 // pred_check
        %p409 = pneg %p236
      $region38: #{tpu_custom_call.1} parent=11 // pred_check_branch
        %411 = sbr.rel (%p409) target = $region40
      $region39: #{tpu_custom_call.1} parent=11 // pred_region
        _
      $region40: #{tpu_custom_call.1} parent=11 // pred_fallthru
        _
      // Predicated region
      $region41: #{tpu_custom_call.1} parent=11 // pred_check
        %p412 = pneg %p257
      $region42: #{tpu_custom_call.1} parent=11 // pred_check_branch
        %414 = sbr.rel (%p412) target = $region44
      $region43: #{tpu_custom_call.1} parent=11 // pred_region
        _
      $region44: #{tpu_custom_call.1} parent=11 // pred_fallthru
        _
      // Predicated region
      $region45: #{tpu_custom_call.1} parent=11 // pred_check
        %p415 = pneg %p278
      $region46: #{tpu_custom_call.1} parent=11 // pred_check_branch
        %417 = sbr.rel (%p415) target = $region48
      $region47: #{tpu_custom_call.1} parent=11 // pred_region
        _
      $region48: #{tpu_custom_call.1} parent=11 // pred_fallthru
        _
      // Predicated region
      $region49: #{tpu_custom_call.1} parent=11 // pred_check
        %p418 = pneg %p299
      $region50: #{tpu_custom_call.1} parent=11 // pred_check_branch
        %420 = sbr.rel (%p418) target = $region52
      $region51: #{tpu_custom_call.1} parent=11 // pred_region
        _
      $region52: #{tpu_custom_call.1} parent=11 // pred_fallthru
        _
      // Predicated region
      $region53: #{tpu_custom_call.1} parent=11 // pred_check
        %p421 = pneg %p320
      $region54: #{tpu_custom_call.1} parent=11 // pred_check_branch
        %423 = sbr.rel (%p421) target = $region56
      $region55: #{tpu_custom_call.1} parent=11 // pred_region
        _
      $region56: #{tpu_custom_call.1} parent=11 // pred_fallthru
        _
    $region12: #{tpu_custom_call.1} parent=5 // pred_fallthru
      _
    %p424 = scmp.lt.s32.totalorder %s21, 4
    // Predicated region
    $region57: #{tpu_custom_call.1} parent=5 // pred_check
      %p425 = pneg %p424
    $region58: #{tpu_custom_call.1} parent=5 // pred_check_branch
      %427 = sbr.rel (%p425) target = $region60
    $region59: #{tpu_custom_call.1} parent=5 // pred_region
      // Predicated region
      $region61: #{tpu_custom_call.1} parent=59 // pred_check
        %p428 = pneg %p55
      $region62: #{tpu_custom_call.1} parent=59 // pred_check_branch
        %430 = sbr.rel (%p428) target = $region64
      $region63: #{tpu_custom_call.1} parent=59 // pred_region
        %s431 = smul.u32 4, %s29
        %p432 = scmp.lt.s32.totalorder %s28, 1
        %s433 = scalar_select %p432, %s28, 1
        %p434 = scmp.lt.s32.totalorder %s431, 7
        %s435 = scalar_select %p434, %s431, 7
        %s436 = smul.addr %s433, 8
        %s437 = sadd.s32 %s435, %s436
        %s438 = smul.addr %s437, 8
        %s439 = scalar_lea.vmem %s0, %s438
        %s440 = smul.u32 4, %s29
      $region64: #{tpu_custom_call.1} parent=59 // pred_fallthru
        _
      // Predicated region
      $region65: #{tpu_custom_call.1} parent=59 // pred_check
        %p441 = pneg %p83
      $region66: #{tpu_custom_call.1} parent=59 // pred_check_branch
        %443 = sbr.rel (%p441) target = $region68
      $region67: #{tpu_custom_call.1} parent=59 // pred_region
        %s444 = smul.u32 4, %s29
        %p445 = scmp.lt.s32.totalorder %s28, 1
        %s446 = scalar_select %p445, %s28, 1
        %p447 = scmp.lt.s32.totalorder %s444, 7
        %s448 = scalar_select %p447, %s444, 7
        %s449 = smul.addr %s446, 8
        %s450 = sadd.s32 %s448, %s449
        %s451 = smul.addr %s450, 8
        %s452 = scalar_lea.vmem %s1, %s451
        %s453 = smul.u32 4, %s29
      $region68: #{tpu_custom_call.1} parent=59 // pred_fallthru
        _
    $region60: #{tpu_custom_call.1} parent=5 // pred_fallthru
      _
    %p454 = scmp.le.s32.totalorder 1, %s21
    %p455 = scmp.lt.s32.totalorder %s21, 5
    %p456 = pnand %p454, %p455
    %p457 = pneg %p456
    // Predicated region
    $region69: #{tpu_custom_call.1} parent=5 // pred_check
      _
    $region70: #{tpu_custom_call.1} parent=5 // pred_check_branch
      %459 = sbr.rel (%p456) target = $region72
    $region71: #{tpu_custom_call.1} parent=5 // pred_region
      %s460 = ssub.s32 %s21, 1
      %s461 = smul.u32 4, %s31
      %p462 = scmp.lt.s32.totalorder %s30, 1
      %s463 = scalar_select %p462, %s30, 1
      %p464 = scmp.lt.s32.totalorder %s461, 7
      %s465 = scalar_select %p464, %s461, 7
      %s466 = smul.addr %s463, 8
      %s467 = sadd.s32 %s465, %s466
      %s468 = smul.addr %s467, 8
      %s469 = scalar_lea.vmem %s0, %s468
      %p470 = pneg %p61
      %p471 = pneg %p58
      %s472 = smul.u32 4, %s31
      %p473 = scmp.lt.s32.totalorder %s30, 1
      %s474 = scalar_select %p473, %s30, 1
      %p475 = scmp.lt.s32.totalorder %s472, 7
      %s476 = scalar_select %p475, %s472, 7
      %s477 = smul.addr %s474, 8
      %s478 = sadd.s32 %s476, %s477
      %s479 = smul.addr %s478, 8
      %s480 = scalar_lea.vmem %s1, %s479
      %p481 = pneg %p89
      %p482 = pneg %p86
      %p483 = pneg %p110
      %p484 = pneg %p107
      %p485 = pneg %p131
      %p486 = pneg %p128
      %p487 = pneg %p152
      %p488 = pneg %p149
      %p489 = pneg %p173
      %p490 = pneg %p170
      %p491 = pneg %p194
      %p492 = pneg %p191
      %p493 = pneg %p215
      %p494 = pneg %p212
      %p495 = pneg %p236
      %p496 = pneg %p233
      %p497 = pneg %p257
      %p498 = pneg %p254
      %p499 = pneg %p278
      %p500 = pneg %p275
      %p501 = pneg %p299
      %p502 = pneg %p296
      %p503 = pneg %p320
      %p504 = pneg %p317
      %p505 = pneg %p348
      %p506 = pneg %p345
      %s507 = smul.u32 4, %s31
      %p508 = scmp.lt.s32.totalorder %s30, 1
      %s509 = scalar_select %p508, %s30, 1
      %p510 = scmp.lt.s32.totalorder %s507, 7
      %s511 = scalar_select %p510, %s507, 7
      %s512 = smul.addr %s509, 8
      %s513 = sadd.s32 %s511, %s512
      %s514 = smul.addr %s513, 8
      %s515 = scalar_lea.vmem %s13, %s514
      %p516 = pneg %p376
      %p517 = pneg %p373
      %s518 = smul.u32 4, %s31
      %p519 = scmp.lt.s32.totalorder %s30, 1
      %s520 = scalar_select %p519, %s30, 1
      %p521 = scmp.lt.s32.totalorder %s518, 7
      %s522 = scalar_select %p521, %s518, 7
      %s523 = smul.addr %s520, 8
      %s524 = sadd.s32 %s522, %s523
      %s525 = smul.addr %s524, 8
      %s526 = scalar_lea.vmem %s14, %s525
      %s527 = smul.u32 4, %s31
      %p528 = scmp.lt.s32.totalorder %s30, 1
      %s529 = scalar_select %p528, %s30, 1
      %p530 = scmp.lt.s32.totalorder %s527, 7
      %s531 = scalar_select %p530, %s527, 7
      %s532 = smul.addr %s529, 8
      %s533 = sadd.s32 %s531, %s532
      %s534 = smul.addr %s533, 8
      %s535 = scalar_lea.vmem %s0, %s534
      %s536 = smul.u32 4, %s31
      %s537 = smul.u32 4, %s31
      %p538 = scmp.lt.s32.totalorder %s30, 1
      %s539 = scalar_select %p538, %s30, 1
      %p540 = scmp.lt.s32.totalorder %s537, 7
      %s541 = scalar_select %p540, %s537, 7
      %s542 = smul.addr %s539, 8
      %s543 = sadd.s32 %s541, %s542
      %s544 = smul.addr %s543, 8
      %s545 = scalar_lea.vmem %s1, %s544
      %s546 = smul.u32 4, %s31
      %s547 = smul.u32 4, %s31
      %p548 = scmp.lt.s32.totalorder %s30, 1
      %s549 = scalar_select %p548, %s30, 1
      %p550 = scmp.lt.s32.totalorder %s547, 7
      %s551 = scalar_select %p550, %s547, 7
      %s552 = smul.addr %s549, 8
      %s553 = sadd.s32 %s551, %s552
      %s554 = smul.addr %s553, 8
      %s555 = scalar_lea.vmem %s13, %s554
      %s556 = smul.u32 4, %s31
      %s557 = smul.u32 4, %s31
      %p558 = scmp.lt.s32.totalorder %s30, 1
      %s559 = scalar_select %p558, %s30, 1
      %p560 = scmp.lt.s32.totalorder %s557, 7
      %s561 = scalar_select %p560, %s557, 7
      %s562 = smul.addr %s559, 8
      %s563 = sadd.s32 %s561, %s562
      %s564 = smul.addr %s563, 8
      %s565 = scalar_lea.vmem %s14, %s564
      %s566 = smul.u32 4, %s31
      %p567 = scmp.eq.s32.totalorder %s31, 0
      // Predicated region
      $region73: #{tpu_custom_call.1} parent=71 // pred_check
        %p568 = pneg %p567
      $region74: #{tpu_custom_call.1} parent=71 // pred_check_branch
        %570 = sbr.rel (%p568) target = $region76
      $region75: #{tpu_custom_call.1} parent=71 // pred_region
        %vm571 = vcmask 523264
        %572 = vst.msk [vmem:[#allocation2] sm:$0xff] %vm571, 0.0
        %573 = vst.msk [vmem:[#allocation2 + $0x8] sm:$0xff] %vm571, 0.0
        %574 = vst.msk [vmem:[#allocation3] sm:$0xff] %vm571, 0.0
      $region76: #{tpu_custom_call.1} parent=71 // pred_fallthru
        _
      %v575 = vld [vmem:[%s535] sm:$0xff]
      %v576 = vld [vmem:[%s535 + $0x8] sm:$0xff]
      %v577 = vld [vmem:[%s535 + $0x10] sm:$0xff]
      %v578 = vld [vmem:[%s535 + $0x18] sm:$0xff]
      %v579 = vld [vmem:[%s545] sm:$0xff]
      %v580 = vld [vmem:[%s545 + $0x8] sm:$0xff]
      %v581 = vld [vmem:[%s545 + $0x10] sm:$0xff]
      %v582 = vld [vmem:[%s545 + $0x18] sm:$0xff]
      %v583 = vadd.f32 %v575, %v579
      %v584 = vadd.f32 %v576, %v580
      %v585 = vadd.f32 %v577, %v581
      %v586 = vadd.f32 %v578, %v582
      %vm587 = vcmask 261120
      %588 = vst.msk [vmem:[%s565] sm:$0xff] %vm587, %v583
      %589 = vst.msk [vmem:[%s565 + $0x8] sm:$0xff] %vm587, %v584
      %590 = vst.msk [vmem:[%s565 + $0x10] sm:$0xff] %vm587, %v585
      %591 = vst.msk [vmem:[%s565 + $0x18] sm:$0xff] %vm587, %v586
      %v592 = vsel %vm587, %v583, 0.0
      %593 = vadd.xlane.f32.xlu0 %v592
      %v594 = vpop.xlane.xlu0 %593
      %v595 = vsel %vm587, %v584, 0.0
      %596 = vadd.xlane.f32.xlu0 %v595
      %v597 = vpop.xlane.xlu0 %596
      %v598 = vsel %vm587, %v585, 0.0
      %599 = vadd.xlane.f32.xlu0 %v598
      %v600 = vpop.xlane.xlu0 %599
      %v601 = vsel %vm587, %v586, 0.0
      %602 = vadd.xlane.f32.xlu0 %v601
      %v603 = vpop.xlane.xlu0 %602
      %v604 = vrcp.pop 32.0
      %v605 = vmul.f32 %v594, %v604
      %v606 = vmul.f32 %v597, %v604
      %v607 = vmul.f32 %v600, %v604
      %v608 = vmul.f32 %v603, %v604
      %v609 = vsub.f32 %v583, %v605
      %v610 = vsub.f32 %v584, %v606
      %v611 = vsub.f32 %v585, %v607
      %v612 = vsub.f32 %v586, %v608
      %v613 = vmul.f32 %v609, %v609
      %v614 = vmul.f32 %v610, %v610
      %v615 = vmul.f32 %v611, %v611
      %v616 = vmul.f32 %v612, %v612
      %v617 = vsel %vm587, %v613, 0.0
      %618 = vadd.xlane.f32.xlu0 %v617
      %v619 = vpop.xlane.xlu0 %618
      %v620 = vsel %vm587, %v614, 0.0
      %621 = vadd.xlane.f32.xlu0 %v620
      %v622 = vpop.xlane.xlu0 %621
      %v623 = vsel %vm587, %v615, 0.0
      %624 = vadd.xlane.f32.xlu0 %v623
      %v625 = vpop.xlane.xlu0 %624
      %v626 = vsel %vm587, %v616, 0.0
      %627 = vadd.xlane.f32.xlu0 %v626
      %v628 = vpop.xlane.xlu0 %627
      %v629 = vmul.f32 %v619, %v604
      %v630 = vmul.f32 %v622, %v604
      %v631 = vmul.f32 %v625, %v604
      %v632 = vmul.f32 %v628, %v604
      %v633 = vadd.f32 %v629, 1e-05
      %v634 = vadd.f32 %v630, 1e-05
      %v635 = vadd.f32 %v631, 1e-05
      %v636 = vadd.f32 %v632, 1e-05
      %v637 = vrsqrt.pop %v633
      %v638 = vrsqrt.pop %v634
      %v639 = vrsqrt.pop %v635
      %v640 = vrsqrt.pop %v636
      %v641 = vmul.f32 %v609, %v637
      %v642 = vmul.f32 %v610, %v638
      %v643 = vmul.f32 %v611, %v639
      %v644 = vmul.f32 %v612, %v640
      %v645 = vld [vmem:[%s2] sm:$0x1]
      %v647 = vlaneseq
      %v648 = vshrl.u32 %v647, 7
      %v649 = vsub.s32 0, %v648
      %v650 = vrot.slane %v645, %v649
      %v652 = vmul.f32 %v641, %v650
      %v653 = vmul.f32 %v642, %v650
      %v654 = vmul.f32 %v643, %v650
      %v655 = vmul.f32 %v644, %v650
      %v656 = vld [vmem:[%s3] sm:$0x1]
      %v658 = vlaneseq
      %v659 = vshrl.u32 %v658, 7
      %v660 = vsub.s32 0, %v659
      %v661 = vrot.slane %v656, %v660
      %v663 = vadd.f32 %v652, %v661
      %v664 = vadd.f32 %v653, %v661
      %v665 = vadd.f32 %v654, %v661
      %v666 = vadd.f32 %v655, %v661
      %v667 = vld [vmem:[%s4] sm:$0xff]
      %v668 = vld [vmem:[%s4 + $0x8] sm:$0xff]
      %v669 = vld [vmem:[%s4 + $0x10] sm:$0xff]
      %v670 = vld [vmem:[%s4 + $0x18] sm:$0xff]
      %v672 = vsel %vm587, %v663, 0
      %v675 = vsel %vm587, %v664, 0
      %v678 = vsel %vm587, %v665, 0
      %v681 = vsel %vm587, %v666, 0
      %683 = vmatprep.subr.mxu0 0.0
      %684 = vmatpush1.msra.mxu0 0.0
      %685 = vmatprep.subr.mxu0 0.0
      %686 = vmatpush1.msra.mxu0 0.0
      %687 = vmatprep.subr.mxu0 0.0
      %688 = vmatpush1.msra.mxu0 0.0
      %689 = vmatprep.subr.mxu0 0.0
      %690 = vmatpush1.msra.mxu0 0.0
      %691 = vmatprep.subr.mxu0 0.0
      %692 = vmatpush1.msra.mxu0 0.0
      %693 = vmatprep.subr.mxu0 0.0
      %694 = vmatpush1.msra.mxu0 0.0
      %695 = vmatprep.subr.mxu0 0.0
      %696 = vmatpush1.msra.mxu0 0.0
      %697 = vmatprep.subr.mxu0 0.0
      %698 = vmatpush1.msra.mxu0 0.0
      %699 = vmatprep.subr.mxu0 0.0
      %700 = vmatpush1.msra.mxu0 0.0
      %701 = vmatprep.subr.mxu0 0.0
      %702 = vmatpush1.msra.mxu0 0.0
      %703 = vmatprep.subr.mxu0 0.0
      %704 = vmatpush1.msra.mxu0 0.0
      %705 = vmatprep.subr.mxu0 0.0
      %706 = vmatpush1.msra.mxu0 0.0
      %707 = vmatprep.subr.mxu0 0.0
      %708 = vmatpush1.msra.mxu0 %v670
      %709 = vmatprep.subr.mxu0 0.0
      %710 = vmatpush1.msra.mxu0 %v669
      %711 = vmatprep.subr.mxu0 0.0
      %712 = vmatpush1.msra.mxu0 %v668
      %713 = vmatprep.subr.mxu0 0.0
      %714 = vmatpush1.msra.mxu0 %v667
      %715 = vmatprep.subr.mxu0 0.0
      %716 = vmatpush2.msra.mxu0 0.0
      %717 = vmatprep.subr.mxu0 0.0
      %718 = vmatpush2.msra.mxu0 0.0
      %719 = vmatprep.subr.mxu0 0.0
      %720 = vmatpush2.msra.mxu0 0.0
      %721 = vmatprep.subr.mxu0 0.0
      %722 = vmatpush2.msra.mxu0 0.0
      %723 = vmatprep.subr.mxu0 0.0
      %724 = vmatpush2.msra.mxu0 0.0
      %725 = vmatprep.subr.mxu0 0.0
      %726 = vmatpush2.msra.mxu0 0.0
      %727 = vmatprep.subr.mxu0 0.0
      %728 = vmatpush2.msra.mxu0 0.0
      %729 = vmatprep.subr.mxu0 0.0
      %730 = vmatpush2.msra.mxu0 0.0
      %731 = vmatprep.subr.mxu0 0.0
      %732 = vmatpush2.msra.mxu0 0.0
      %733 = vmatprep.subr.mxu0 0.0
      %734 = vmatpush2.msra.mxu0 0.0
      %735 = vmatprep.subr.mxu0 0.0
      %736 = vmatpush2.msra.mxu0 0.0
      %737 = vmatprep.subr.mxu0 0.0
      %738 = vmatpush2.msra.mxu0 0.0
      %739 = vmatprep.subr.mxu0 0.0
      %740 = vmatpush2.msra.mxu0 0.0
      %741 = vmatprep.subr.mxu0 0.0
      %742 = vmatpush2.msra.mxu0 0.0
      %743 = vmatprep.subr.mxu0 0.0
      %744 = vmatpush2.msra.mxu0 0.0
      %745 = vmatprep.subr.mxu0 0.0
      %746 = vmatpush2.msra.mxu0 0.0
      %747 = vmatprep.mubr.f32.mxu0 0.0
      %748 = vmatmul.mubr.f32.gmra.mxu0 %v672
      %v749 = vpop.f32.mrf.mxu0
      %v750 = vadd.f32 0.0, %v749
      %v751 = vpop.f32.mrf.mxu0
      %752 = vmatprep.mubr.f32.mxu0 0.0
      %753 = vmatmul.mubr.f32.gmra.mxu0 %v675
      %v754 = vpop.f32.mrf.mxu0
      %v755 = vadd.f32 0.0, %v754
      %v756 = vpop.f32.mrf.mxu0
      %757 = vmatprep.mubr.f32.mxu0 0.0
      %758 = vmatmul.mubr.f32.gmra.mxu0 %v678
      %v759 = vpop.f32.mrf.mxu0
      %v760 = vadd.f32 0.0, %v759
      %v761 = vpop.f32.mrf.mxu0
      %762 = vmatprep.mubr.f32.mxu0 0.0
      %763 = vmatmul.mubr.f32.gmra.mxu0 %v681
      %v764 = vpop.f32.mrf.mxu0
      %v765 = vadd.f32 0.0, %v764
      %v766 = vpop.f32.mrf.mxu0
      %767 = vdwg.mxu0
      %v768 = vld [vmem:[#allocation3] sm:$0xff]
      %vm769 = vcmask 523264
      %770 = vst.msk [vmem:[#allocation3] sm:$0xff] %vm769, %v765
      %v771 = vld [vmem:[%s6] sm:$0x1]
      %v773 = vlaneseq
      %v774 = vshrl.u32 %v773, 7
      %v775 = vsub.s32 0, %v774
      %v776 = vrot.slane %v771, %v775
      %v778 = vld [vmem:[%s5] sm:$0x1]
      %v779 = vlaneseq
      %v780 = vshrl.u32 %v779, 7
      %v781 = vsub.s32 0, %v780
      %v782 = vrot.slane %v778, %v781
      %v783 = vmul.f32 %v768, %v782
      %v784 = vmul.f32 %v750, %v782
      %v785 = vmul.f32 %v755, %v782
      %v786 = vmul.f32 %v760, %v782
      %v787 = vmul.f32 %v765, %v782
      %v788 = vadd.f32 %v776, %v783
      %v789 = vadd.f32 %v776, %v784
      %v790 = vadd.f32 %v776, %v785
      %v791 = vadd.f32 %v776, %v786
      %v792 = vadd.f32 %v776, %v787
      %v793 = vld [vmem:[%s5 + $0x1] sm:$0x1]
      %v794 = vlaneseq
      %v795 = vshrl.u32 %v794, 7
      %v796 = vsub.s32 0, %v795
      %v797 = vrot.slane %v793, %v796
      %v798 = vmul.f32 %v768, %v797
      %v799 = vmul.f32 %v750, %v797
      %v800 = vmul.f32 %v755, %v797
      %v801 = vmul.f32 %v760, %v797
      %v802 = vmul.f32 %v765, %v797
      %vm808 = vcmask 1046528
      %v809 = vrot.slane %v798, 1
      %v810 = vrot.slane %v799, 1
      %v811 = vsel %vm808, %v809, %v810
      %v812 = vrot.slane %v800, 1
      %v813 = vsel %vm808, %v810, %v812
      %v814 = vrot.slane %v801, 1
      %v815 = vsel %vm808, %v812, %v814
      %v816 = vrot.slane %v802, 1
      %v817 = vsel %vm808, %v814, %v816
      %v823 = vadd.f32 %v788, %v811
      %v824 = vadd.f32 %v789, %v813
      %v825 = vadd.f32 %v790, %v815
      %v826 = vadd.f32 %v791, %v817
      %v827 = vadd.f32 %v792, %v816
      %v828 = vld [vmem:[%s5 + $0x2] sm:$0x1]
      %v829 = vlaneseq
      %v830 = vshrl.u32 %v829, 7
      %v831 = vsub.s32 0, %v830
      %v832 = vrot.slane %v828, %v831
      %v833 = vmul.f32 %v768, %v832
      %v834 = vmul.f32 %v750, %v832
      %v835 = vmul.f32 %v755, %v832
      %v836 = vmul.f32 %v760, %v832
      %v837 = vmul.f32 %v765, %v832
      %vm843 = vcmask 1045504
      %v844 = vrot.slane %v833, 2
      %v845 = vrot.slane %v834, 2
      %v846 = vsel %vm843, %v844, %v845
      %v847 = vrot.slane %v835, 2
      %v848 = vsel %vm843, %v845, %v847
      %v849 = vrot.slane %v836, 2
      %v850 = vsel %vm843, %v847, %v849
      %v851 = vrot.slane %v837, 2
      %v852 = vsel %vm843, %v849, %v851
      %v858 = vadd.f32 %v823, %v846
      %v859 = vadd.f32 %v824, %v848
      %v860 = vadd.f32 %v825, %v850
      %v861 = vadd.f32 %v826, %v852
      %v862 = vadd.f32 %v827, %v851
      %v863 = vld [vmem:[%s5 + $0x3] sm:$0x1]
      %v864 = vlaneseq
      %v865 = vshrl.u32 %v864, 7
      %v866 = vsub.s32 0, %v865
      %v867 = vrot.slane %v863, %v866
      %v868 = vmul.f32 %v750, %v867
      %v869 = vmul.f32 %v755, %v867
      %v870 = vmul.f32 %v760, %v867
      %v871 = vmul.f32 %v765, %v867
      %vm876 = vcmask 1044480
      %v877 = vrot.slane %v868, 3
      %v878 = vrot.slane %v869, 3
      %v879 = vsel %vm876, %v877, %v878
      %v880 = vrot.slane %v870, 3
      %v881 = vsel %vm876, %v878, %v880
      %v882 = vrot.slane %v871, 3
      %v883 = vsel %vm876, %v880, %v882
      %v889 = vadd.f32 %v858, %v877
      %v890 = vadd.f32 %v859, %v879
      %v891 = vadd.f32 %v860, %v881
      %v892 = vadd.f32 %v861, %v883
      %v893 = vadd.f32 %v862, %v882
      %v894 = vxor.u32 %v889, 2147483648
      %v895 = vxor.u32 %v890, 2147483648
      %v896 = vxor.u32 %v891, 2147483648
      %v897 = vxor.u32 %v892, 2147483648
      %v898 = vxor.u32 %v893, 2147483648
      %v899 = vmul.f32 %v894, 1.442695
      %v900 = vpow.pop %v899
      %v901 = vmul.f32 %v895, 1.442695
      %v902 = vpow.pop %v901
      %v903 = vmul.f32 %v896, 1.442695
      %v904 = vpow.pop %v903
      %v905 = vmul.f32 %v897, 1.442695
      %v906 = vpow.pop %v905
      %v907 = vmul.f32 %v898, 1.442695
      %v908 = vpow.pop %v907
      %v909 = vadd.f32 %v900, 1.0
      %v910 = vadd.f32 %v902, 1.0
      %v911 = vadd.f32 %v904, 1.0
      %v912 = vadd.f32 %v906, 1.0
      %v913 = vadd.f32 %v908, 1.0
      %v914 = vrcp.pop %v909
      %v915 = vmul.f32 1.0, %v914
      %v916 = vrcp.pop %v910
      %v917 = vmul.f32 1.0, %v916
      %v918 = vrcp.pop %v911
      %v919 = vmul.f32 1.0, %v918
      %v920 = vrcp.pop %v912
      %v921 = vmul.f32 1.0, %v920
      %v922 = vrcp.pop %v913
      %v923 = vmul.f32 1.0, %v922
      %v924 = vmul.f32 %v889, %v915
      %v925 = vmul.f32 %v890, %v917
      %v926 = vmul.f32 %v891, %v919
      %v927 = vmul.f32 %v892, %v921
      %v928 = vmul.f32 %v893, %v923
      %v929 = vld [vmem:[%s7] sm:$0xff]
      %v930 = vld [vmem:[%s7 + $0x8] sm:$0xff]
      %v931 = vld [vmem:[%s7 + $0x10] sm:$0xff]
      %v932 = vld [vmem:[%s7 + $0x18] sm:$0xff]
      %v933 = vld [vmem:[%s7 + $0x20] sm:$0xff]
      %v934 = vld [vmem:[%s7 + $0x28] sm:$0xff]
      %v935 = vld [vmem:[%s7 + $0x30] sm:$0xff]
      %v936 = vld [vmem:[%s7 + $0x38] sm:$0xff]
      %v937 = vld [vmem:[%s8] sm:$0x1]
      %v939 = vlaneseq
      %v940 = vshrl.u32 %v939, 7
      %v941 = vsub.s32 0, %v940
      %v942 = vrot.slane %v937, %v941
      %vm949 = vcmask 1042432
      %v950 = vrot.slane %v924, 5
      %v951 = vrot.slane %v925, 5
      %v952 = vsel %vm949, %v950, %v951
      %v953 = vrot.slane %v926, 5
      %v954 = vsel %vm949, %v951, %v953
      %v955 = vrot.slane %v927, 5
      %v956 = vsel %vm949, %v953, %v955
      %v957 = vrot.slane %v928, 5
      %v958 = vsel %vm949, %v955, %v957
      %v959 = vsel %vm769, %v952, 0
      %v961 = vsel %vm769, %v954, 0
      %v963 = vsel %vm769, %v956, 0
      %v965 = vsel %vm769, %v958, 0
      %967 = vmatprep.subr.mxu0 0.0
      %968 = vmatpush1.msra.mxu0 0.0
      %969 = vmatprep.subr.mxu0 0.0
      %970 = vmatpush1.msra.mxu0 0.0
      %971 = vmatprep.subr.mxu0 0.0
      %972 = vmatpush1.msra.mxu0 0.0
      %973 = vmatprep.subr.mxu0 0.0
      %974 = vmatpush1.msra.mxu0 0.0
      %975 = vmatprep.subr.mxu0 0.0
      %976 = vmatpush1.msra.mxu0 0.0
      %977 = vmatprep.subr.mxu0 0.0
      %978 = vmatpush1.msra.mxu0 0.0
      %979 = vmatprep.subr.mxu0 0.0
      %980 = vmatpush1.msra.mxu0 0.0
      %981 = vmatprep.subr.mxu0 0.0
      %982 = vmatpush1.msra.mxu0 0.0
      %983 = vmatprep.subr.mxu0 0.0
      %984 = vmatpush1.msra.mxu0 %v936
      %985 = vmatprep.subr.mxu0 0.0
      %986 = vmatpush1.msra.mxu0 %v935
      %987 = vmatprep.subr.mxu0 0.0
      %988 = vmatpush1.msra.mxu0 %v934
      %989 = vmatprep.subr.mxu0 0.0
      %990 = vmatpush1.msra.mxu0 %v933
      %991 = vmatprep.subr.mxu0 0.0
      %992 = vmatpush1.msra.mxu0 %v932
      %993 = vmatprep.subr.mxu0 0.0
      %994 = vmatpush1.msra.mxu0 %v931
      %995 = vmatprep.subr.mxu0 0.0
      %996 = vmatpush1.msra.mxu0 %v930
      %997 = vmatprep.subr.mxu0 0.0
      %998 = vmatpush1.msra.mxu0 %v929
      %999 = vmatprep.subr.mxu0 0.0
      %1000 = vmatpush2.msra.mxu0 0.0
      %1001 = vmatprep.subr.mxu0 0.0
      %1002 = vmatpush2.msra.mxu0 0.0
      %1003 = vmatprep.subr.mxu0 0.0
      %1004 = vmatpush2.msra.mxu0 0.0
      %1005 = vmatprep.subr.mxu0 0.0
      %1006 = vmatpush2.msra.mxu0 0.0
      %1007 = vmatprep.subr.mxu0 0.0
      %1008 = vmatpush2.msra.mxu0 0.0
      %1009 = vmatprep.subr.mxu0 0.0
      %1010 = vmatpush2.msra.mxu0 0.0
      %1011 = vmatprep.subr.mxu0 0.0
      %1012 = vmatpush2.msra.mxu0 0.0
      %1013 = vmatprep.subr.mxu0 0.0
      %1014 = vmatpush2.msra.mxu0 0.0
      %1015 = vmatprep.subr.mxu0 0.0
      %1016 = vmatpush2.msra.mxu0 0.0
      %1017 = vmatprep.subr.mxu0 0.0
      %1018 = vmatpush2.msra.mxu0 0.0
      %1019 = vmatprep.subr.mxu0 0.0
      %1020 = vmatpush2.msra.mxu0 0.0
      %1021 = vmatprep.subr.mxu0 0.0
      %1022 = vmatpush2.msra.mxu0 0.0
      %1023 = vmatprep.subr.mxu0 0.0
      %1024 = vmatpush2.msra.mxu0 0.0
      %1025 = vmatprep.subr.mxu0 0.0
      %1026 = vmatpush2.msra.mxu0 0.0
      %1027 = vmatprep.subr.mxu0 0.0
      %1028 = vmatpush2.msra.mxu0 0.0
      %1029 = vmatprep.subr.mxu0 0.0
      %1030 = vmatpush2.msra.mxu0 0.0
      %1031 = vmatprep.mubr.f32.mxu0 0.0
      %1032 = vmatmul.mubr.f32.gmra.mxu0 %v959
      %v1033 = vpop.f32.mrf.mxu0
      %v1034 = vadd.f32 %v942, %v1033
      %v1035 = vpop.f32.mrf.mxu0
      %1036 = vmatprep.mubr.f32.mxu0 0.0
      %1037 = vmatmul.mubr.f32.gmra.mxu0 %v961
      %v1038 = vpop.f32.mrf.mxu0
      %v1039 = vadd.f32 %v942, %v1038
      %v1040 = vpop.f32.mrf.mxu0
      %1041 = vmatprep.mubr.f32.mxu0 0.0
      %1042 = vmatmul.mubr.f32.gmra.mxu0 %v963
      %v1043 = vpop.f32.mrf.mxu0
      %v1044 = vadd.f32 %v942, %v1043
      %v1045 = vpop.f32.mrf.mxu0
      %1046 = vmatprep.mubr.f32.mxu0 0.0
      %1047 = vmatmul.mubr.f32.gmra.mxu0 %v965
      %v1048 = vpop.f32.mrf.mxu0
      %v1049 = vadd.f32 %v942, %v1048
      %v1050 = vpop.f32.mrf.mxu0
      %1051 = vdwg.mxu0
      %v1052 = vmax.f32 %v1034, 0.0
      %v1053 = vmax.f32 %v1039, 0.0
      %v1054 = vmax.f32 %v1044, 0.0
      %v1055 = vmax.f32 %v1049, 0.0
      %vm1056 = vcmp.ne.f32.partialorder %v1034, %v1034
      %vm1057 = vcmp.ne.f32.partialorder %v1039, %v1039
      %vm1058 = vcmp.ne.f32.partialorder %v1044, %v1044
      %vm1059 = vcmp.ne.f32.partialorder %v1049, %v1049
      %v1060 = vadd.f32 %v1034, 0.0
      %v1061 = vadd.f32 %v1039, 0.0
      %v1062 = vadd.f32 %v1044, 0.0
      %v1063 = vadd.f32 %v1049, 0.0
      %v1064 = vand.u32 2147483647, %v1034
      %v1065 = vand.u32 2147483647, %v1039
      %v1066 = vand.u32 2147483647, %v1044
      %v1067 = vand.u32 2147483647, %v1049
      %v1068 = vsub.f32 0.0, %v1064
      %v1069 = vsub.f32 0.0, %v1065
      %v1070 = vsub.f32 0.0, %v1066
      %v1071 = vsub.f32 0.0, %v1067
      %v1072 = vmul.f32 %v1068, 1.442695
      %v1073 = vpow.pop %v1072
      %v1074 = vmul.f32 %v1069, 1.442695
      %v1075 = vpow.pop %v1074
      %v1076 = vmul.f32 %v1070, 1.442695
      %v1077 = vpow.pop %v1076
      %v1078 = vmul.f32 %v1071, 1.442695
      %v1079 = vpow.pop %v1078
      %v1080 = vadd.f32 %v1073, 1.0
      %v1081 = vlog2.pop %v1080
      %v1082 = vmul.f32 %v1081, 0.6931472
      %v1083 = vmul.f32 -0.5, %v1073
      %v1084 = vadd.f32 %v1083, 1.0
      %v1085 = vmul.f32 %v1084, %v1073
      %v1086 = vand.u32 2147483647, %v1073
      %vm1087 = vcmp.lt.f32.partialorder %v1086, 0.0004427343
      %v1088 = vsel %vm1087, %v1085, %v1082
      %v1089 = vadd.f32 %v1075, 1.0
      %v1090 = vlog2.pop %v1089
      %v1091 = vmul.f32 %v1090, 0.6931472
      %v1092 = vmul.f32 -0.5, %v1075
      %v1093 = vadd.f32 %v1092, 1.0
      %v1094 = vmul.f32 %v1093, %v1075
      %v1095 = vand.u32 2147483647, %v1075
      %vm1096 = vcmp.lt.f32.partialorder %v1095, 0.0004427343
      %v1097 = vsel %vm1096, %v1094, %v1091
      %v1098 = vadd.f32 %v1077, 1.0
      %v1099 = vlog2.pop %v1098
      %v1100 = vmul.f32 %v1099, 0.6931472
      %v1101 = vmul.f32 -0.5, %v1077
      %v1102 = vadd.f32 %v1101, 1.0
      %v1103 = vmul.f32 %v1102, %v1077
      %v1104 = vand.u32 2147483647, %v1077
      %vm1105 = vcmp.lt.f32.partialorder %v1104, 0.0004427343
      %v1106 = vsel %vm1105, %v1103, %v1100
      %v1107 = vadd.f32 %v1079, 1.0
      %v1108 = vlog2.pop %v1107
      %v1109 = vmul.f32 %v1108, 0.6931472
      %v1110 = vmul.f32 -0.5, %v1079
      %v1111 = vadd.f32 %v1110, 1.0
      %v1112 = vmul.f32 %v1111, %v1079
      %v1113 = vand.u32 2147483647, %v1079
      %vm1114 = vcmp.lt.f32.partialorder %v1113, 0.0004427343
      %v1115 = vsel %vm1114, %v1112, %v1109
      %v1116 = vadd.f32 %v1052, %v1088
      %v1117 = vadd.f32 %v1053, %v1097
      %v1118 = vadd.f32 %v1054, %v1106
      %v1119 = vadd.f32 %v1055, %v1115
      %v1120 = vsel %vm1056, %v1060, %v1116
      %v1121 = vsel %vm1057, %v1061, %v1117
      %v1122 = vsel %vm1058, %v1062, %v1118
      %v1123 = vsel %vm1059, %v1063, %v1119
      %v1124 = vld [vmem:[%s9] sm:$0xff]
      %v1125 = vld [vmem:[%s9 + $0x8] sm:$0xff]
      %v1126 = vld [vmem:[%s9 + $0x10] sm:$0xff]
      %v1127 = vld [vmem:[%s9 + $0x18] sm:$0xff]
      %v1128 = vld [vmem:[%s9 + $0x20] sm:$0xff]
      %v1129 = vld [vmem:[%s9 + $0x28] sm:$0xff]
      %v1130 = vld [vmem:[%s9 + $0x30] sm:$0xff]
      %v1131 = vld [vmem:[%s9 + $0x38] sm:$0xff]
      %1132 = vmatprep.subr.mxu0 0.0
      %1133 = vmatpush1.msra.mxu0 0.0
      %1134 = vmatprep.subr.mxu0 0.0
      %1135 = vmatpush1.msra.mxu0 0.0
      %1136 = vmatprep.subr.mxu0 0.0
      %1137 = vmatpush1.msra.mxu0 0.0
      %1138 = vmatprep.subr.mxu0 0.0
      %1139 = vmatpush1.msra.mxu0 0.0
      %1140 = vmatprep.subr.mxu0 0.0
      %1141 = vmatpush1.msra.mxu0 0.0
      %1142 = vmatprep.subr.mxu0 0.0
      %1143 = vmatpush1.msra.mxu0 0.0
      %1144 = vmatprep.subr.mxu0 0.0
      %1145 = vmatpush1.msra.mxu0 0.0
      %1146 = vmatprep.subr.mxu0 0.0
      %1147 = vmatpush1.msra.mxu0 0.0
      %1148 = vmatprep.subr.mxu0 0.0
      %1149 = vmatpush1.msra.mxu0 %v1131
      %1150 = vmatprep.subr.mxu0 0.0
      %1151 = vmatpush1.msra.mxu0 %v1130
      %1152 = vmatprep.subr.mxu0 0.0
      %1153 = vmatpush1.msra.mxu0 %v1129
      %1154 = vmatprep.subr.mxu0 0.0
      %1155 = vmatpush1.msra.mxu0 %v1128
      %1156 = vmatprep.subr.mxu0 0.0
      %1157 = vmatpush1.msra.mxu0 %v1127
      %1158 = vmatprep.subr.mxu0 0.0
      %1159 = vmatpush1.msra.mxu0 %v1126
      %1160 = vmatprep.subr.mxu0 0.0
      %1161 = vmatpush1.msra.mxu0 %v1125
      %1162 = vmatprep.subr.mxu0 0.0
      %1163 = vmatpush1.msra.mxu0 %v1124
      %1164 = vmatprep.subr.mxu0 0.0
      %1165 = vmatpush2.msra.mxu0 0.0
      %1166 = vmatprep.subr.mxu0 0.0
      %1167 = vmatpush2.msra.mxu0 0.0
      %1168 = vmatprep.subr.mxu0 0.0
      %1169 = vmatpush2.msra.mxu0 0.0
      %1170 = vmatprep.subr.mxu0 0.0
      %1171 = vmatpush2.msra.mxu0 0.0
      %1172 = vmatprep.subr.mxu0 0.0
      %1173 = vmatpush2.msra.mxu0 0.0
      %1174 = vmatprep.subr.mxu0 0.0
      %1175 = vmatpush2.msra.mxu0 0.0
      %1176 = vmatprep.subr.mxu0 0.0
      %1177 = vmatpush2.msra.mxu0 0.0
      %1178 = vmatprep.subr.mxu0 0.0
      %1179 = vmatpush2.msra.mxu0 0.0
      %1180 = vmatprep.subr.mxu0 0.0
      %1181 = vmatpush2.msra.mxu0 0.0
      %1182 = vmatprep.subr.mxu0 0.0
      %1183 = vmatpush2.msra.mxu0 0.0
      %1184 = vmatprep.subr.mxu0 0.0
      %1185 = vmatpush2.msra.mxu0 0.0
      %1186 = vmatprep.subr.mxu0 0.0
      %1187 = vmatpush2.msra.mxu0 0.0
      %1188 = vmatprep.subr.mxu0 0.0
      %1189 = vmatpush2.msra.mxu0 0.0
      %1190 = vmatprep.subr.mxu0 0.0
      %1191 = vmatpush2.msra.mxu0 0.0
      %1192 = vmatprep.subr.mxu0 0.0
      %1193 = vmatpush2.msra.mxu0 0.0
      %1194 = vmatprep.subr.mxu0 0.0
      %1195 = vmatpush2.msra.mxu0 0.0
      %1196 = vmatprep.mubr.f32.mxu0 0.0
      %1197 = vmatmul.mubr.f32.gmra.mxu0 %v959
      %v1198 = vpop.f32.mrf.mxu0
      %v1199 = vadd.f32 0.0, %v1198
      %v1200 = vpop.f32.mrf.mxu0
      %1201 = vmatprep.mubr.f32.mxu0 0.0
      %1202 = vmatmul.mubr.f32.gmra.mxu0 %v961
      %v1203 = vpop.f32.mrf.mxu0
      %v1204 = vadd.f32 0.0, %v1203
      %v1205 = vpop.f32.mrf.mxu0
      %1206 = vmatprep.mubr.f32.mxu0 0.0
      %1207 = vmatmul.mubr.f32.gmra.mxu0 %v963
      %v1208 = vpop.f32.mrf.mxu0
      %v1209 = vadd.f32 0.0, %v1208
      %v1210 = vpop.f32.mrf.mxu0
      %1211 = vmatprep.mubr.f32.mxu0 0.0
      %1212 = vmatmul.mubr.f32.gmra.mxu0 %v965
      %v1213 = vpop.f32.mrf.mxu0
      %v1214 = vadd.f32 0.0, %v1213
      %v1215 = vpop.f32.mrf.mxu0
      %1216 = vdwg.mxu0
      %1217 = vst.msk [vmem:[#allocation4] sm:$0xff] %vm769, %v1120
      %1218 = vst.msk [vmem:[#allocation4 + $0x8] sm:$0xff] %vm769, %v1121
      %1219 = vst.msk [vmem:[#allocation4 + $0x10] sm:$0xff] %vm769, %v1122
      %1220 = vst.msk [vmem:[#allocation4 + $0x18] sm:$0xff] %vm769, %v1123
      %v1225 = vmul.f32 %v1120, %v952
      %v1226 = vmul.f32 %v1121, %v954
      %v1227 = vmul.f32 %v1122, %v956
      %v1228 = vmul.f32 %v1123, %v958
      %1229 = vst.msk [vmem:[#allocation5] sm:$0xff] %vm769, %v1225
      %1230 = vst.msk [vmem:[#allocation5 + $0x8] sm:$0xff] %vm769, %v1226
      %1231 = vst.msk [vmem:[#allocation5 + $0x10] sm:$0xff] %vm769, %v1227
      %1232 = vst.msk [vmem:[#allocation5 + $0x18] sm:$0xff] %vm769, %v1228
      %vm1233 = vcmask 130048
      %1234 = vst.msk [vmem:[#allocation6] sm:$0xff] %vm1233, %v1199
      %1235 = vst.msk [vmem:[#allocation6 + $0x8] sm:$0xff] %vm1233, %v1204
      %1236 = vst.msk [vmem:[#allocation6 + $0x10] sm:$0xff] %vm1233, %v1209
      %1237 = vst.msk [vmem:[#allocation6 + $0x18] sm:$0xff] %vm1233, %v1214
      %1242 = vrot.lane.b32.xlu0 %v1199, 112
      %v1243 = vpop.permute.xlu0 %1242
      %1244 = vrot.lane.b32.xlu0 %v1204, 112
      %v1245 = vpop.permute.xlu0 %1244
      %1246 = vrot.lane.b32.xlu0 %v1209, 112
      %v1247 = vpop.permute.xlu0 %1246
      %1248 = vrot.lane.b32.xlu0 %v1214, 112
      %v1249 = vpop.permute.xlu0 %1248
      %1254 = vst.msk [vmem:[#allocation7] sm:$0xff] %vm1233, %v1243
      %1255 = vst.msk [vmem:[#allocation7 + $0x8] sm:$0xff] %vm1233, %v1245
      %1256 = vst.msk [vmem:[#allocation7 + $0x10] sm:$0xff] %vm1233, %v1247
      %1257 = vst.msk [vmem:[#allocation7 + $0x18] sm:$0xff] %vm1233, %v1249
      %v1258 = vld [vmem:[%s10] sm:$0xff]
      %v1259 = vld [vmem:[%s10 + $0x8] sm:$0xff]
      %v1260 = vld [vmem:[#allocation2] sm:$0xff]
      %v1261 = vld [vmem:[#allocation2 + $0x8] sm:$0xff]
      %v1262 = vld [vmem:[#allocation4] sm:$0xff]
      %v1263 = vld [vmem:[#allocation5] sm:$0xff]
      %v1264 = vld [vmem:[#allocation6] sm:$0xff]
      %v1265 = vld [vmem:[#allocation7] sm:$0xff]
      %v1267 = vcombine.high %v1262, %v1262
      %v1269 = vunpack.c.l.s4 1966171168
      %v1270 = vunpack.c.0.s8 %v1269
      %v1271 = vlaneseq
      %v1272 = vshrl.u32 %v1271, 7
      %v1273 = vsub.s32 %v1270, %v1272
      %v1274 = vrot.slane %v1262, %v1273
      %v1276 = vunpack.c.l.s4 1966171168
      %v1277 = vunpack.c.0.s8 %v1276
      %v1278 = vlaneseq
      %v1279 = vshrl.u32 %v1278, 7
      %v1280 = vsub.s32 %v1277, %v1279
      %v1281 = vrot.slane %v1267, %v1280
      %v1282 = vcombine.high %v1274, %v1274
      %v1283 = vcombine.high %v1281, %v1281
      %v1285 = vunpack.c.l.s4 1966171168
      %v1286 = vunpack.c.0.s8 %v1285
      %v1287 = vlaneseq
      %v1288 = vshrl.u32 %v1287, 7
      %v1289 = vsub.s32 %v1286, %v1288
      %v1290 = vrot.slane %v1274, %v1289
      %v1292 = vunpack.c.l.s4 1966171168
      %v1293 = vunpack.c.0.s8 %v1292
      %v1294 = vlaneseq
      %v1295 = vshrl.u32 %v1294, 7
      %v1296 = vsub.s32 %v1293, %v1295
      %v1297 = vrot.slane %v1281, %v1296
      %v1299 = vunpack.c.l.s4 1966171168
      %v1300 = vunpack.c.0.s8 %v1299
      %v1301 = vlaneseq
      %v1302 = vshrl.u32 %v1301, 7
      %v1303 = vsub.s32 %v1300, %v1302
      %v1304 = vrot.slane %v1282, %v1303
      %v1306 = vunpack.c.l.s4 1966171168
      %v1307 = vunpack.c.0.s8 %v1306
      %v1308 = vlaneseq
      %v1309 = vshrl.u32 %v1308, 7
      %v1310 = vsub.s32 %v1307, %v1309
      %v1311 = vrot.slane %v1283, %v1310
      %v1312 = vcombine.high %v1290, %v1290
      %v1313 = vcombine.high %v1297, %v1297
      %v1314 = vcombine.high %v1304, %v1304
      %v1315 = vcombine.high %v1311, %v1311
      %v1316 = vlaneseq
      %v1317 = vshrl.u32 %v1316, 7
      %v1318 = vsub.s32 0, %v1317
      %v1319 = vrot.slane %v1290, %v1318
      %v1320 = vlaneseq
      %v1321 = vshrl.u32 %v1320, 7
      %v1322 = vsub.s32 0, %v1321
      %v1323 = vrot.slane %v1304, %v1322
      %v1324 = vlaneseq
      %v1325 = vshrl.u32 %v1324, 7
      %v1326 = vsub.s32 0, %v1325
      %v1327 = vrot.slane %v1312, %v1326
      %v1328 = vlaneseq
      %v1329 = vshrl.u32 %v1328, 7
      %v1330 = vsub.s32 0, %v1329
      %v1331 = vrot.slane %v1314, %v1330
      %v1332 = vlaneseq
      %v1333 = vshrl.u32 %v1332, 7
      %v1334 = vsub.s32 0, %v1333
      %v1335 = vrot.slane %v1297, %v1334
      %v1336 = vlaneseq
      %v1337 = vshrl.u32 %v1336, 7
      %v1338 = vsub.s32 0, %v1337
      %v1339 = vrot.slane %v1311, %v1338
      %v1340 = vlaneseq
      %v1341 = vshrl.u32 %v1340, 7
      %v1342 = vsub.s32 0, %v1341
      %v1343 = vrot.slane %v1313, %v1342
      %v1344 = vlaneseq
      %v1345 = vshrl.u32 %v1344, 7
      %v1346 = vsub.s32 0, %v1345
      %v1347 = vrot.slane %v1315, %v1346
      %v1356 = vmul.f32 %v1319, %v1258
      %v1357 = vmul.f32 %v1319, %v1259
      %v1358 = vmul.f32 %v1323, %v1258
      %v1359 = vmul.f32 %v1323, %v1259
      %v1360 = vmul.f32 %v1327, %v1258
      %v1361 = vmul.f32 %v1327, %v1259
      %v1362 = vmul.f32 %v1331, %v1258
      %v1363 = vmul.f32 %v1331, %v1259
      %v1364 = vmul.f32 %v1335, %v1258
      %v1365 = vmul.f32 %v1335, %v1259
      %v1366 = vmul.f32 %v1339, %v1258
      %v1367 = vmul.f32 %v1339, %v1259
      %v1368 = vmul.f32 %v1343, %v1258
      %v1369 = vmul.f32 %v1343, %v1259
      %v1370 = vmul.f32 %v1347, %v1258
      %v1371 = vmul.f32 %v1347, %v1259
      %v1372 = vmul.f32 %v1356, 1.442695
      %v1373 = vpow.pop %v1372
      %v1374 = vmul.f32 %v1357, 1.442695
      %v1375 = vpow.pop %v1374
      %v1376 = vmul.f32 %v1358, 1.442695
      %v1377 = vpow.pop %v1376
      %v1378 = vmul.f32 %v1359, 1.442695
      %v1379 = vpow.pop %v1378
      %v1380 = vmul.f32 %v1360, 1.442695
      %v1381 = vpow.pop %v1380
      %v1382 = vmul.f32 %v1361, 1.442695
      %v1383 = vpow.pop %v1382
      %v1384 = vmul.f32 %v1362, 1.442695
      %v1385 = vpow.pop %v1384
      %v1386 = vmul.f32 %v1363, 1.442695
      %v1387 = vpow.pop %v1386
      %v1388 = vmul.f32 %v1364, 1.442695
      %v1389 = vpow.pop %v1388
      %v1390 = vmul.f32 %v1365, 1.442695
      %v1391 = vpow.pop %v1390
      %v1392 = vmul.f32 %v1366, 1.442695
      %v1393 = vpow.pop %v1392
      %v1394 = vmul.f32 %v1367, 1.442695
      %v1395 = vpow.pop %v1394
      %v1396 = vmul.f32 %v1368, 1.442695
      %v1397 = vpow.pop %v1396
      %v1398 = vmul.f32 %v1369, 1.442695
      %v1399 = vpow.pop %v1398
      %v1400 = vmul.f32 %v1370, 1.442695
      %v1401 = vpow.pop %v1400
      %v1402 = vmul.f32 %v1371, 1.442695
      %v1403 = vpow.pop %v1402
      %v1405 = vcombine.high %v1263, %v1263
      %v1407 = vunpack.c.l.s4 1966171168
      %v1408 = vunpack.c.0.s8 %v1407
      %v1409 = vlaneseq
      %v1410 = vshrl.u32 %v1409, 7
      %v1411 = vsub.s32 %v1408, %v1410
      %v1412 = vrot.slane %v1263, %v1411
      %v1414 = vunpack.c.l.s4 1966171168
      %v1415 = vunpack.c.0.s8 %v1414
      %v1416 = vlaneseq
      %v1417 = vshrl.u32 %v1416, 7
      %v1418 = vsub.s32 %v1415, %v1417
      %v1419 = vrot.slane %v1405, %v1418
      %v1420 = vcombine.high %v1412, %v1412
      %v1421 = vcombine.high %v1419, %v1419
      %v1423 = vunpack.c.l.s4 1966171168
      %v1424 = vunpack.c.0.s8 %v1423
      %v1425 = vlaneseq
      %v1426 = vshrl.u32 %v1425, 7
      %v1427 = vsub.s32 %v1424, %v1426
      %v1428 = vrot.slane %v1412, %v1427
      %v1430 = vunpack.c.l.s4 1966171168
      %v1431 = vunpack.c.0.s8 %v1430
      %v1432 = vlaneseq
      %v1433 = vshrl.u32 %v1432, 7
      %v1434 = vsub.s32 %v1431, %v1433
      %v1435 = vrot.slane %v1419, %v1434
      %v1437 = vunpack.c.l.s4 1966171168
      %v1438 = vunpack.c.0.s8 %v1437
      %v1439 = vlaneseq
      %v1440 = vshrl.u32 %v1439, 7
      %v1441 = vsub.s32 %v1438, %v1440
      %v1442 = vrot.slane %v1420, %v1441
      %v1444 = vunpack.c.l.s4 1966171168
      %v1445 = vunpack.c.0.s8 %v1444
      %v1446 = vlaneseq
      %v1447 = vshrl.u32 %v1446, 7
      %v1448 = vsub.s32 %v1445, %v1447
      %v1449 = vrot.slane %v1421, %v1448
      %v1450 = vcombine.high %v1428, %v1428
      %v1451 = vcombine.high %v1435, %v1435
      %v1452 = vcombine.high %v1442, %v1442
      %v1453 = vcombine.high %v1449, %v1449
      %v1454 = vlaneseq
      %v1455 = vshrl.u32 %v1454, 7
      %v1456 = vsub.s32 0, %v1455
      %v1457 = vrot.slane %v1264, %v1456
      %1459 = vbcast.lane.b32.xlu0 %v1457, 256
      %v1460 = vpop.permute.xlu0 %1459
      %s1462 = sor.u32 256, 8
      %1463 = vbcast.lane.b32.xlu0 %v1457, %s1462
      %v1464 = vpop.permute.xlu0 %1463
      %v1465 = vlaneseq
      %v1466 = vshrl.u32 %v1465, 7
      %v1467 = vsub.s32 1, %v1466
      %v1468 = vrot.slane %v1264, %v1467
      %1470 = vbcast.lane.b32.xlu0 %v1468, 256
      %v1471 = vpop.permute.xlu0 %1470
      %s1473 = sor.u32 256, 8
      %1474 = vbcast.lane.b32.xlu0 %v1468, %s1473
      %v1475 = vpop.permute.xlu0 %1474
      %v1476 = vlaneseq
      %v1477 = vshrl.u32 %v1476, 7
      %v1478 = vsub.s32 2, %v1477
      %v1479 = vrot.slane %v1264, %v1478
      %1481 = vbcast.lane.b32.xlu0 %v1479, 256
      %v1482 = vpop.permute.xlu0 %1481
      %s1484 = sor.u32 256, 8
      %1485 = vbcast.lane.b32.xlu0 %v1479, %s1484
      %v1486 = vpop.permute.xlu0 %1485
      %v1487 = vlaneseq
      %v1488 = vshrl.u32 %v1487, 7
      %v1489 = vsub.s32 3, %v1488
      %v1490 = vrot.slane %v1264, %v1489
      %1492 = vbcast.lane.b32.xlu0 %v1490, 256
      %v1493 = vpop.permute.xlu0 %1492
      %s1495 = sor.u32 256, 8
      %1496 = vbcast.lane.b32.xlu0 %v1490, %s1495
      %v1497 = vpop.permute.xlu0 %1496
      %v1498 = vlaneseq
      %v1499 = vshrl.u32 %v1498, 7
      %v1500 = vsub.s32 4, %v1499
      %v1501 = vrot.slane %v1264, %v1500
      %1503 = vbcast.lane.b32.xlu0 %v1501, 256
      %v1504 = vpop.permute.xlu0 %1503
      %s1506 = sor.u32 256, 8
      %1507 = vbcast.lane.b32.xlu0 %v1501, %s1506
      %v1508 = vpop.permute.xlu0 %1507
      %v1509 = vlaneseq
      %v1510 = vshrl.u32 %v1509, 7
      %v1511 = vsub.s32 5, %v1510
      %v1512 = vrot.slane %v1264, %v1511
      %1514 = vbcast.lane.b32.xlu0 %v1512, 256
      %v1515 = vpop.permute.xlu0 %1514
      %s1517 = sor.u32 256, 8
      %1518 = vbcast.lane.b32.xlu0 %v1512, %s1517
      %v1519 = vpop.permute.xlu0 %1518
      %v1520 = vlaneseq
      %v1521 = vshrl.u32 %v1520, 7
      %v1522 = vsub.s32 6, %v1521
      %v1523 = vrot.slane %v1264, %v1522
      %1525 = vbcast.lane.b32.xlu0 %v1523, 256
      %v1526 = vpop.permute.xlu0 %1525
      %s1528 = sor.u32 256, 8
      %1529 = vbcast.lane.b32.xlu0 %v1523, %s1528
      %v1530 = vpop.permute.xlu0 %1529
      %v1531 = vlaneseq
      %v1532 = vshrl.u32 %v1531, 7
      %v1533 = vsub.s32 7, %v1532
      %v1534 = vrot.slane %v1264, %v1533
      %1536 = vbcast.lane.b32.xlu0 %v1534, 256
      %v1537 = vpop.permute.xlu0 %1536
      %s1539 = sor.u32 256, 8
      %1540 = vbcast.lane.b32.xlu0 %v1534, %s1539
      %v1541 = vpop.permute.xlu0 %1540
      %v1542 = vlaneseq
      %v1543 = vshrl.u32 %v1542, 7
      %v1544 = vsub.s32 0, %v1543
      %v1545 = vrot.slane %v1428, %v1544
      %v1546 = vlaneseq
      %v1547 = vshrl.u32 %v1546, 7
      %v1548 = vsub.s32 0, %v1547
      %v1549 = vrot.slane %v1442, %v1548
      %v1550 = vlaneseq
      %v1551 = vshrl.u32 %v1550, 7
      %v1552 = vsub.s32 0, %v1551
      %v1553 = vrot.slane %v1450, %v1552
      %v1554 = vlaneseq
      %v1555 = vshrl.u32 %v1554, 7
      %v1556 = vsub.s32 0, %v1555
      %v1557 = vrot.slane %v1452, %v1556
      %v1558 = vlaneseq
      %v1559 = vshrl.u32 %v1558, 7
      %v1560 = vsub.s32 0, %v1559
      %v1561 = vrot.slane %v1435, %v1560
      %v1562 = vlaneseq
      %v1563 = vshrl.u32 %v1562, 7
      %v1564 = vsub.s32 0, %v1563
      %v1565 = vrot.slane %v1449, %v1564
      %v1566 = vlaneseq
      %v1567 = vshrl.u32 %v1566, 7
      %v1568 = vsub.s32 0, %v1567
      %v1569 = vrot.slane %v1451, %v1568
      %v1570 = vlaneseq
      %v1571 = vshrl.u32 %v1570, 7
      %v1572 = vsub.s32 0, %v1571
      %v1573 = vrot.slane %v1453, %v1572
      %v1582 = vmul.f32 %v1545, %v1460
      %v1583 = vmul.f32 %v1545, %v1464
      %v1584 = vmul.f32 %v1549, %v1471
      %v1585 = vmul.f32 %v1549, %v1475
      %v1586 = vmul.f32 %v1553, %v1482
      %v1587 = vmul.f32 %v1553, %v1486
      %v1588 = vmul.f32 %v1557, %v1493
      %v1589 = vmul.f32 %v1557, %v1497
      %v1590 = vmul.f32 %v1561, %v1504
      %v1591 = vmul.f32 %v1561, %v1508
      %v1592 = vmul.f32 %v1565, %v1515
      %v1593 = vmul.f32 %v1565, %v1519
      %v1594 = vmul.f32 %v1569, %v1526
      %v1595 = vmul.f32 %v1569, %v1530
      %v1596 = vmul.f32 %v1573, %v1537
      %v1597 = vmul.f32 %v1573, %v1541
      %v1598 = vmul.f32 %v1373, %v1260
      %v1599 = vmul.f32 %v1375, %v1261
      %v1600 = vadd.f32 %v1598, %v1582
      %v1601 = vadd.f32 %v1599, %v1583
      %v1602 = vlaneseq
      %v1603 = vshrl.u32 %v1602, 7
      %v1604 = vsub.s32 0, %v1603
      %v1605 = vrot.slane %v1265, %v1604
      %1607 = vbcast.lane.b32.xlu0 %v1605, 256
      %v1608 = vpop.permute.xlu0 %1607
      %s1610 = sor.u32 256, 8
      %1611 = vbcast.lane.b32.xlu0 %v1605, %s1610
      %v1612 = vpop.permute.xlu0 %1611
      %v1613 = vmul.f32 %v1600, %v1608
      %v1614 = vmul.f32 %v1601, %v1612
      %v1615 = vsel %vm769, %v1613, 0.0
      %v1616 = vsel %vm769, %v1614, 0.0
      %v1617 = vadd.f32 %v1615, %v1616
      %v1618 = vrot.slane %v1617, 4
      %v1619 = vadd.f32 %v1617, %v1618
      %v1620 = vrot.slane %v1619, 2
      %v1621 = vadd.f32 %v1619, %v1620
      %v1622 = vrot.slane %v1621, 1
      %v1623 = vadd.f32 %v1621, %v1622
      %v1624 = vmul.f32 %v1377, %v1600
      %v1625 = vmul.f32 %v1379, %v1601
      %v1626 = vadd.f32 %v1624, %v1584
      %v1627 = vadd.f32 %v1625, %v1585
      %v1628 = vlaneseq
      %v1629 = vshrl.u32 %v1628, 7
      %v1630 = vsub.s32 1, %v1629
      %v1631 = vrot.slane %v1265, %v1630
      %1633 = vbcast.lane.b32.xlu0 %v1631, 256
      %v1634 = vpop.permute.xlu0 %1633
      %s1636 = sor.u32 256, 8
      %1637 = vbcast.lane.b32.xlu0 %v1631, %s1636
      %v1638 = vpop.permute.xlu0 %1637
      %v1639 = vmul.f32 %v1626, %v1634
      %v1640 = vmul.f32 %v1627, %v1638
      %v1641 = vsel %vm769, %v1639, 0.0
      %v1642 = vsel %vm769, %v1640, 0.0
      %v1643 = vadd.f32 %v1641, %v1642
      %v1644 = vrot.slane %v1643, 4
      %v1645 = vadd.f32 %v1643, %v1644
      %v1646 = vrot.slane %v1645, 2
      %v1647 = vadd.f32 %v1645, %v1646
      %v1648 = vrot.slane %v1647, 1
      %v1649 = vadd.f32 %v1647, %v1648
      %v1650 = vmul.f32 %v1381, %v1626
      %v1651 = vmul.f32 %v1383, %v1627
      %v1652 = vadd.f32 %v1650, %v1586
      %v1653 = vadd.f32 %v1651, %v1587
      %v1654 = vlaneseq
      %v1655 = vshrl.u32 %v1654, 7
      %v1656 = vsub.s32 2, %v1655
      %v1657 = vrot.slane %v1265, %v1656
      %1659 = vbcast.lane.b32.xlu0 %v1657, 256
      %v1660 = vpop.permute.xlu0 %1659
      %s1662 = sor.u32 256, 8
      %1663 = vbcast.lane.b32.xlu0 %v1657, %s1662
      %v1664 = vpop.permute.xlu0 %1663
      %v1665 = vmul.f32 %v1652, %v1660
      %v1666 = vmul.f32 %v1653, %v1664
      %v1667 = vsel %vm769, %v1665, 0.0
      %v1668 = vsel %vm769, %v1666, 0.0
      %v1669 = vadd.f32 %v1667, %v1668
      %v1670 = vrot.slane %v1669, 4
      %v1671 = vadd.f32 %v1669, %v1670
      %v1672 = vrot.slane %v1671, 2
      %v1673 = vadd.f32 %v1671, %v1672
      %v1674 = vrot.slane %v1673, 1
      %v1675 = vadd.f32 %v1673, %v1674
      %v1676 = vmul.f32 %v1385, %v1652
      %v1677 = vmul.f32 %v1387, %v1653
      %v1678 = vadd.f32 %v1676, %v1588
      %v1679 = vadd.f32 %v1677, %v1589
      %v1680 = vlaneseq
      %v1681 = vshrl.u32 %v1680, 7
      %v1682 = vsub.s32 3, %v1681
      %v1683 = vrot.slane %v1265, %v1682
      %1685 = vbcast.lane.b32.xlu0 %v1683, 256
      %v1686 = vpop.permute.xlu0 %1685
      %s1688 = sor.u32 256, 8
      %1689 = vbcast.lane.b32.xlu0 %v1683, %s1688
      %v1690 = vpop.permute.xlu0 %1689
      %v1691 = vmul.f32 %v1678, %v1686
      %v1692 = vmul.f32 %v1679, %v1690
      %v1693 = vsel %vm769, %v1691, 0.0
      %v1694 = vsel %vm769, %v1692, 0.0
      %v1695 = vadd.f32 %v1693, %v1694
      %v1696 = vrot.slane %v1695, 4
      %v1697 = vadd.f32 %v1695, %v1696
      %v1698 = vrot.slane %v1697, 2
      %v1699 = vadd.f32 %v1697, %v1698
      %v1700 = vrot.slane %v1699, 1
      %v1701 = vadd.f32 %v1699, %v1700
      %v1702 = vmul.f32 %v1389, %v1678
      %v1703 = vmul.f32 %v1391, %v1679
      %v1704 = vadd.f32 %v1702, %v1590
      %v1705 = vadd.f32 %v1703, %v1591
      %v1706 = vlaneseq
      %v1707 = vshrl.u32 %v1706, 7
      %v1708 = vsub.s32 4, %v1707
      %v1709 = vrot.slane %v1265, %v1708
      %1711 = vbcast.lane.b32.xlu0 %v1709, 256
      %v1712 = vpop.permute.xlu0 %1711
      %s1714 = sor.u32 256, 8
      %1715 = vbcast.lane.b32.xlu0 %v1709, %s1714
      %v1716 = vpop.permute.xlu0 %1715
      %v1717 = vmul.f32 %v1704, %v1712
      %v1718 = vmul.f32 %v1705, %v1716
      %v1719 = vsel %vm769, %v1717, 0.0
      %v1720 = vsel %vm769, %v1718, 0.0
      %v1721 = vadd.f32 %v1719, %v1720
      %v1722 = vrot.slane %v1721, 4
      %v1723 = vadd.f32 %v1721, %v1722
      %v1724 = vrot.slane %v1723, 2
      %v1725 = vadd.f32 %v1723, %v1724
      %v1726 = vrot.slane %v1725, 1
      %v1727 = vadd.f32 %v1725, %v1726
      %v1728 = vmul.f32 %v1393, %v1704
      %v1729 = vmul.f32 %v1395, %v1705
      %v1730 = vadd.f32 %v1728, %v1592
      %v1731 = vadd.f32 %v1729, %v1593
      %v1732 = vlaneseq
      %v1733 = vshrl.u32 %v1732, 7
      %v1734 = vsub.s32 5, %v1733
      %v1735 = vrot.slane %v1265, %v1734
      %1737 = vbcast.lane.b32.xlu0 %v1735, 256
      %v1738 = vpop.permute.xlu0 %1737
      %s1740 = sor.u32 256, 8
      %1741 = vbcast.lane.b32.xlu0 %v1735, %s1740
      %v1742 = vpop.permute.xlu0 %1741
      %v1743 = vmul.f32 %v1730, %v1738
      %v1744 = vmul.f32 %v1731, %v1742
      %v1745 = vsel %vm769, %v1743, 0.0
      %v1746 = vsel %vm769, %v1744, 0.0
      %v1747 = vadd.f32 %v1745, %v1746
      %v1748 = vrot.slane %v1747, 4
      %v1749 = vadd.f32 %v1747, %v1748
      %v1750 = vrot.slane %v1749, 2
      %v1751 = vadd.f32 %v1749, %v1750
      %v1752 = vrot.slane %v1751, 1
      %v1753 = vadd.f32 %v1751, %v1752
      %v1754 = vmul.f32 %v1397, %v1730
      %v1755 = vmul.f32 %v1399, %v1731
      %v1756 = vadd.f32 %v1754, %v1594
      %v1757 = vadd.f32 %v1755, %v1595
      %v1758 = vlaneseq
      %v1759 = vshrl.u32 %v1758, 7
      %v1760 = vsub.s32 6, %v1759
      %v1761 = vrot.slane %v1265, %v1760
      %1763 = vbcast.lane.b32.xlu0 %v1761, 256
      %v1764 = vpop.permute.xlu0 %1763
      %s1766 = sor.u32 256, 8
      %1767 = vbcast.lane.b32.xlu0 %v1761, %s1766
      %v1768 = vpop.permute.xlu0 %1767
      %v1769 = vmul.f32 %v1756, %v1764
      %v1770 = vmul.f32 %v1757, %v1768
      %v1771 = vsel %vm769, %v1769, 0.0
      %v1772 = vsel %vm769, %v1770, 0.0
      %v1773 = vadd.f32 %v1771, %v1772
      %v1774 = vrot.slane %v1773, 4
      %v1775 = vadd.f32 %v1773, %v1774
      %v1776 = vrot.slane %v1775, 2
      %v1777 = vadd.f32 %v1775, %v1776
      %v1778 = vrot.slane %v1777, 1
      %v1779 = vadd.f32 %v1777, %v1778
      %v1780 = vmul.f32 %v1401, %v1756
      %v1781 = vmul.f32 %v1403, %v1757
      %v1782 = vadd.f32 %v1780, %v1596
      %v1783 = vadd.f32 %v1781, %v1597
      %v1784 = vlaneseq
      %v1785 = vshrl.u32 %v1784, 7
      %v1786 = vsub.s32 7, %v1785
      %v1787 = vrot.slane %v1265, %v1786
      %1789 = vbcast.lane.b32.xlu0 %v1787, 256
      %v1790 = vpop.permute.xlu0 %1789
      %s1792 = sor.u32 256, 8
      %1793 = vbcast.lane.b32.xlu0 %v1787, %s1792
      %v1794 = vpop.permute.xlu0 %1793
      %v1795 = vmul.f32 %v1782, %v1790
      %v1796 = vmul.f32 %v1783, %v1794
      %v1797 = vsel %vm769, %v1795, 0.0
      %v1798 = vsel %vm769, %v1796, 0.0
      %v1799 = vadd.f32 %v1797, %v1798
      %v1800 = vrot.slane %v1799, 4
      %v1801 = vadd.f32 %v1799, %v1800
      %v1802 = vrot.slane %v1801, 2
      %v1803 = vadd.f32 %v1801, %v1802
      %v1804 = vrot.slane %v1803, 1
      %v1805 = vadd.f32 %v1803, %v1804
      %vm1806 = vcmask 1040384
      %v1807 = vsel %vm1806, %v1623, %v1649
      %vm1808 = vcmask 1041408
      %v1809 = vsel %vm1808, %v1807, %v1675
      %v1810 = vsel %vm949, %v1809, %v1701
      %vm1811 = vcmask 1043456
      %v1812 = vsel %vm1811, %v1810, %v1727
      %v1813 = vsel %vm876, %v1812, %v1753
      %v1814 = vsel %vm843, %v1813, %v1779
      %v1815 = vsel %vm808, %v1814, %v1805
      %1816 = vst.msk [vmem:[#allocation8] sm:$0xff] %vm769, %v1815
      %s1817 = scalar_lea.vmem [#allocation4], 8
      %v1818 = vld [vmem:[%s1817] sm:$0xff]
      %s1819 = scalar_lea.vmem [#allocation5], 8
      %v1820 = vld [vmem:[%s1819] sm:$0xff]
      %s1821 = scalar_lea.vmem [#allocation6], 8
      %v1822 = vld [vmem:[%s1821] sm:$0xff]
      %s1823 = scalar_lea.vmem [#allocation7], 8
      %v1824 = vld [vmem:[%s1823] sm:$0xff]
      %v1826 = vcombine.high %v1818, %v1818
      %v1828 = vunpack.c.l.s4 1966171168
      %v1829 = vunpack.c.0.s8 %v1828
      %v1830 = vlaneseq
      %v1831 = vshrl.u32 %v1830, 7
      %v1832 = vsub.s32 %v1829, %v1831
      %v1833 = vrot.slane %v1818, %v1832
      %v1835 = vunpack.c.l.s4 1966171168
      %v1836 = vunpack.c.0.s8 %v1835
      %v1837 = vlaneseq
      %v1838 = vshrl.u32 %v1837, 7
      %v1839 = vsub.s32 %v1836, %v1838
      %v1840 = vrot.slane %v1826, %v1839
      %v1841 = vcombine.high %v1833, %v1833
      %v1842 = vcombine.high %v1840, %v1840
      %v1844 = vunpack.c.l.s4 1966171168
      %v1845 = vunpack.c.0.s8 %v1844
      %v1846 = vlaneseq
      %v1847 = vshrl.u32 %v1846, 7
      %v1848 = vsub.s32 %v1845, %v1847
      %v1849 = vrot.slane %v1833, %v1848
      %v1851 = vunpack.c.l.s4 1966171168
      %v1852 = vunpack.c.0.s8 %v1851
      %v1853 = vlaneseq
      %v1854 = vshrl.u32 %v1853, 7
      %v1855 = vsub.s32 %v1852, %v1854
      %v1856 = vrot.slane %v1840, %v1855
      %v1858 = vunpack.c.l.s4 1966171168
      %v1859 = vunpack.c.0.s8 %v1858
      %v1860 = vlaneseq
      %v1861 = vshrl.u32 %v1860, 7
      %v1862 = vsub.s32 %v1859, %v1861
      %v1863 = vrot.slane %v1841, %v1862
      %v1865 = vunpack.c.l.s4 1966171168
      %v1866 = vunpack.c.0.s8 %v1865
      %v1867 = vlaneseq
      %v1868 = vshrl.u32 %v1867, 7
      %v1869 = vsub.s32 %v1866, %v1868
      %v1870 = vrot.slane %v1842, %v1869
      %v1871 = vcombine.high %v1849, %v1849
      %v1872 = vcombine.high %v1856, %v1856
      %v1873 = vcombine.high %v1863, %v1863
      %v1874 = vcombine.high %v1870, %v1870
      %v1875 = vlaneseq
      %v1876 = vshrl.u32 %v1875, 7
      %v1877 = vsub.s32 0, %v1876
      %v1878 = vrot.slane %v1849, %v1877
      %v1879 = vlaneseq
      %v1880 = vshrl.u32 %v1879, 7
      %v1881 = vsub.s32 0, %v1880
      %v1882 = vrot.slane %v1863, %v1881
      %v1883 = vlaneseq
      %v1884 = vshrl.u32 %v1883, 7
      %v1885 = vsub.s32 0, %v1884
      %v1886 = vrot.slane %v1871, %v1885
      %v1887 = vlaneseq
      %v1888 = vshrl.u32 %v1887, 7
      %v1889 = vsub.s32 0, %v1888
      %v1890 = vrot.slane %v1873, %v1889
      %v1891 = vlaneseq
      %v1892 = vshrl.u32 %v1891, 7
      %v1893 = vsub.s32 0, %v1892
      %v1894 = vrot.slane %v1856, %v1893
      %v1895 = vlaneseq
      %v1896 = vshrl.u32 %v1895, 7
      %v1897 = vsub.s32 0, %v1896
      %v1898 = vrot.slane %v1870, %v1897
      %v1899 = vlaneseq
      %v1900 = vshrl.u32 %v1899, 7
      %v1901 = vsub.s32 0, %v1900
      %v1902 = vrot.slane %v1872, %v1901
      %v1903 = vlaneseq
      %v1904 = vshrl.u32 %v1903, 7
      %v1905 = vsub.s32 0, %v1904
      %v1906 = vrot.slane %v1874, %v1905
      %v1915 = vmul.f32 %v1878, %v1258
      %v1916 = vmul.f32 %v1878, %v1259
      %v1917 = vmul.f32 %v1882, %v1258
      %v1918 = vmul.f32 %v1882, %v1259
      %v1919 = vmul.f32 %v1886, %v1258
      %v1920 = vmul.f32 %v1886, %v1259
      %v1921 = vmul.f32 %v1890, %v1258
      %v1922 = vmul.f32 %v1890, %v1259
      %v1923 = vmul.f32 %v1894, %v1258
      %v1924 = vmul.f32 %v1894, %v1259
      %v1925 = vmul.f32 %v1898, %v1258
      %v1926 = vmul.f32 %v1898, %v1259
      %v1927 = vmul.f32 %v1902, %v1258
      %v1928 = vmul.f32 %v1902, %v1259
      %v1929 = vmul.f32 %v1906, %v1258
      %v1930 = vmul.f32 %v1906, %v1259
      %v1931 = vmul.f32 %v1915, 1.442695
      %v1932 = vpow.pop %v1931
      %v1933 = vmul.f32 %v1916, 1.442695
      %v1934 = vpow.pop %v1933
      %v1935 = vmul.f32 %v1917, 1.442695
      %v1936 = vpow.pop %v1935
      %v1937 = vmul.f32 %v1918, 1.442695
      %v1938 = vpow.pop %v1937
      %v1939 = vmul.f32 %v1919, 1.442695
      %v1940 = vpow.pop %v1939
      %v1941 = vmul.f32 %v1920, 1.442695
      %v1942 = vpow.pop %v1941
      %v1943 = vmul.f32 %v1921, 1.442695
      %v1944 = vpow.pop %v1943
      %v1945 = vmul.f32 %v1922, 1.442695
      %v1946 = vpow.pop %v1945
      %v1947 = vmul.f32 %v1923, 1.442695
      %v1948 = vpow.pop %v1947
      %v1949 = vmul.f32 %v1924, 1.442695
      %v1950 = vpow.pop %v1949
      %v1951 = vmul.f32 %v1925, 1.442695
      %v1952 = vpow.pop %v1951
      %v1953 = vmul.f32 %v1926, 1.442695
      %v1954 = vpow.pop %v1953
      %v1955 = vmul.f32 %v1927, 1.442695
      %v1956 = vpow.pop %v1955
      %v1957 = vmul.f32 %v1928, 1.442695
      %v1958 = vpow.pop %v1957
      %v1959 = vmul.f32 %v1929, 1.442695
      %v1960 = vpow.pop %v1959
      %v1961 = vmul.f32 %v1930, 1.442695
      %v1962 = vpow.pop %v1961
      %v1964 = vcombine.high %v1820, %v1820
      %v1966 = vunpack.c.l.s4 1966171168
      %v1967 = vunpack.c.0.s8 %v1966
      %v1968 = vlaneseq
      %v1969 = vshrl.u32 %v1968, 7
      %v1970 = vsub.s32 %v1967, %v1969
      %v1971 = vrot.slane %v1820, %v1970
      %v1973 = vunpack.c.l.s4 1966171168
      %v1974 = vunpack.c.0.s8 %v1973
      %v1975 = vlaneseq
      %v1976 = vshrl.u32 %v1975, 7
      %v1977 = vsub.s32 %v1974, %v1976
      %v1978 = vrot.slane %v1964, %v1977
      %v1979 = vcombine.high %v1971, %v1971
      %v1980 = vcombine.high %v1978, %v1978
      %v1982 = vunpack.c.l.s4 1966171168
      %v1983 = vunpack.c.0.s8 %v1982
      %v1984 = vlaneseq
      %v1985 = vshrl.u32 %v1984, 7
      %v1986 = vsub.s32 %v1983, %v1985
      %v1987 = vrot.slane %v1971, %v1986
      %v1989 = vunpack.c.l.s4 1966171168
      %v1990 = vunpack.c.0.s8 %v1989
      %v1991 = vlaneseq
      %v1992 = vshrl.u32 %v1991, 7
      %v1993 = vsub.s32 %v1990, %v1992
      %v1994 = vrot.slane %v1978, %v1993
      %v1996 = vunpack.c.l.s4 1966171168
      %v1997 = vunpack.c.0.s8 %v1996
      %v1998 = vlaneseq
      %v1999 = vshrl.u32 %v1998, 7
      %v2000 = vsub.s32 %v1997, %v1999
      %v2001 = vrot.slane %v1979, %v2000
      %v2003 = vunpack.c.l.s4 1966171168
      %v2004 = vunpack.c.0.s8 %v2003
      %v2005 = vlaneseq
      %v2006 = vshrl.u32 %v2005, 7
      %v2007 = vsub.s32 %v2004, %v2006
      %v2008 = vrot.slane %v1980, %v2007
      %v2009 = vcombine.high %v1987, %v1987
      %v2010 = vcombine.high %v1994, %v1994
      %v2011 = vcombine.high %v2001, %v2001
      %v2012 = vcombine.high %v2008, %v2008
      %v2013 = vlaneseq
      %v2014 = vshrl.u32 %v2013, 7
      %v2015 = vsub.s32 0, %v2014
      %v2016 = vrot.slane %v1822, %v2015
      %2018 = vbcast.lane.b32.xlu0 %v2016, 256
      %v2019 = vpop.permute.xlu0 %2018
      %s2021 = sor.u32 256, 8
      %2022 = vbcast.lane.b32.xlu0 %v2016, %s2021
      %v2023 = vpop.permute.xlu0 %2022
      %v2024 = vlaneseq
      %v2025 = vshrl.u32 %v2024, 7
      %v2026 = vsub.s32 1, %v2025
      %v2027 = vrot.slane %v1822, %v2026
      %2029 = vbcast.lane.b32.xlu0 %v2027, 256
      %v2030 = vpop.permute.xlu0 %2029
      %s2032 = sor.u32 256, 8
      %2033 = vbcast.lane.b32.xlu0 %v2027, %s2032
      %v2034 = vpop.permute.xlu0 %2033
      %v2035 = vlaneseq
      %v2036 = vshrl.u32 %v2035, 7
      %v2037 = vsub.s32 2, %v2036
      %v2038 = vrot.slane %v1822, %v2037
      %2040 = vbcast.lane.b32.xlu0 %v2038, 256
      %v2041 = vpop.permute.xlu0 %2040
      %s2043 = sor.u32 256, 8
      %2044 = vbcast.lane.b32.xlu0 %v2038, %s2043
      %v2045 = vpop.permute.xlu0 %2044
      %v2046 = vlaneseq
      %v2047 = vshrl.u32 %v2046, 7
      %v2048 = vsub.s32 3, %v2047
      %v2049 = vrot.slane %v1822, %v2048
      %2051 = vbcast.lane.b32.xlu0 %v2049, 256
      %v2052 = vpop.permute.xlu0 %2051
      %s2054 = sor.u32 256, 8
      %2055 = vbcast.lane.b32.xlu0 %v2049, %s2054
      %v2056 = vpop.permute.xlu0 %2055
      %v2057 = vlaneseq
      %v2058 = vshrl.u32 %v2057, 7
      %v2059 = vsub.s32 4, %v2058
      %v2060 = vrot.slane %v1822, %v2059
      %2062 = vbcast.lane.b32.xlu0 %v2060, 256
      %v2063 = vpop.permute.xlu0 %2062
      %s2065 = sor.u32 256, 8
      %2066 = vbcast.lane.b32.xlu0 %v2060, %s2065
      %v2067 = vpop.permute.xlu0 %2066
      %v2068 = vlaneseq
      %v2069 = vshrl.u32 %v2068, 7
      %v2070 = vsub.s32 5, %v2069
      %v2071 = vrot.slane %v1822, %v2070
      %2073 = vbcast.lane.b32.xlu0 %v2071, 256
      %v2074 = vpop.permute.xlu0 %2073
      %s2076 = sor.u32 256, 8
      %2077 = vbcast.lane.b32.xlu0 %v2071, %s2076
      %v2078 = vpop.permute.xlu0 %2077
      %v2079 = vlaneseq
      %v2080 = vshrl.u32 %v2079, 7
      %v2081 = vsub.s32 6, %v2080
      %v2082 = vrot.slane %v1822, %v2081
      %2084 = vbcast.lane.b32.xlu0 %v2082, 256
      %v2085 = vpop.permute.xlu0 %2084
      %s2087 = sor.u32 256, 8
      %2088 = vbcast.lane.b32.xlu0 %v2082, %s2087
      %v2089 = vpop.permute.xlu0 %2088
      %v2090 = vlaneseq
      %v2091 = vshrl.u32 %v2090, 7
      %v2092 = vsub.s32 7, %v2091
      %v2093 = vrot.slane %v1822, %v2092
      %2095 = vbcast.lane.b32.xlu0 %v2093, 256
      %v2096 = vpop.permute.xlu0 %2095
      %s2098 = sor.u32 256, 8
      %2099 = vbcast.lane.b32.xlu0 %v2093, %s2098
      %v2100 = vpop.permute.xlu0 %2099
      %v2101 = vlaneseq
      %v2102 = vshrl.u32 %v2101, 7
      %v2103 = vsub.s32 0, %v2102
      %v2104 = vrot.slane %v1987, %v2103
      %v2105 = vlaneseq
      %v2106 = vshrl.u32 %v2105, 7
      %v2107 = vsub.s32 0, %v2106
      %v2108 = vrot.slane %v2001, %v2107
      %v2109 = vlaneseq
      %v2110 = vshrl.u32 %v2109, 7
      %v2111 = vsub.s32 0, %v2110
      %v2112 = vrot.slane %v2009, %v2111
      %v2113 = vlaneseq
      %v2114 = vshrl.u32 %v2113, 7
      %v2115 = vsub.s32 0, %v2114
      %v2116 = vrot.slane %v2011, %v2115
      %v2117 = vlaneseq
      %v2118 = vshrl.u32 %v2117, 7
      %v2119 = vsub.s32 0, %v2118
      %v2120 = vrot.slane %v1994, %v2119
      %v2121 = vlaneseq
      %v2122 = vshrl.u32 %v2121, 7
      %v2123 = vsub.s32 0, %v2122
      %v2124 = vrot.slane %v2008, %v2123
      %v2125 = vlaneseq
      %v2126 = vshrl.u32 %v2125, 7
      %v2127 = vsub.s32 0, %v2126
      %v2128 = vrot.slane %v2010, %v2127
      %v2129 = vlaneseq
      %v2130 = vshrl.u32 %v2129, 7
      %v2131 = vsub.s32 0, %v2130
      %v2132 = vrot.slane %v2012, %v2131
      %v2141 = vmul.f32 %v2104, %v2019
      %v2142 = vmul.f32 %v2104, %v2023
      %v2143 = vmul.f32 %v2108, %v2030
      %v2144 = vmul.f32 %v2108, %v2034
      %v2145 = vmul.f32 %v2112, %v2041
      %v2146 = vmul.f32 %v2112, %v2045
      %v2147 = vmul.f32 %v2116, %v2052
      %v2148 = vmul.f32 %v2116, %v2056
      %v2149 = vmul.f32 %v2120, %v2063
      %v2150 = vmul.f32 %v2120, %v2067
      %v2151 = vmul.f32 %v2124, %v2074
      %v2152 = vmul.f32 %v2124, %v2078
      %v2153 = vmul.f32 %v2128, %v2085
      %v2154 = vmul.f32 %v2128, %v2089
      %v2155 = vmul.f32 %v2132, %v2096
      %v2156 = vmul.f32 %v2132, %v2100
      %v2157 = vmul.f32 %v1932, %v1782
      %v2158 = vmul.f32 %v1934, %v1783
      %v2159 = vadd.f32 %v2157, %v2141
      %v2160 = vadd.f32 %v2158, %v2142
      %v2161 = vlaneseq
      %v2162 = vshrl.u32 %v2161, 7
      %v2163 = vsub.s32 0, %v2162
      %v2164 = vrot.slane %v1824, %v2163
      %2166 = vbcast.lane.b32.xlu0 %v2164, 256
      %v2167 = vpop.permute.xlu0 %2166
      %s2169 = sor.u32 256, 8
      %2170 = vbcast.lane.b32.xlu0 %v2164, %s2169
      %v2171 = vpop.permute.xlu0 %2170
      %v2172 = vmul.f32 %v2159, %v2167
      %v2173 = vmul.f32 %v2160, %v2171
      %v2174 = vsel %vm769, %v2172, 0.0
      %v2175 = vsel %vm769, %v2173, 0.0
      %v2176 = vadd.f32 %v2174, %v2175
      %v2177 = vrot.slane %v2176, 4
      %v2178 = vadd.f32 %v2176, %v2177
      %v2179 = vrot.slane %v2178, 2
      %v2180 = vadd.f32 %v2178, %v2179
      %v2181 = vrot.slane %v2180, 1
      %v2182 = vadd.f32 %v2180, %v2181
      %v2183 = vmul.f32 %v1936, %v2159
      %v2184 = vmul.f32 %v1938, %v2160
      %v2185 = vadd.f32 %v2183, %v2143
      %v2186 = vadd.f32 %v2184, %v2144
      %v2187 = vlaneseq
      %v2188 = vshrl.u32 %v2187, 7
      %v2189 = vsub.s32 1, %v2188
      %v2190 = vrot.slane %v1824, %v2189
      %2192 = vbcast.lane.b32.xlu0 %v2190, 256
      %v2193 = vpop.permute.xlu0 %2192
      %s2195 = sor.u32 256, 8
      %2196 = vbcast.lane.b32.xlu0 %v2190, %s2195
      %v2197 = vpop.permute.xlu0 %2196
      %v2198 = vmul.f32 %v2185, %v2193
      %v2199 = vmul.f32 %v2186, %v2197
      %v2200 = vsel %vm769, %v2198, 0.0
      %v2201 = vsel %vm769, %v2199, 0.0
      %v2202 = vadd.f32 %v2200, %v2201
      %v2203 = vrot.slane %v2202, 4
      %v2204 = vadd.f32 %v2202, %v2203
      %v2205 = vrot.slane %v2204, 2
      %v2206 = vadd.f32 %v2204, %v2205
      %v2207 = vrot.slane %v2206, 1
      %v2208 = vadd.f32 %v2206, %v2207
      %v2209 = vmul.f32 %v1940, %v2185
      %v2210 = vmul.f32 %v1942, %v2186
      %v2211 = vadd.f32 %v2209, %v2145
      %v2212 = vadd.f32 %v2210, %v2146
      %v2213 = vlaneseq
      %v2214 = vshrl.u32 %v2213, 7
      %v2215 = vsub.s32 2, %v2214
      %v2216 = vrot.slane %v1824, %v2215
      %2218 = vbcast.lane.b32.xlu0 %v2216, 256
      %v2219 = vpop.permute.xlu0 %2218
      %s2221 = sor.u32 256, 8
      %2222 = vbcast.lane.b32.xlu0 %v2216, %s2221
      %v2223 = vpop.permute.xlu0 %2222
      %v2224 = vmul.f32 %v2211, %v2219
      %v2225 = vmul.f32 %v2212, %v2223
      %v2226 = vsel %vm769, %v2224, 0.0
      %v2227 = vsel %vm769, %v2225, 0.0
      %v2228 = vadd.f32 %v2226, %v2227
      %v2229 = vrot.slane %v2228, 4
      %v2230 = vadd.f32 %v2228, %v2229
      %v2231 = vrot.slane %v2230, 2
      %v2232 = vadd.f32 %v2230, %v2231
      %v2233 = vrot.slane %v2232, 1
      %v2234 = vadd.f32 %v2232, %v2233
      %v2235 = vmul.f32 %v1944, %v2211
      %v2236 = vmul.f32 %v1946, %v2212
      %v2237 = vadd.f32 %v2235, %v2147
      %v2238 = vadd.f32 %v2236, %v2148
      %v2239 = vlaneseq
      %v2240 = vshrl.u32 %v2239, 7
      %v2241 = vsub.s32 3, %v2240
      %v2242 = vrot.slane %v1824, %v2241
      %2244 = vbcast.lane.b32.xlu0 %v2242, 256
      %v2245 = vpop.permute.xlu0 %2244
      %s2247 = sor.u32 256, 8
      %2248 = vbcast.lane.b32.xlu0 %v2242, %s2247
      %v2249 = vpop.permute.xlu0 %2248
      %v2250 = vmul.f32 %v2237, %v2245
      %v2251 = vmul.f32 %v2238, %v2249
      %v2252 = vsel %vm769, %v2250, 0.0
      %v2253 = vsel %vm769, %v2251, 0.0
      %v2254 = vadd.f32 %v2252, %v2253
      %v2255 = vrot.slane %v2254, 4
      %v2256 = vadd.f32 %v2254, %v2255
      %v2257 = vrot.slane %v2256, 2
      %v2258 = vadd.f32 %v2256, %v2257
      %v2259 = vrot.slane %v2258, 1
      %v2260 = vadd.f32 %v2258, %v2259
      %v2261 = vmul.f32 %v1948, %v2237
      %v2262 = vmul.f32 %v1950, %v2238
      %v2263 = vadd.f32 %v2261, %v2149
      %v2264 = vadd.f32 %v2262, %v2150
      %v2265 = vlaneseq
      %v2266 = vshrl.u32 %v2265, 7
      %v2267 = vsub.s32 4, %v2266
      %v2268 = vrot.slane %v1824, %v2267
      %2270 = vbcast.lane.b32.xlu0 %v2268, 256
      %v2271 = vpop.permute.xlu0 %2270
      %s2273 = sor.u32 256, 8
      %2274 = vbcast.lane.b32.xlu0 %v2268, %s2273
      %v2275 = vpop.permute.xlu0 %2274
      %v2276 = vmul.f32 %v2263, %v2271
      %v2277 = vmul.f32 %v2264, %v2275
      %v2278 = vsel %vm769, %v2276, 0.0
      %v2279 = vsel %vm769, %v2277, 0.0
      %v2280 = vadd.f32 %v2278, %v2279
      %v2281 = vrot.slane %v2280, 4
      %v2282 = vadd.f32 %v2280, %v2281
      %v2283 = vrot.slane %v2282, 2
      %v2284 = vadd.f32 %v2282, %v2283
      %v2285 = vrot.slane %v2284, 1
      %v2286 = vadd.f32 %v2284, %v2285
      %v2287 = vmul.f32 %v1952, %v2263
      %v2288 = vmul.f32 %v1954, %v2264
      %v2289 = vadd.f32 %v2287, %v2151
      %v2290 = vadd.f32 %v2288, %v2152
      %v2291 = vlaneseq
      %v2292 = vshrl.u32 %v2291, 7
      %v2293 = vsub.s32 5, %v2292
      %v2294 = vrot.slane %v1824, %v2293
      %2296 = vbcast.lane.b32.xlu0 %v2294, 256
      %v2297 = vpop.permute.xlu0 %2296
      %s2299 = sor.u32 256, 8
      %2300 = vbcast.lane.b32.xlu0 %v2294, %s2299
      %v2301 = vpop.permute.xlu0 %2300
      %v2302 = vmul.f32 %v2289, %v2297
      %v2303 = vmul.f32 %v2290, %v2301
      %v2304 = vsel %vm769, %v2302, 0.0
      %v2305 = vsel %vm769, %v2303, 0.0
      %v2306 = vadd.f32 %v2304, %v2305
      %v2307 = vrot.slane %v2306, 4
      %v2308 = vadd.f32 %v2306, %v2307
      %v2309 = vrot.slane %v2308, 2
      %v2310 = vadd.f32 %v2308, %v2309
      %v2311 = vrot.slane %v2310, 1
      %v2312 = vadd.f32 %v2310, %v2311
      %v2313 = vmul.f32 %v1956, %v2289
      %v2314 = vmul.f32 %v1958, %v2290
      %v2315 = vadd.f32 %v2313, %v2153
      %v2316 = vadd.f32 %v2314, %v2154
      %v2317 = vlaneseq
      %v2318 = vshrl.u32 %v2317, 7
      %v2319 = vsub.s32 6, %v2318
      %v2320 = vrot.slane %v1824, %v2319
      %2322 = vbcast.lane.b32.xlu0 %v2320, 256
      %v2323 = vpop.permute.xlu0 %2322
      %s2325 = sor.u32 256, 8
      %2326 = vbcast.lane.b32.xlu0 %v2320, %s2325
      %v2327 = vpop.permute.xlu0 %2326
      %v2328 = vmul.f32 %v2315, %v2323
      %v2329 = vmul.f32 %v2316, %v2327
      %v2330 = vsel %vm769, %v2328, 0.0
      %v2331 = vsel %vm769, %v2329, 0.0
      %v2332 = vadd.f32 %v2330, %v2331
      %v2333 = vrot.slane %v2332, 4
      %v2334 = vadd.f32 %v2332, %v2333
      %v2335 = vrot.slane %v2334, 2
      %v2336 = vadd.f32 %v2334, %v2335
      %v2337 = vrot.slane %v2336, 1
      %v2338 = vadd.f32 %v2336, %v2337
      %v2339 = vmul.f32 %v1960, %v2315
      %v2340 = vmul.f32 %v1962, %v2316
      %v2341 = vadd.f32 %v2339, %v2155
      %v2342 = vadd.f32 %v2340, %v2156
      %v2343 = vlaneseq
      %v2344 = vshrl.u32 %v2343, 7
      %v2345 = vsub.s32 7, %v2344
      %v2346 = vrot.slane %v1824, %v2345
      %2348 = vbcast.lane.b32.xlu0 %v2346, 256
      %v2349 = vpop.permute.xlu0 %2348
      %s2351 = sor.u32 256, 8
      %2352 = vbcast.lane.b32.xlu0 %v2346, %s2351
      %v2353 = vpop.permute.xlu0 %2352
      %v2354 = vmul.f32 %v2341, %v2349
      %v2355 = vmul.f32 %v2342, %v2353
      %v2356 = vsel %vm769, %v2354, 0.0
      %v2357 = vsel %vm769, %v2355, 0.0
      %v2358 = vadd.f32 %v2356, %v2357
      %v2359 = vrot.slane %v2358, 4
      %v2360 = vadd.f32 %v2358, %v2359
      %v2361 = vrot.slane %v2360, 2
      %v2362 = vadd.f32 %v2360, %v2361
      %v2363 = vrot.slane %v2362, 1
      %v2364 = vadd.f32 %v2362, %v2363
      %v2365 = vsel %vm1806, %v2182, %v2208
      %v2366 = vsel %vm1808, %v2365, %v2234
      %v2367 = vsel %vm949, %v2366, %v2260
      %v2368 = vsel %vm1811, %v2367, %v2286
      %v2369 = vsel %vm876, %v2368, %v2312
      %v2370 = vsel %vm843, %v2369, %v2338
      %v2371 = vsel %vm808, %v2370, %v2364
      %s2372 = scalar_lea.vmem [#allocation8], 8
      %2373 = vst.msk [vmem:[%s2372] sm:$0xff] %vm769, %v2371
      %s2374 = scalar_lea.vmem [#allocation4], 16
      %v2375 = vld [vmem:[%s2374] sm:$0xff]
      %s2376 = scalar_lea.vmem [#allocation5], 16
      %v2377 = vld [vmem:[%s2376] sm:$0xff]
      %s2378 = scalar_lea.vmem [#allocation6], 16
      %v2379 = vld [vmem:[%s2378] sm:$0xff]
      %s2380 = scalar_lea.vmem [#allocation7], 16
      %v2381 = vld [vmem:[%s2380] sm:$0xff]
      %v2383 = vcombine.high %v2375, %v2375
      %v2385 = vunpack.c.l.s4 1966171168
      %v2386 = vunpack.c.0.s8 %v2385
      %v2387 = vlaneseq
      %v2388 = vshrl.u32 %v2387, 7
      %v2389 = vsub.s32 %v2386, %v2388
      %v2390 = vrot.slane %v2375, %v2389
      %v2392 = vunpack.c.l.s4 1966171168
      %v2393 = vunpack.c.0.s8 %v2392
      %v2394 = vlaneseq
      %v2395 = vshrl.u32 %v2394, 7
      %v2396 = vsub.s32 %v2393, %v2395
      %v2397 = vrot.slane %v2383, %v2396
      %v2398 = vcombine.high %v2390, %v2390
      %v2399 = vcombine.high %v2397, %v2397
      %v2401 = vunpack.c.l.s4 1966171168
      %v2402 = vunpack.c.0.s8 %v2401
      %v2403 = vlaneseq
      %v2404 = vshrl.u32 %v2403, 7
      %v2405 = vsub.s32 %v2402, %v2404
      %v2406 = vrot.slane %v2390, %v2405
      %v2408 = vunpack.c.l.s4 1966171168
      %v2409 = vunpack.c.0.s8 %v2408
      %v2410 = vlaneseq
      %v2411 = vshrl.u32 %v2410, 7
      %v2412 = vsub.s32 %v2409, %v2411
      %v2413 = vrot.slane %v2397, %v2412
      %v2415 = vunpack.c.l.s4 1966171168
      %v2416 = vunpack.c.0.s8 %v2415
      %v2417 = vlaneseq
      %v2418 = vshrl.u32 %v2417, 7
      %v2419 = vsub.s32 %v2416, %v2418
      %v2420 = vrot.slane %v2398, %v2419
      %v2422 = vunpack.c.l.s4 1966171168
      %v2423 = vunpack.c.0.s8 %v2422
      %v2424 = vlaneseq
      %v2425 = vshrl.u32 %v2424, 7
      %v2426 = vsub.s32 %v2423, %v2425
      %v2427 = vrot.slane %v2399, %v2426
      %v2428 = vcombine.high %v2406, %v2406
      %v2429 = vcombine.high %v2413, %v2413
      %v2430 = vcombine.high %v2420, %v2420
      %v2431 = vcombine.high %v2427, %v2427
      %v2432 = vlaneseq
      %v2433 = vshrl.u32 %v2432, 7
      %v2434 = vsub.s32 0, %v2433
      %v2435 = vrot.slane %v2406, %v2434
      %v2436 = vlaneseq
      %v2437 = vshrl.u32 %v2436, 7
      %v2438 = vsub.s32 0, %v2437
      %v2439 = vrot.slane %v2420, %v2438
      %v2440 = vlaneseq
      %v2441 = vshrl.u32 %v2440, 7
      %v2442 = vsub.s32 0, %v2441
      %v2443 = vrot.slane %v2428, %v2442
      %v2444 = vlaneseq
      %v2445 = vshrl.u32 %v2444, 7
      %v2446 = vsub.s32 0, %v2445
      %v2447 = vrot.slane %v2430, %v2446
      %v2448 = vlaneseq
      %v2449 = vshrl.u32 %v2448, 7
      %v2450 = vsub.s32 0, %v2449
      %v2451 = vrot.slane %v2413, %v2450
      %v2452 = vlaneseq
      %v2453 = vshrl.u32 %v2452, 7
      %v2454 = vsub.s32 0, %v2453
      %v2455 = vrot.slane %v2427, %v2454
      %v2456 = vlaneseq
      %v2457 = vshrl.u32 %v2456, 7
      %v2458 = vsub.s32 0, %v2457
      %v2459 = vrot.slane %v2429, %v2458
      %v2460 = vlaneseq
      %v2461 = vshrl.u32 %v2460, 7
      %v2462 = vsub.s32 0, %v2461
      %v2463 = vrot.slane %v2431, %v2462
      %v2472 = vmul.f32 %v2435, %v1258
      %v2473 = vmul.f32 %v2435, %v1259
      %v2474 = vmul.f32 %v2439, %v1258
      %v2475 = vmul.f32 %v2439, %v1259
      %v2476 = vmul.f32 %v2443, %v1258
      %v2477 = vmul.f32 %v2443, %v1259
      %v2478 = vmul.f32 %v2447, %v1258
      %v2479 = vmul.f32 %v2447, %v1259
      %v2480 = vmul.f32 %v2451, %v1258
      %v2481 = vmul.f32 %v2451, %v1259
      %v2482 = vmul.f32 %v2455, %v1258
      %v2483 = vmul.f32 %v2455, %v1259
      %v2484 = vmul.f32 %v2459, %v1258
      %v2485 = vmul.f32 %v2459, %v1259
      %v2486 = vmul.f32 %v2463, %v1258
      %v2487 = vmul.f32 %v2463, %v1259
      %v2488 = vmul.f32 %v2472, 1.442695
      %v2489 = vpow.pop %v2488
      %v2490 = vmul.f32 %v2473, 1.442695
      %v2491 = vpow.pop %v2490
      %v2492 = vmul.f32 %v2474, 1.442695
      %v2493 = vpow.pop %v2492
      %v2494 = vmul.f32 %v2475, 1.442695
      %v2495 = vpow.pop %v2494
      %v2496 = vmul.f32 %v2476, 1.442695
      %v2497 = vpow.pop %v2496
      %v2498 = vmul.f32 %v2477, 1.442695
      %v2499 = vpow.pop %v2498
      %v2500 = vmul.f32 %v2478, 1.442695
      %v2501 = vpow.pop %v2500
      %v2502 = vmul.f32 %v2479, 1.442695
      %v2503 = vpow.pop %v2502
      %v2504 = vmul.f32 %v2480, 1.442695
      %v2505 = vpow.pop %v2504
      %v2506 = vmul.f32 %v2481, 1.442695
      %v2507 = vpow.pop %v2506
      %v2508 = vmul.f32 %v2482, 1.442695
      %v2509 = vpow.pop %v2508
      %v2510 = vmul.f32 %v2483, 1.442695
      %v2511 = vpow.pop %v2510
      %v2512 = vmul.f32 %v2484, 1.442695
      %v2513 = vpow.pop %v2512
      %v2514 = vmul.f32 %v2485, 1.442695
      %v2515 = vpow.pop %v2514
      %v2516 = vmul.f32 %v2486, 1.442695
      %v2517 = vpow.pop %v2516
      %v2518 = vmul.f32 %v2487, 1.442695
      %v2519 = vpow.pop %v2518
      %v2521 = vcombine.high %v2377, %v2377
      %v2523 = vunpack.c.l.s4 1966171168
      %v2524 = vunpack.c.0.s8 %v2523
      %v2525 = vlaneseq
      %v2526 = vshrl.u32 %v2525, 7
      %v2527 = vsub.s32 %v2524, %v2526
      %v2528 = vrot.slane %v2377, %v2527
      %v2530 = vunpack.c.l.s4 1966171168
      %v2531 = vunpack.c.0.s8 %v2530
      %v2532 = vlaneseq
      %v2533 = vshrl.u32 %v2532, 7
      %v2534 = vsub.s32 %v2531, %v2533
      %v2535 = vrot.slane %v2521, %v2534
      %v2536 = vcombine.high %v2528, %v2528
      %v2537 = vcombine.high %v2535, %v2535
      %v2539 = vunpack.c.l.s4 1966171168
      %v2540 = vunpack.c.0.s8 %v2539
      %v2541 = vlaneseq
      %v2542 = vshrl.u32 %v2541, 7
      %v2543 = vsub.s32 %v2540, %v2542
      %v2544 = vrot.slane %v2528, %v2543
      %v2546 = vunpack.c.l.s4 1966171168
      %v2547 = vunpack.c.0.s8 %v2546
      %v2548 = vlaneseq
      %v2549 = vshrl.u32 %v2548, 7
      %v2550 = vsub.s32 %v2547, %v2549
      %v2551 = vrot.slane %v2535, %v2550
      %v2553 = vunpack.c.l.s4 1966171168
      %v2554 = vunpack.c.0.s8 %v2553
      %v2555 = vlaneseq
      %v2556 = vshrl.u32 %v2555, 7
      %v2557 = vsub.s32 %v2554, %v2556
      %v2558 = vrot.slane %v2536, %v2557
      %v2560 = vunpack.c.l.s4 1966171168
      %v2561 = vunpack.c.0.s8 %v2560
      %v2562 = vlaneseq
      %v2563 = vshrl.u32 %v2562, 7
      %v2564 = vsub.s32 %v2561, %v2563
      %v2565 = vrot.slane %v2537, %v2564
      %v2566 = vcombine.high %v2544, %v2544
      %v2567 = vcombine.high %v2551, %v2551
      %v2568 = vcombine.high %v2558, %v2558
      %v2569 = vcombine.high %v2565, %v2565
      %v2570 = vlaneseq
      %v2571 = vshrl.u32 %v2570, 7
      %v2572 = vsub.s32 0, %v2571
      %v2573 = vrot.slane %v2379, %v2572
      %2575 = vbcast.lane.b32.xlu0 %v2573, 256
      %v2576 = vpop.permute.xlu0 %2575
      %s2578 = sor.u32 256, 8
      %2579 = vbcast.lane.b32.xlu0 %v2573, %s2578
      %v2580 = vpop.permute.xlu0 %2579
      %v2581 = vlaneseq
      %v2582 = vshrl.u32 %v2581, 7
      %v2583 = vsub.s32 1, %v2582
      %v2584 = vrot.slane %v2379, %v2583
      %2586 = vbcast.lane.b32.xlu0 %v2584, 256
      %v2587 = vpop.permute.xlu0 %2586
      %s2589 = sor.u32 256, 8
      %2590 = vbcast.lane.b32.xlu0 %v2584, %s2589
      %v2591 = vpop.permute.xlu0 %2590
      %v2592 = vlaneseq
      %v2593 = vshrl.u32 %v2592, 7
      %v2594 = vsub.s32 2, %v2593
      %v2595 = vrot.slane %v2379, %v2594
      %2597 = vbcast.lane.b32.xlu0 %v2595, 256
      %v2598 = vpop.permute.xlu0 %2597
      %s2600 = sor.u32 256, 8
      %2601 = vbcast.lane.b32.xlu0 %v2595, %s2600
      %v2602 = vpop.permute.xlu0 %2601
      %v2603 = vlaneseq
      %v2604 = vshrl.u32 %v2603, 7
      %v2605 = vsub.s32 3, %v2604
      %v2606 = vrot.slane %v2379, %v2605
      %2608 = vbcast.lane.b32.xlu0 %v2606, 256
      %v2609 = vpop.permute.xlu0 %2608
      %s2611 = sor.u32 256, 8
      %2612 = vbcast.lane.b32.xlu0 %v2606, %s2611
      %v2613 = vpop.permute.xlu0 %2612
      %v2614 = vlaneseq
      %v2615 = vshrl.u32 %v2614, 7
      %v2616 = vsub.s32 4, %v2615
      %v2617 = vrot.slane %v2379, %v2616
      %2619 = vbcast.lane.b32.xlu0 %v2617, 256
      %v2620 = vpop.permute.xlu0 %2619
      %s2622 = sor.u32 256, 8
      %2623 = vbcast.lane.b32.xlu0 %v2617, %s2622
      %v2624 = vpop.permute.xlu0 %2623
      %v2625 = vlaneseq
      %v2626 = vshrl.u32 %v2625, 7
      %v2627 = vsub.s32 5, %v2626
      %v2628 = vrot.slane %v2379, %v2627
      %2630 = vbcast.lane.b32.xlu0 %v2628, 256
      %v2631 = vpop.permute.xlu0 %2630
      %s2633 = sor.u32 256, 8
      %2634 = vbcast.lane.b32.xlu0 %v2628, %s2633
      %v2635 = vpop.permute.xlu0 %2634
      %v2636 = vlaneseq
      %v2637 = vshrl.u32 %v2636, 7
      %v2638 = vsub.s32 6, %v2637
      %v2639 = vrot.slane %v2379, %v2638
      %2641 = vbcast.lane.b32.xlu0 %v2639, 256
      %v2642 = vpop.permute.xlu0 %2641
      %s2644 = sor.u32 256, 8
      %2645 = vbcast.lane.b32.xlu0 %v2639, %s2644
      %v2646 = vpop.permute.xlu0 %2645
      %v2647 = vlaneseq
      %v2648 = vshrl.u32 %v2647, 7
      %v2649 = vsub.s32 7, %v2648
      %v2650 = vrot.slane %v2379, %v2649
      %2652 = vbcast.lane.b32.xlu0 %v2650, 256
      %v2653 = vpop.permute.xlu0 %2652
      %s2655 = sor.u32 256, 8
      %2656 = vbcast.lane.b32.xlu0 %v2650, %s2655
      %v2657 = vpop.permute.xlu0 %2656
      %v2658 = vlaneseq
      %v2659 = vshrl.u32 %v2658, 7
      %v2660 = vsub.s32 0, %v2659
      %v2661 = vrot.slane %v2544, %v2660
      %v2662 = vlaneseq
      %v2663 = vshrl.u32 %v2662, 7
      %v2664 = vsub.s32 0, %v2663
      %v2665 = vrot.slane %v2558, %v2664
      %v2666 = vlaneseq
      %v2667 = vshrl.u32 %v2666, 7
      %v2668 = vsub.s32 0, %v2667
      %v2669 = vrot.slane %v2566, %v2668
      %v2670 = vlaneseq
      %v2671 = vshrl.u32 %v2670, 7
      %v2672 = vsub.s32 0, %v2671
      %v2673 = vrot.slane %v2568, %v2672
      %v2674 = vlaneseq
      %v2675 = vshrl.u32 %v2674, 7
      %v2676 = vsub.s32 0, %v2675
      %v2677 = vrot.slane %v2551, %v2676
      %v2678 = vlaneseq
      %v2679 = vshrl.u32 %v2678, 7
      %v2680 = vsub.s32 0, %v2679
      %v2681 = vrot.slane %v2565, %v2680
      %v2682 = vlaneseq
      %v2683 = vshrl.u32 %v2682, 7
      %v2684 = vsub.s32 0, %v2683
      %v2685 = vrot.slane %v2567, %v2684
      %v2686 = vlaneseq
      %v2687 = vshrl.u32 %v2686, 7
      %v2688 = vsub.s32 0, %v2687
      %v2689 = vrot.slane %v2569, %v2688
      %v2698 = vmul.f32 %v2661, %v2576
      %v2699 = vmul.f32 %v2661, %v2580
      %v2700 = vmul.f32 %v2665, %v2587
      %v2701 = vmul.f32 %v2665, %v2591
      %v2702 = vmul.f32 %v2669, %v2598
      %v2703 = vmul.f32 %v2669, %v2602
      %v2704 = vmul.f32 %v2673, %v2609
      %v2705 = vmul.f32 %v2673, %v2613
      %v2706 = vmul.f32 %v2677, %v2620
      %v2707 = vmul.f32 %v2677, %v2624
      %v2708 = vmul.f32 %v2681, %v2631
      %v2709 = vmul.f32 %v2681, %v2635
      %v2710 = vmul.f32 %v2685, %v2642
      %v2711 = vmul.f32 %v2685, %v2646
      %v2712 = vmul.f32 %v2689, %v2653
      %v2713 = vmul.f32 %v2689, %v2657
      %v2714 = vmul.f32 %v2489, %v2341
      %v2715 = vmul.f32 %v2491, %v2342
      %v2716 = vadd.f32 %v2714, %v2698
      %v2717 = vadd.f32 %v2715, %v2699
      %v2718 = vlaneseq
      %v2719 = vshrl.u32 %v2718, 7
      %v2720 = vsub.s32 0, %v2719
      %v2721 = vrot.slane %v2381, %v2720
      %2723 = vbcast.lane.b32.xlu0 %v2721, 256
      %v2724 = vpop.permute.xlu0 %2723
      %s2726 = sor.u32 256, 8
      %2727 = vbcast.lane.b32.xlu0 %v2721, %s2726
      %v2728 = vpop.permute.xlu0 %2727
      %v2729 = vmul.f32 %v2716, %v2724
      %v2730 = vmul.f32 %v2717, %v2728
      %v2731 = vsel %vm769, %v2729, 0.0
      %v2732 = vsel %vm769, %v2730, 0.0
      %v2733 = vadd.f32 %v2731, %v2732
      %v2734 = vrot.slane %v2733, 4
      %v2735 = vadd.f32 %v2733, %v2734
      %v2736 = vrot.slane %v2735, 2
      %v2737 = vadd.f32 %v2735, %v2736
      %v2738 = vrot.slane %v2737, 1
      %v2739 = vadd.f32 %v2737, %v2738
      %v2740 = vmul.f32 %v2493, %v2716
      %v2741 = vmul.f32 %v2495, %v2717
      %v2742 = vadd.f32 %v2740, %v2700
      %v2743 = vadd.f32 %v2741, %v2701
      %v2744 = vlaneseq
      %v2745 = vshrl.u32 %v2744, 7
      %v2746 = vsub.s32 1, %v2745
      %v2747 = vrot.slane %v2381, %v2746
      %2749 = vbcast.lane.b32.xlu0 %v2747, 256
      %v2750 = vpop.permute.xlu0 %2749
      %s2752 = sor.u32 256, 8
      %2753 = vbcast.lane.b32.xlu0 %v2747, %s2752
      %v2754 = vpop.permute.xlu0 %2753
      %v2755 = vmul.f32 %v2742, %v2750
      %v2756 = vmul.f32 %v2743, %v2754
      %v2757 = vsel %vm769, %v2755, 0.0
      %v2758 = vsel %vm769, %v2756, 0.0
      %v2759 = vadd.f32 %v2757, %v2758
      %v2760 = vrot.slane %v2759, 4
      %v2761 = vadd.f32 %v2759, %v2760
      %v2762 = vrot.slane %v2761, 2
      %v2763 = vadd.f32 %v2761, %v2762
      %v2764 = vrot.slane %v2763, 1
      %v2765 = vadd.f32 %v2763, %v2764
      %v2766 = vmul.f32 %v2497, %v2742
      %v2767 = vmul.f32 %v2499, %v2743
      %v2768 = vadd.f32 %v2766, %v2702
      %v2769 = vadd.f32 %v2767, %v2703
      %v2770 = vlaneseq
      %v2771 = vshrl.u32 %v2770, 7
      %v2772 = vsub.s32 2, %v2771
      %v2773 = vrot.slane %v2381, %v2772
      %2775 = vbcast.lane.b32.xlu0 %v2773, 256
      %v2776 = vpop.permute.xlu0 %2775
      %s2778 = sor.u32 256, 8
      %2779 = vbcast.lane.b32.xlu0 %v2773, %s2778
      %v2780 = vpop.permute.xlu0 %2779
      %v2781 = vmul.f32 %v2768, %v2776
      %v2782 = vmul.f32 %v2769, %v2780
      %v2783 = vsel %vm769, %v2781, 0.0
      %v2784 = vsel %vm769, %v2782, 0.0
      %v2785 = vadd.f32 %v2783, %v2784
      %v2786 = vrot.slane %v2785, 4
      %v2787 = vadd.f32 %v2785, %v2786
      %v2788 = vrot.slane %v2787, 2
      %v2789 = vadd.f32 %v2787, %v2788
      %v2790 = vrot.slane %v2789, 1
      %v2791 = vadd.f32 %v2789, %v2790
      %v2792 = vmul.f32 %v2501, %v2768
      %v2793 = vmul.f32 %v2503, %v2769
      %v2794 = vadd.f32 %v2792, %v2704
      %v2795 = vadd.f32 %v2793, %v2705
      %v2796 = vlaneseq
      %v2797 = vshrl.u32 %v2796, 7
      %v2798 = vsub.s32 3, %v2797
      %v2799 = vrot.slane %v2381, %v2798
      %2801 = vbcast.lane.b32.xlu0 %v2799, 256
      %v2802 = vpop.permute.xlu0 %2801
      %s2804 = sor.u32 256, 8
      %2805 = vbcast.lane.b32.xlu0 %v2799, %s2804
      %v2806 = vpop.permute.xlu0 %2805
      %v2807 = vmul.f32 %v2794, %v2802
      %v2808 = vmul.f32 %v2795, %v2806
      %v2809 = vsel %vm769, %v2807, 0.0
      %v2810 = vsel %vm769, %v2808, 0.0
      %v2811 = vadd.f32 %v2809, %v2810
      %v2812 = vrot.slane %v2811, 4
      %v2813 = vadd.f32 %v2811, %v2812
      %v2814 = vrot.slane %v2813, 2
      %v2815 = vadd.f32 %v2813, %v2814
      %v2816 = vrot.slane %v2815, 1
      %v2817 = vadd.f32 %v2815, %v2816
      %v2818 = vmul.f32 %v2505, %v2794
      %v2819 = vmul.f32 %v2507, %v2795
      %v2820 = vadd.f32 %v2818, %v2706
      %v2821 = vadd.f32 %v2819, %v2707
      %v2822 = vlaneseq
      %v2823 = vshrl.u32 %v2822, 7
      %v2824 = vsub.s32 4, %v2823
      %v2825 = vrot.slane %v2381, %v2824
      %2827 = vbcast.lane.b32.xlu0 %v2825, 256
      %v2828 = vpop.permute.xlu0 %2827
      %s2830 = sor.u32 256, 8
      %2831 = vbcast.lane.b32.xlu0 %v2825, %s2830
      %v2832 = vpop.permute.xlu0 %2831
      %v2833 = vmul.f32 %v2820, %v2828
      %v2834 = vmul.f32 %v2821, %v2832
      %v2835 = vsel %vm769, %v2833, 0.0
      %v2836 = vsel %vm769, %v2834, 0.0
      %v2837 = vadd.f32 %v2835, %v2836
      %v2838 = vrot.slane %v2837, 4
      %v2839 = vadd.f32 %v2837, %v2838
      %v2840 = vrot.slane %v2839, 2
      %v2841 = vadd.f32 %v2839, %v2840
      %v2842 = vrot.slane %v2841, 1
      %v2843 = vadd.f32 %v2841, %v2842
      %v2844 = vmul.f32 %v2509, %v2820
      %v2845 = vmul.f32 %v2511, %v2821
      %v2846 = vadd.f32 %v2844, %v2708
      %v2847 = vadd.f32 %v2845, %v2709
      %v2848 = vlaneseq
      %v2849 = vshrl.u32 %v2848, 7
      %v2850 = vsub.s32 5, %v2849
      %v2851 = vrot.slane %v2381, %v2850
      %2853 = vbcast.lane.b32.xlu0 %v2851, 256
      %v2854 = vpop.permute.xlu0 %2853
      %s2856 = sor.u32 256, 8
      %2857 = vbcast.lane.b32.xlu0 %v2851, %s2856
      %v2858 = vpop.permute.xlu0 %2857
      %v2859 = vmul.f32 %v2846, %v2854
      %v2860 = vmul.f32 %v2847, %v2858
      %v2861 = vsel %vm769, %v2859, 0.0
      %v2862 = vsel %vm769, %v2860, 0.0
      %v2863 = vadd.f32 %v2861, %v2862
      %v2864 = vrot.slane %v2863, 4
      %v2865 = vadd.f32 %v2863, %v2864
      %v2866 = vrot.slane %v2865, 2
      %v2867 = vadd.f32 %v2865, %v2866
      %v2868 = vrot.slane %v2867, 1
      %v2869 = vadd.f32 %v2867, %v2868
      %v2870 = vmul.f32 %v2513, %v2846
      %v2871 = vmul.f32 %v2515, %v2847
      %v2872 = vadd.f32 %v2870, %v2710
      %v2873 = vadd.f32 %v2871, %v2711
      %v2874 = vlaneseq
      %v2875 = vshrl.u32 %v2874, 7
      %v2876 = vsub.s32 6, %v2875
      %v2877 = vrot.slane %v2381, %v2876
      %2879 = vbcast.lane.b32.xlu0 %v2877, 256
      %v2880 = vpop.permute.xlu0 %2879
      %s2882 = sor.u32 256, 8
      %2883 = vbcast.lane.b32.xlu0 %v2877, %s2882
      %v2884 = vpop.permute.xlu0 %2883
      %v2885 = vmul.f32 %v2872, %v2880
      %v2886 = vmul.f32 %v2873, %v2884
      %v2887 = vsel %vm769, %v2885, 0.0
      %v2888 = vsel %vm769, %v2886, 0.0
      %v2889 = vadd.f32 %v2887, %v2888
      %v2890 = vrot.slane %v2889, 4
      %v2891 = vadd.f32 %v2889, %v2890
      %v2892 = vrot.slane %v2891, 2
      %v2893 = vadd.f32 %v2891, %v2892
      %v2894 = vrot.slane %v2893, 1
      %v2895 = vadd.f32 %v2893, %v2894
      %v2896 = vmul.f32 %v2517, %v2872
      %v2897 = vmul.f32 %v2519, %v2873
      %v2898 = vadd.f32 %v2896, %v2712
      %v2899 = vadd.f32 %v2897, %v2713
      %v2900 = vlaneseq
      %v2901 = vshrl.u32 %v2900, 7
      %v2902 = vsub.s32 7, %v2901
      %v2903 = vrot.slane %v2381, %v2902
      %2905 = vbcast.lane.b32.xlu0 %v2903, 256
      %v2906 = vpop.permute.xlu0 %2905
      %s2908 = sor.u32 256, 8
      %2909 = vbcast.lane.b32.xlu0 %v2903, %s2908
      %v2910 = vpop.permute.xlu0 %2909
      %v2911 = vmul.f32 %v2898, %v2906
      %v2912 = vmul.f32 %v2899, %v2910
      %v2913 = vsel %vm769, %v2911, 0.0
      %v2914 = vsel %vm769, %v2912, 0.0
      %v2915 = vadd.f32 %v2913, %v2914
      %v2916 = vrot.slane %v2915, 4
      %v2917 = vadd.f32 %v2915, %v2916
      %v2918 = vrot.slane %v2917, 2
      %v2919 = vadd.f32 %v2917, %v2918
      %v2920 = vrot.slane %v2919, 1
      %v2921 = vadd.f32 %v2919, %v2920
      %v2922 = vsel %vm1806, %v2739, %v2765
      %v2923 = vsel %vm1808, %v2922, %v2791
      %v2924 = vsel %vm949, %v2923, %v2817
      %v2925 = vsel %vm1811, %v2924, %v2843
      %v2926 = vsel %vm876, %v2925, %v2869
      %v2927 = vsel %vm843, %v2926, %v2895
      %v2928 = vsel %vm808, %v2927, %v2921
      %s2929 = scalar_lea.vmem [#allocation8], 16
      %2930 = vst.msk [vmem:[%s2929] sm:$0xff] %vm769, %v2928
      %s2931 = scalar_lea.vmem [#allocation4], 24
      %v2932 = vld [vmem:[%s2931] sm:$0xff]
      %s2933 = scalar_lea.vmem [#allocation5], 24
      %v2934 = vld [vmem:[%s2933] sm:$0xff]
      %s2935 = scalar_lea.vmem [#allocation6], 24
      %v2936 = vld [vmem:[%s2935] sm:$0xff]
      %s2937 = scalar_lea.vmem [#allocation7], 24
      %v2938 = vld [vmem:[%s2937] sm:$0xff]
      %v2940 = vcombine.high %v2932, %v2932
      %v2942 = vunpack.c.l.s4 1966171168
      %v2943 = vunpack.c.0.s8 %v2942
      %v2944 = vlaneseq
      %v2945 = vshrl.u32 %v2944, 7
      %v2946 = vsub.s32 %v2943, %v2945
      %v2947 = vrot.slane %v2932, %v2946
      %v2949 = vunpack.c.l.s4 1966171168
      %v2950 = vunpack.c.0.s8 %v2949
      %v2951 = vlaneseq
      %v2952 = vshrl.u32 %v2951, 7
      %v2953 = vsub.s32 %v2950, %v2952
      %v2954 = vrot.slane %v2940, %v2953
      %v2955 = vcombine.high %v2947, %v2947
      %v2956 = vcombine.high %v2954, %v2954
      %v2958 = vunpack.c.l.s4 1966171168
      %v2959 = vunpack.c.0.s8 %v2958
      %v2960 = vlaneseq
      %v2961 = vshrl.u32 %v2960, 7
      %v2962 = vsub.s32 %v2959, %v2961
      %v2963 = vrot.slane %v2947, %v2962
      %v2965 = vunpack.c.l.s4 1966171168
      %v2966 = vunpack.c.0.s8 %v2965
      %v2967 = vlaneseq
      %v2968 = vshrl.u32 %v2967, 7
      %v2969 = vsub.s32 %v2966, %v2968
      %v2970 = vrot.slane %v2954, %v2969
      %v2972 = vunpack.c.l.s4 1966171168
      %v2973 = vunpack.c.0.s8 %v2972
      %v2974 = vlaneseq
      %v2975 = vshrl.u32 %v2974, 7
      %v2976 = vsub.s32 %v2973, %v2975
      %v2977 = vrot.slane %v2955, %v2976
      %v2979 = vunpack.c.l.s4 1966171168
      %v2980 = vunpack.c.0.s8 %v2979
      %v2981 = vlaneseq
      %v2982 = vshrl.u32 %v2981, 7
      %v2983 = vsub.s32 %v2980, %v2982
      %v2984 = vrot.slane %v2956, %v2983
      %v2985 = vcombine.high %v2963, %v2963
      %v2986 = vcombine.high %v2970, %v2970
      %v2987 = vcombine.high %v2977, %v2977
      %v2988 = vcombine.high %v2984, %v2984
      %v2989 = vlaneseq
      %v2990 = vshrl.u32 %v2989, 7
      %v2991 = vsub.s32 0, %v2990
      %v2992 = vrot.slane %v2963, %v2991
      %v2993 = vlaneseq
      %v2994 = vshrl.u32 %v2993, 7
      %v2995 = vsub.s32 0, %v2994
      %v2996 = vrot.slane %v2977, %v2995
      %v2997 = vlaneseq
      %v2998 = vshrl.u32 %v2997, 7
      %v2999 = vsub.s32 0, %v2998
      %v3000 = vrot.slane %v2985, %v2999
      %v3001 = vlaneseq
      %v3002 = vshrl.u32 %v3001, 7
      %v3003 = vsub.s32 0, %v3002
      %v3004 = vrot.slane %v2987, %v3003
      %v3005 = vlaneseq
      %v3006 = vshrl.u32 %v3005, 7
      %v3007 = vsub.s32 0, %v3006
      %v3008 = vrot.slane %v2970, %v3007
      %v3009 = vlaneseq
      %v3010 = vshrl.u32 %v3009, 7
      %v3011 = vsub.s32 0, %v3010
      %v3012 = vrot.slane %v2984, %v3011
      %v3013 = vlaneseq
      %v3014 = vshrl.u32 %v3013, 7
      %v3015 = vsub.s32 0, %v3014
      %v3016 = vrot.slane %v2986, %v3015
      %v3017 = vlaneseq
      %v3018 = vshrl.u32 %v3017, 7
      %v3019 = vsub.s32 0, %v3018
      %v3020 = vrot.slane %v2988, %v3019
      %v3029 = vmul.f32 %v2992, %v1258
      %v3030 = vmul.f32 %v2992, %v1259
      %v3031 = vmul.f32 %v2996, %v1258
      %v3032 = vmul.f32 %v2996, %v1259
      %v3033 = vmul.f32 %v3000, %v1258
      %v3034 = vmul.f32 %v3000, %v1259
      %v3035 = vmul.f32 %v3004, %v1258
      %v3036 = vmul.f32 %v3004, %v1259
      %v3037 = vmul.f32 %v3008, %v1258
      %v3038 = vmul.f32 %v3008, %v1259
      %v3039 = vmul.f32 %v3012, %v1258
      %v3040 = vmul.f32 %v3012, %v1259
      %v3041 = vmul.f32 %v3016, %v1258
      %v3042 = vmul.f32 %v3016, %v1259
      %v3043 = vmul.f32 %v3020, %v1258
      %v3044 = vmul.f32 %v3020, %v1259
      %v3045 = vmul.f32 %v3029, 1.442695
      %v3046 = vpow.pop %v3045
      %v3047 = vmul.f32 %v3030, 1.442695
      %v3048 = vpow.pop %v3047
      %v3049 = vmul.f32 %v3031, 1.442695
      %v3050 = vpow.pop %v3049
      %v3051 = vmul.f32 %v3032, 1.442695
      %v3052 = vpow.pop %v3051
      %v3053 = vmul.f32 %v3033, 1.442695
      %v3054 = vpow.pop %v3053
      %v3055 = vmul.f32 %v3034, 1.442695
      %v3056 = vpow.pop %v3055
      %v3057 = vmul.f32 %v3035, 1.442695
      %v3058 = vpow.pop %v3057
      %v3059 = vmul.f32 %v3036, 1.442695
      %v3060 = vpow.pop %v3059
      %v3061 = vmul.f32 %v3037, 1.442695
      %v3062 = vpow.pop %v3061
      %v3063 = vmul.f32 %v3038, 1.442695
      %v3064 = vpow.pop %v3063
      %v3065 = vmul.f32 %v3039, 1.442695
      %v3066 = vpow.pop %v3065
      %v3067 = vmul.f32 %v3040, 1.442695
      %v3068 = vpow.pop %v3067
      %v3069 = vmul.f32 %v3041, 1.442695
      %v3070 = vpow.pop %v3069
      %v3071 = vmul.f32 %v3042, 1.442695
      %v3072 = vpow.pop %v3071
      %v3073 = vmul.f32 %v3043, 1.442695
      %v3074 = vpow.pop %v3073
      %v3075 = vmul.f32 %v3044, 1.442695
      %v3076 = vpow.pop %v3075
      %v3078 = vcombine.high %v2934, %v2934
      %v3080 = vunpack.c.l.s4 1966171168
      %v3081 = vunpack.c.0.s8 %v3080
      %v3082 = vlaneseq
      %v3083 = vshrl.u32 %v3082, 7
      %v3084 = vsub.s32 %v3081, %v3083
      %v3085 = vrot.slane %v2934, %v3084
      %v3087 = vunpack.c.l.s4 1966171168
      %v3088 = vunpack.c.0.s8 %v3087
      %v3089 = vlaneseq
      %v3090 = vshrl.u32 %v3089, 7
      %v3091 = vsub.s32 %v3088, %v3090
      %v3092 = vrot.slane %v3078, %v3091
      %v3093 = vcombine.high %v3085, %v3085
      %v3094 = vcombine.high %v3092, %v3092
      %v3096 = vunpack.c.l.s4 1966171168
      %v3097 = vunpack.c.0.s8 %v3096
      %v3098 = vlaneseq
      %v3099 = vshrl.u32 %v3098, 7
      %v3100 = vsub.s32 %v3097, %v3099
      %v3101 = vrot.slane %v3085, %v3100
      %v3103 = vunpack.c.l.s4 1966171168
      %v3104 = vunpack.c.0.s8 %v3103
      %v3105 = vlaneseq
      %v3106 = vshrl.u32 %v3105, 7
      %v3107 = vsub.s32 %v3104, %v3106
      %v3108 = vrot.slane %v3092, %v3107
      %v3110 = vunpack.c.l.s4 1966171168
      %v3111 = vunpack.c.0.s8 %v3110
      %v3112 = vlaneseq
      %v3113 = vshrl.u32 %v3112, 7
      %v3114 = vsub.s32 %v3111, %v3113
      %v3115 = vrot.slane %v3093, %v3114
      %v3117 = vunpack.c.l.s4 1966171168
      %v3118 = vunpack.c.0.s8 %v3117
      %v3119 = vlaneseq
      %v3120 = vshrl.u32 %v3119, 7
      %v3121 = vsub.s32 %v3118, %v3120
      %v3122 = vrot.slane %v3094, %v3121
      %v3123 = vcombine.high %v3101, %v3101
      %v3124 = vcombine.high %v3108, %v3108
      %v3125 = vcombine.high %v3115, %v3115
      %v3126 = vcombine.high %v3122, %v3122
      %v3127 = vlaneseq
      %v3128 = vshrl.u32 %v3127, 7
      %v3129 = vsub.s32 0, %v3128
      %v3130 = vrot.slane %v2936, %v3129
      %3132 = vbcast.lane.b32.xlu0 %v3130, 256
      %v3133 = vpop.permute.xlu0 %3132
      %s3135 = sor.u32 256, 8
      %3136 = vbcast.lane.b32.xlu0 %v3130, %s3135
      %v3137 = vpop.permute.xlu0 %3136
      %v3138 = vlaneseq
      %v3139 = vshrl.u32 %v3138, 7
      %v3140 = vsub.s32 1, %v3139
      %v3141 = vrot.slane %v2936, %v3140
      %3143 = vbcast.lane.b32.xlu0 %v3141, 256
      %v3144 = vpop.permute.xlu0 %3143
      %s3146 = sor.u32 256, 8
      %3147 = vbcast.lane.b32.xlu0 %v3141, %s3146
      %v3148 = vpop.permute.xlu0 %3147
      %v3149 = vlaneseq
      %v3150 = vshrl.u32 %v3149, 7
      %v3151 = vsub.s32 2, %v3150
      %v3152 = vrot.slane %v2936, %v3151
      %3154 = vbcast.lane.b32.xlu0 %v3152, 256
      %v3155 = vpop.permute.xlu0 %3154
      %s3157 = sor.u32 256, 8
      %3158 = vbcast.lane.b32.xlu0 %v3152, %s3157
      %v3159 = vpop.permute.xlu0 %3158
      %v3160 = vlaneseq
      %v3161 = vshrl.u32 %v3160, 7
      %v3162 = vsub.s32 3, %v3161
      %v3163 = vrot.slane %v2936, %v3162
      %3165 = vbcast.lane.b32.xlu0 %v3163, 256
      %v3166 = vpop.permute.xlu0 %3165
      %s3168 = sor.u32 256, 8
      %3169 = vbcast.lane.b32.xlu0 %v3163, %s3168
      %v3170 = vpop.permute.xlu0 %3169
      %v3171 = vlaneseq
      %v3172 = vshrl.u32 %v3171, 7
      %v3173 = vsub.s32 4, %v3172
      %v3174 = vrot.slane %v2936, %v3173
      %3176 = vbcast.lane.b32.xlu0 %v3174, 256
      %v3177 = vpop.permute.xlu0 %3176
      %s3179 = sor.u32 256, 8
      %3180 = vbcast.lane.b32.xlu0 %v3174, %s3179
      %v3181 = vpop.permute.xlu0 %3180
      %v3182 = vlaneseq
      %v3183 = vshrl.u32 %v3182, 7
      %v3184 = vsub.s32 5, %v3183
      %v3185 = vrot.slane %v2936, %v3184
      %3187 = vbcast.lane.b32.xlu0 %v3185, 256
      %v3188 = vpop.permute.xlu0 %3187
      %s3190 = sor.u32 256, 8
      %3191 = vbcast.lane.b32.xlu0 %v3185, %s3190
      %v3192 = vpop.permute.xlu0 %3191
      %v3193 = vlaneseq
      %v3194 = vshrl.u32 %v3193, 7
      %v3195 = vsub.s32 6, %v3194
      %v3196 = vrot.slane %v2936, %v3195
      %3198 = vbcast.lane.b32.xlu0 %v3196, 256
      %v3199 = vpop.permute.xlu0 %3198
      %s3201 = sor.u32 256, 8
      %3202 = vbcast.lane.b32.xlu0 %v3196, %s3201
      %v3203 = vpop.permute.xlu0 %3202
      %v3204 = vlaneseq
      %v3205 = vshrl.u32 %v3204, 7
      %v3206 = vsub.s32 7, %v3205
      %v3207 = vrot.slane %v2936, %v3206
      %3209 = vbcast.lane.b32.xlu0 %v3207, 256
      %v3210 = vpop.permute.xlu0 %3209
      %s3212 = sor.u32 256, 8
      %3213 = vbcast.lane.b32.xlu0 %v3207, %s3212
      %v3214 = vpop.permute.xlu0 %3213
      %v3215 = vlaneseq
      %v3216 = vshrl.u32 %v3215, 7
      %v3217 = vsub.s32 0, %v3216
      %v3218 = vrot.slane %v3101, %v3217
      %v3219 = vlaneseq
      %v3220 = vshrl.u32 %v3219, 7
      %v3221 = vsub.s32 0, %v3220
      %v3222 = vrot.slane %v3115, %v3221
      %v3223 = vlaneseq
      %v3224 = vshrl.u32 %v3223, 7
      %v3225 = vsub.s32 0, %v3224
      %v3226 = vrot.slane %v3123, %v3225
      %v3227 = vlaneseq
      %v3228 = vshrl.u32 %v3227, 7
      %v3229 = vsub.s32 0, %v3228
      %v3230 = vrot.slane %v3125, %v3229
      %v3231 = vlaneseq
      %v3232 = vshrl.u32 %v3231, 7
      %v3233 = vsub.s32 0, %v3232
      %v3234 = vrot.slane %v3108, %v3233
      %v3235 = vlaneseq
      %v3236 = vshrl.u32 %v3235, 7
      %v3237 = vsub.s32 0, %v3236
      %v3238 = vrot.slane %v3122, %v3237
      %v3239 = vlaneseq
      %v3240 = vshrl.u32 %v3239, 7
      %v3241 = vsub.s32 0, %v3240
      %v3242 = vrot.slane %v3124, %v3241
      %v3243 = vlaneseq
      %v3244 = vshrl.u32 %v3243, 7
      %v3245 = vsub.s32 0, %v3244
      %v3246 = vrot.slane %v3126, %v3245
      %v3255 = vmul.f32 %v3218, %v3133
      %v3256 = vmul.f32 %v3218, %v3137
      %v3257 = vmul.f32 %v3222, %v3144
      %v3258 = vmul.f32 %v3222, %v3148
      %v3259 = vmul.f32 %v3226, %v3155
      %v3260 = vmul.f32 %v3226, %v3159
      %v3261 = vmul.f32 %v3230, %v3166
      %v3262 = vmul.f32 %v3230, %v3170
      %v3263 = vmul.f32 %v3234, %v3177
      %v3264 = vmul.f32 %v3234, %v3181
      %v3265 = vmul.f32 %v3238, %v3188
      %v3266 = vmul.f32 %v3238, %v3192
      %v3267 = vmul.f32 %v3242, %v3199
      %v3268 = vmul.f32 %v3242, %v3203
      %v3269 = vmul.f32 %v3246, %v3210
      %v3270 = vmul.f32 %v3246, %v3214
      %v3271 = vmul.f32 %v3046, %v2898
      %v3272 = vmul.f32 %v3048, %v2899
      %v3273 = vadd.f32 %v3271, %v3255
      %v3274 = vadd.f32 %v3272, %v3256
      %v3275 = vlaneseq
      %v3276 = vshrl.u32 %v3275, 7
      %v3277 = vsub.s32 0, %v3276
      %v3278 = vrot.slane %v2938, %v3277
      %3280 = vbcast.lane.b32.xlu0 %v3278, 256
      %v3281 = vpop.permute.xlu0 %3280
      %s3283 = sor.u32 256, 8
      %3284 = vbcast.lane.b32.xlu0 %v3278, %s3283
      %v3285 = vpop.permute.xlu0 %3284
      %v3286 = vmul.f32 %v3273, %v3281
      %v3287 = vmul.f32 %v3274, %v3285
      %v3288 = vsel %vm769, %v3286, 0.0
      %v3289 = vsel %vm769, %v3287, 0.0
      %v3290 = vadd.f32 %v3288, %v3289
      %v3291 = vrot.slane %v3290, 4
      %v3292 = vadd.f32 %v3290, %v3291
      %v3293 = vrot.slane %v3292, 2
      %v3294 = vadd.f32 %v3292, %v3293
      %v3295 = vrot.slane %v3294, 1
      %v3296 = vadd.f32 %v3294, %v3295
      %v3297 = vmul.f32 %v3050, %v3273
      %v3298 = vmul.f32 %v3052, %v3274
      %v3299 = vadd.f32 %v3297, %v3257
      %v3300 = vadd.f32 %v3298, %v3258
      %v3301 = vlaneseq
      %v3302 = vshrl.u32 %v3301, 7
      %v3303 = vsub.s32 1, %v3302
      %v3304 = vrot.slane %v2938, %v3303
      %3306 = vbcast.lane.b32.xlu0 %v3304, 256
      %v3307 = vpop.permute.xlu0 %3306
      %s3309 = sor.u32 256, 8
      %3310 = vbcast.lane.b32.xlu0 %v3304, %s3309
      %v3311 = vpop.permute.xlu0 %3310
      %v3312 = vmul.f32 %v3299, %v3307
      %v3313 = vmul.f32 %v3300, %v3311
      %v3314 = vsel %vm769, %v3312, 0.0
      %v3315 = vsel %vm769, %v3313, 0.0
      %v3316 = vadd.f32 %v3314, %v3315
      %v3317 = vrot.slane %v3316, 4
      %v3318 = vadd.f32 %v3316, %v3317
      %v3319 = vrot.slane %v3318, 2
      %v3320 = vadd.f32 %v3318, %v3319
      %v3321 = vrot.slane %v3320, 1
      %v3322 = vadd.f32 %v3320, %v3321
      %v3323 = vmul.f32 %v3054, %v3299
      %v3324 = vmul.f32 %v3056, %v3300
      %v3325 = vadd.f32 %v3323, %v3259
      %v3326 = vadd.f32 %v3324, %v3260
      %v3327 = vlaneseq
      %v3328 = vshrl.u32 %v3327, 7
      %v3329 = vsub.s32 2, %v3328
      %v3330 = vrot.slane %v2938, %v3329
      %3332 = vbcast.lane.b32.xlu0 %v3330, 256
      %v3333 = vpop.permute.xlu0 %3332
      %s3335 = sor.u32 256, 8
      %3336 = vbcast.lane.b32.xlu0 %v3330, %s3335
      %v3337 = vpop.permute.xlu0 %3336
      %v3338 = vmul.f32 %v3325, %v3333
      %v3339 = vmul.f32 %v3326, %v3337
      %v3340 = vsel %vm769, %v3338, 0.0
      %v3341 = vsel %vm769, %v3339, 0.0
      %v3342 = vadd.f32 %v3340, %v3341
      %v3343 = vrot.slane %v3342, 4
      %v3344 = vadd.f32 %v3342, %v3343
      %v3345 = vrot.slane %v3344, 2
      %v3346 = vadd.f32 %v3344, %v3345
      %v3347 = vrot.slane %v3346, 1
      %v3348 = vadd.f32 %v3346, %v3347
      %v3349 = vmul.f32 %v3058, %v3325
      %v3350 = vmul.f32 %v3060, %v3326
      %v3351 = vadd.f32 %v3349, %v3261
      %v3352 = vadd.f32 %v3350, %v3262
      %v3353 = vlaneseq
      %v3354 = vshrl.u32 %v3353, 7
      %v3355 = vsub.s32 3, %v3354
      %v3356 = vrot.slane %v2938, %v3355
      %3358 = vbcast.lane.b32.xlu0 %v3356, 256
      %v3359 = vpop.permute.xlu0 %3358
      %s3361 = sor.u32 256, 8
      %3362 = vbcast.lane.b32.xlu0 %v3356, %s3361
      %v3363 = vpop.permute.xlu0 %3362
      %v3364 = vmul.f32 %v3351, %v3359
      %v3365 = vmul.f32 %v3352, %v3363
      %v3366 = vsel %vm769, %v3364, 0.0
      %v3367 = vsel %vm769, %v3365, 0.0
      %v3368 = vadd.f32 %v3366, %v3367
      %v3369 = vrot.slane %v3368, 4
      %v3370 = vadd.f32 %v3368, %v3369
      %v3371 = vrot.slane %v3370, 2
      %v3372 = vadd.f32 %v3370, %v3371
      %v3373 = vrot.slane %v3372, 1
      %v3374 = vadd.f32 %v3372, %v3373
      %v3375 = vmul.f32 %v3062, %v3351
      %v3376 = vmul.f32 %v3064, %v3352
      %v3377 = vadd.f32 %v3375, %v3263
      %v3378 = vadd.f32 %v3376, %v3264
      %v3379 = vlaneseq
      %v3380 = vshrl.u32 %v3379, 7
      %v3381 = vsub.s32 4, %v3380
      %v3382 = vrot.slane %v2938, %v3381
      %3384 = vbcast.lane.b32.xlu0 %v3382, 256
      %v3385 = vpop.permute.xlu0 %3384
      %s3387 = sor.u32 256, 8
      %3388 = vbcast.lane.b32.xlu0 %v3382, %s3387
      %v3389 = vpop.permute.xlu0 %3388
      %v3390 = vmul.f32 %v3377, %v3385
      %v3391 = vmul.f32 %v3378, %v3389
      %v3392 = vsel %vm769, %v3390, 0.0
      %v3393 = vsel %vm769, %v3391, 0.0
      %v3394 = vadd.f32 %v3392, %v3393
      %v3395 = vrot.slane %v3394, 4
      %v3396 = vadd.f32 %v3394, %v3395
      %v3397 = vrot.slane %v3396, 2
      %v3398 = vadd.f32 %v3396, %v3397
      %v3399 = vrot.slane %v3398, 1
      %v3400 = vadd.f32 %v3398, %v3399
      %v3401 = vmul.f32 %v3066, %v3377
      %v3402 = vmul.f32 %v3068, %v3378
      %v3403 = vadd.f32 %v3401, %v3265
      %v3404 = vadd.f32 %v3402, %v3266
      %v3405 = vlaneseq
      %v3406 = vshrl.u32 %v3405, 7
      %v3407 = vsub.s32 5, %v3406
      %v3408 = vrot.slane %v2938, %v3407
      %3410 = vbcast.lane.b32.xlu0 %v3408, 256
      %v3411 = vpop.permute.xlu0 %3410
      %s3413 = sor.u32 256, 8
      %3414 = vbcast.lane.b32.xlu0 %v3408, %s3413
      %v3415 = vpop.permute.xlu0 %3414
      %v3416 = vmul.f32 %v3403, %v3411
      %v3417 = vmul.f32 %v3404, %v3415
      %v3418 = vsel %vm769, %v3416, 0.0
      %v3419 = vsel %vm769, %v3417, 0.0
      %v3420 = vadd.f32 %v3418, %v3419
      %v3421 = vrot.slane %v3420, 4
      %v3422 = vadd.f32 %v3420, %v3421
      %v3423 = vrot.slane %v3422, 2
      %v3424 = vadd.f32 %v3422, %v3423
      %v3425 = vrot.slane %v3424, 1
      %v3426 = vadd.f32 %v3424, %v3425
      %v3427 = vmul.f32 %v3070, %v3403
      %v3428 = vmul.f32 %v3072, %v3404
      %v3429 = vadd.f32 %v3427, %v3267
      %v3430 = vadd.f32 %v3428, %v3268
      %v3431 = vlaneseq
      %v3432 = vshrl.u32 %v3431, 7
      %v3433 = vsub.s32 6, %v3432
      %v3434 = vrot.slane %v2938, %v3433
      %3436 = vbcast.lane.b32.xlu0 %v3434, 256
      %v3437 = vpop.permute.xlu0 %3436
      %s3439 = sor.u32 256, 8
      %3440 = vbcast.lane.b32.xlu0 %v3434, %s3439
      %v3441 = vpop.permute.xlu0 %3440
      %v3442 = vmul.f32 %v3429, %v3437
      %v3443 = vmul.f32 %v3430, %v3441
      %v3444 = vsel %vm769, %v3442, 0.0
      %v3445 = vsel %vm769, %v3443, 0.0
      %v3446 = vadd.f32 %v3444, %v3445
      %v3447 = vrot.slane %v3446, 4
      %v3448 = vadd.f32 %v3446, %v3447
      %v3449 = vrot.slane %v3448, 2
      %v3450 = vadd.f32 %v3448, %v3449
      %v3451 = vrot.slane %v3450, 1
      %v3452 = vadd.f32 %v3450, %v3451
      %v3453 = vmul.f32 %v3074, %v3429
      %v3454 = vmul.f32 %v3076, %v3430
      %v3455 = vadd.f32 %v3453, %v3269
      %v3456 = vadd.f32 %v3454, %v3270
      %v3457 = vlaneseq
      %v3458 = vshrl.u32 %v3457, 7
      %v3459 = vsub.s32 7, %v3458
      %v3460 = vrot.slane %v2938, %v3459
      %3462 = vbcast.lane.b32.xlu0 %v3460, 256
      %v3463 = vpop.permute.xlu0 %3462
      %s3465 = sor.u32 256, 8
      %3466 = vbcast.lane.b32.xlu0 %v3460, %s3465
      %v3467 = vpop.permute.xlu0 %3466
      %v3468 = vmul.f32 %v3455, %v3463
      %v3469 = vmul.f32 %v3456, %v3467
      %v3470 = vsel %vm769, %v3468, 0.0
      %v3471 = vsel %vm769, %v3469, 0.0
      %v3472 = vadd.f32 %v3470, %v3471
      %v3473 = vrot.slane %v3472, 4
      %v3474 = vadd.f32 %v3472, %v3473
      %v3475 = vrot.slane %v3474, 2
      %v3476 = vadd.f32 %v3474, %v3475
      %v3477 = vrot.slane %v3476, 1
      %v3478 = vadd.f32 %v3476, %v3477
      %v3479 = vsel %vm1806, %v3296, %v3322
      %v3480 = vsel %vm1808, %v3479, %v3348
      %v3481 = vsel %vm949, %v3480, %v3374
      %v3482 = vsel %vm1811, %v3481, %v3400
      %v3483 = vsel %vm876, %v3482, %v3426
      %v3484 = vsel %vm843, %v3483, %v3452
      %v3485 = vsel %vm808, %v3484, %v3478
      %s3486 = scalar_lea.vmem [#allocation8], 24
      %3487 = vst.msk [vmem:[%s3486] sm:$0xff] %vm769, %v3485
      %3488 = vst.msk [vmem:[#allocation2] sm:$0xff] %vm769, %v3455
      %3489 = vst.msk [vmem:[#allocation2 + $0x8] sm:$0xff] %vm769, %v3456
      %v3490 = vld [vmem:[#allocation8] sm:$0xff]
      %v3491 = vld [vmem:[#allocation8 + $0x8] sm:$0xff]
      %v3492 = vld [vmem:[#allocation8 + $0x10] sm:$0xff]
      %v3493 = vld [vmem:[#allocation8 + $0x18] sm:$0xff]
      %v3494 = vld [vmem:[%s11] sm:$0x1]
      %v3496 = vlaneseq
      %v3497 = vshrl.u32 %v3496, 7
      %v3498 = vsub.s32 0, %v3497
      %v3499 = vrot.slane %v3494, %v3498
      %v3501 = vmul.f32 %v924, %v3499
      %v3502 = vmul.f32 %v925, %v3499
      %v3503 = vmul.f32 %v926, %v3499
      %v3504 = vmul.f32 %v927, %v3499
      %v3505 = vmul.f32 %v928, %v3499
      %v3511 = vrot.slane %v3501, 5
      %v3512 = vrot.slane %v3502, 5
      %v3513 = vsel %vm949, %v3511, %v3512
      %v3514 = vrot.slane %v3503, 5
      %v3515 = vsel %vm949, %v3512, %v3514
      %v3516 = vrot.slane %v3504, 5
      %v3517 = vsel %vm949, %v3514, %v3516
      %v3518 = vrot.slane %v3505, 5
      %v3519 = vsel %vm949, %v3516, %v3518
      %v3524 = vadd.f32 %v3490, %v3513
      %v3525 = vadd.f32 %v3491, %v3515
      %v3526 = vadd.f32 %v3492, %v3517
      %v3527 = vadd.f32 %v3493, %v3519
      %v3528 = vxor.u32 %v750, 2147483648
      %v3529 = vxor.u32 %v755, 2147483648
      %v3530 = vxor.u32 %v760, 2147483648
      %v3531 = vxor.u32 %v765, 2147483648
      %v3532 = vmul.f32 %v3528, 1.442695
      %v3533 = vpow.pop %v3532
      %v3534 = vmul.f32 %v3529, 1.442695
      %v3535 = vpow.pop %v3534
      %v3536 = vmul.f32 %v3530, 1.442695
      %v3537 = vpow.pop %v3536
      %v3538 = vmul.f32 %v3531, 1.442695
      %v3539 = vpow.pop %v3538
      %v3540 = vadd.f32 %v3533, 1.0
      %v3541 = vadd.f32 %v3535, 1.0
      %v3542 = vadd.f32 %v3537, 1.0
      %v3543 = vadd.f32 %v3539, 1.0
      %v3544 = vrcp.pop %v3540
      %v3545 = vmul.f32 1.0, %v3544
      %v3546 = vrcp.pop %v3541
      %v3547 = vmul.f32 1.0, %v3546
      %v3548 = vrcp.pop %v3542
      %v3549 = vmul.f32 1.0, %v3548
      %v3550 = vrcp.pop %v3543
      %v3551 = vmul.f32 1.0, %v3550
      %v3552 = vmul.f32 %v750, %v3545
      %v3553 = vmul.f32 %v755, %v3547
      %v3554 = vmul.f32 %v760, %v3549
      %v3555 = vmul.f32 %v765, %v3551
      %3560 = vrot.lane.b32.xlu0 %v3552, 64
      %v3561 = vpop.permute.xlu0 %3560
      %3562 = vrot.lane.b32.xlu0 %v3553, 64
      %v3563 = vpop.permute.xlu0 %3562
      %3564 = vrot.lane.b32.xlu0 %v3554, 64
      %v3565 = vpop.permute.xlu0 %3564
      %3566 = vrot.lane.b32.xlu0 %v3555, 64
      %v3567 = vpop.permute.xlu0 %3566
      %v3572 = vmul.f32 %v3524, %v3561
      %v3573 = vmul.f32 %v3525, %v3563
      %v3574 = vmul.f32 %v3526, %v3565
      %v3575 = vmul.f32 %v3527, %v3567
      %v3576 = vld [vmem:[%s12] sm:$0xff]
      %v3577 = vld [vmem:[%s12 + $0x8] sm:$0xff]
      %v3578 = vld [vmem:[%s12 + $0x10] sm:$0xff]
      %v3579 = vld [vmem:[%s12 + $0x18] sm:$0xff]
      %v3580 = vld [vmem:[%s12 + $0x20] sm:$0xff]
      %v3581 = vld [vmem:[%s12 + $0x28] sm:$0xff]
      %v3582 = vld [vmem:[%s12 + $0x30] sm:$0xff]
      %v3583 = vld [vmem:[%s12 + $0x38] sm:$0xff]
      %v3585 = vsel %vm769, %v3572, 0
      %v3588 = vsel %vm769, %v3573, 0
      %v3591 = vsel %vm769, %v3574, 0
      %v3594 = vsel %vm769, %v3575, 0
      %3596 = vmatprep.subr.mxu0 0.0
      %3597 = vmatpush1.msra.mxu0 0.0
      %3598 = vmatprep.subr.mxu0 0.0
      %3599 = vmatpush1.msra.mxu0 0.0
      %3600 = vmatprep.subr.mxu0 0.0
      %3601 = vmatpush1.msra.mxu0 0.0
      %3602 = vmatprep.subr.mxu0 0.0
      %3603 = vmatpush1.msra.mxu0 0.0
      %3604 = vmatprep.subr.mxu0 0.0
      %3605 = vmatpush1.msra.mxu0 0.0
      %3606 = vmatprep.subr.mxu0 0.0
      %3607 = vmatpush1.msra.mxu0 0.0
      %3608 = vmatprep.subr.mxu0 0.0
      %3609 = vmatpush1.msra.mxu0 0.0
      %3610 = vmatprep.subr.mxu0 0.0
      %3611 = vmatpush1.msra.mxu0 0.0
      %3612 = vmatprep.subr.mxu0 0.0
      %3613 = vmatpush1.msra.mxu0 %v3583
      %3614 = vmatprep.subr.mxu0 0.0
      %3615 = vmatpush1.msra.mxu0 %v3582
      %3616 = vmatprep.subr.mxu0 0.0
      %3617 = vmatpush1.msra.mxu0 %v3581
      %3618 = vmatprep.subr.mxu0 0.0
      %3619 = vmatpush1.msra.mxu0 %v3580
      %3620 = vmatprep.subr.mxu0 0.0
      %3621 = vmatpush1.msra.mxu0 %v3579
      %3622 = vmatprep.subr.mxu0 0.0
      %3623 = vmatpush1.msra.mxu0 %v3578
      %3624 = vmatprep.subr.mxu0 0.0
      %3625 = vmatpush1.msra.mxu0 %v3577
      %3626 = vmatprep.subr.mxu0 0.0
      %3627 = vmatpush1.msra.mxu0 %v3576
      %3628 = vmatprep.subr.mxu0 0.0
      %3629 = vmatpush2.msra.mxu0 0.0
      %3630 = vmatprep.subr.mxu0 0.0
      %3631 = vmatpush2.msra.mxu0 0.0
      %3632 = vmatprep.subr.mxu0 0.0
      %3633 = vmatpush2.msra.mxu0 0.0
      %3634 = vmatprep.subr.mxu0 0.0
      %3635 = vmatpush2.msra.mxu0 0.0
      %3636 = vmatprep.subr.mxu0 0.0
      %3637 = vmatpush2.msra.mxu0 0.0
      %3638 = vmatprep.subr.mxu0 0.0
      %3639 = vmatpush2.msra.mxu0 0.0
      %3640 = vmatprep.subr.mxu0 0.0
      %3641 = vmatpush2.msra.mxu0 0.0
      %3642 = vmatprep.subr.mxu0 0.0
      %3643 = vmatpush2.msra.mxu0 0.0
      %3644 = vmatprep.subr.mxu0 0.0
      %3645 = vmatpush2.msra.mxu0 0.0
      %3646 = vmatprep.subr.mxu0 0.0
      %3647 = vmatpush2.msra.mxu0 0.0
      %3648 = vmatprep.subr.mxu0 0.0
      %3649 = vmatpush2.msra.mxu0 0.0
      %3650 = vmatprep.subr.mxu0 0.0
      %3651 = vmatpush2.msra.mxu0 0.0
      %3652 = vmatprep.subr.mxu0 0.0
      %3653 = vmatpush2.msra.mxu0 0.0
      %3654 = vmatprep.subr.mxu0 0.0
      %3655 = vmatpush2.msra.mxu0 0.0
      %3656 = vmatprep.subr.mxu0 0.0
      %3657 = vmatpush2.msra.mxu0 0.0
      %3658 = vmatprep.subr.mxu0 0.0
      %3659 = vmatpush2.msra.mxu0 0.0
      %3660 = vmatprep.mubr.f32.mxu0 0.0
      %3661 = vmatmul.mubr.f32.gmra.mxu0 %v3585
      %v3662 = vpop.f32.mrf.mxu0
      %v3663 = vadd.f32 0.0, %v3662
      %v3664 = vpop.f32.mrf.mxu0
      %3665 = vmatprep.mubr.f32.mxu0 0.0
      %3666 = vmatmul.mubr.f32.gmra.mxu0 %v3588
      %v3667 = vpop.f32.mrf.mxu0
      %v3668 = vadd.f32 0.0, %v3667
      %v3669 = vpop.f32.mrf.mxu0
      %3670 = vmatprep.mubr.f32.mxu0 0.0
      %3671 = vmatmul.mubr.f32.gmra.mxu0 %v3591
      %v3672 = vpop.f32.mrf.mxu0
      %v3673 = vadd.f32 0.0, %v3672
      %v3674 = vpop.f32.mrf.mxu0
      %3675 = vmatprep.mubr.f32.mxu0 0.0
      %3676 = vmatmul.mubr.f32.gmra.mxu0 %v3594
      %v3677 = vpop.f32.mrf.mxu0
      %v3678 = vadd.f32 0.0, %v3677
      %v3679 = vpop.f32.mrf.mxu0
      %3680 = vdwg.mxu0
      %3681 = vst.msk [vmem:[%s555] sm:$0xff] %vm587, %v3663
      %3682 = vst.msk [vmem:[%s555 + $0x8] sm:$0xff] %vm587, %v3668
      %3683 = vst.msk [vmem:[%s555 + $0x10] sm:$0xff] %vm587, %v3673
      %3684 = vst.msk [vmem:[%s555 + $0x18] sm:$0xff] %vm587, %v3678
      %s3685 = smul.u32 4, %s31
      %p3686 = scmp.lt.s32.totalorder %s30, 1
      %s3687 = scalar_select %p3686, %s30, 1
      %p3688 = scmp.lt.s32.totalorder %s3685, 7
      %s3689 = scalar_select %p3688, %s3685, 7
      %s3690 = smul.addr %s3687, 8
      %s3691 = sadd.s32 %s3689, %s3690
      %s3692 = smul.addr %s3691, 8
      %s3693 = scalar_lea.vmem %s13, %s3692
      %s3694 = smul.u32 4, %s31
      %p3695 = scmp.lt.s32.totalorder %s30, 1
      %s3696 = scalar_select %p3695, %s30, 1
      %p3697 = scmp.lt.s32.totalorder %s3694, 7
      %s3698 = scalar_select %p3697, %s3694, 7
      %s3699 = smul.addr %s3696, 8
      %s3700 = sadd.s32 %s3698, %s3699
      %s3701 = smul.addr %s3700, 8
      %s3702 = scalar_lea.vmem %s14, %s3701
      // Predicated region
      $region77: #{tpu_custom_call.1} parent=71 // pred_check
        %p3703 = pneg %p345
      $region78: #{tpu_custom_call.1} parent=71 // pred_check_branch
        %3705 = sbr.rel (%p3703) target = $region80
      $region79: #{tpu_custom_call.1} parent=71 // pred_region
        %s3706 = smul.u32 4, %s31
      $region80: #{tpu_custom_call.1} parent=71 // pred_fallthru
        _
      // Predicated region
      $region81: #{tpu_custom_call.1} parent=71 // pred_check
        %p3707 = pneg %p373
      $region82: #{tpu_custom_call.1} parent=71 // pred_check_branch
        %3709 = sbr.rel (%p3707) target = $region84
      $region83: #{tpu_custom_call.1} parent=71 // pred_region
        %s3710 = smul.u32 4, %s31
      $region84: #{tpu_custom_call.1} parent=71 // pred_fallthru
        _
    $region72: #{tpu_custom_call.1} parent=5 // pred_fallthru
      _
    %p3711 = scmp.le.s32.totalorder 2, %s21
    // Predicated region
    $region85: #{tpu_custom_call.1} parent=5 // pred_check
      %p3712 = pneg %p3711
    $region86: #{tpu_custom_call.1} parent=5 // pred_check_branch
      %3714 = sbr.rel (%p3712) target = $region88
    $region87: #{tpu_custom_call.1} parent=5 // pred_region
      %s3715 = ssub.s32 %s21, 2
      // Predicated region
      $region89: #{tpu_custom_call.1} parent=87 // pred_check
        %p3716 = pneg %p351
      $region90: #{tpu_custom_call.1} parent=87 // pred_check_branch
        %3718 = sbr.rel (%p3716) target = $region92
      $region91: #{tpu_custom_call.1} parent=87 // pred_region
        %s3719 = smul.u32 4, %s33
        %p3720 = scmp.lt.s32.totalorder %s32, 1
        %s3721 = scalar_select %p3720, %s32, 1
        %p3722 = scmp.lt.s32.totalorder %s3719, 7
        %s3723 = scalar_select %p3722, %s3719, 7
        %s3724 = smul.addr %s3721, 8
        %s3725 = sadd.s32 %s3723, %s3724
        %s3726 = smul.addr %s3725, 8
        %s3727 = scalar_lea.vmem %s13, %s3726
      $region92: #{tpu_custom_call.1} parent=87 // pred_fallthru
        _
      // Predicated region
      $region93: #{tpu_custom_call.1} parent=87 // pred_check
        %p3728 = pneg %p379
      $region94: #{tpu_custom_call.1} parent=87 // pred_check_branch
        %3730 = sbr.rel (%p3728) target = $region96
      $region95: #{tpu_custom_call.1} parent=87 // pred_region
        %s3731 = smul.u32 4, %s33
        %p3732 = scmp.lt.s32.totalorder %s32, 1
        %s3733 = scalar_select %p3732, %s32, 1
        %p3734 = scmp.lt.s32.totalorder %s3731, 7
        %s3735 = scalar_select %p3734, %s3731, 7
        %s3736 = smul.addr %s3733, 8
        %s3737 = sadd.s32 %s3735, %s3736
        %s3738 = smul.addr %s3737, 8
        %s3739 = scalar_lea.vmem %s14, %s3738
      $region96: #{tpu_custom_call.1} parent=87 // pred_fallthru
        _
    $region88: #{tpu_custom_call.1} parent=5 // pred_fallthru
      _
  $region6: #{tpu_custom_call.1} parent=0 // loop_footer
    %s25 = sadd.s32 1, %s21
  $region7: #{tpu_custom_call.1} parent=0 // loop_footer_branch
    %20 = sbr.rel target = $region3
  $region8: #{tpu_custom_call.1} parent=0 // loop_exit
    _

</llo_original>
